<compile_context>
chip_gen: v7x
topology: tpu7x:2x2x1
jax: 0.10.0
libtpu: 0.0.40
codegen_flags: <defaults>
</compile_context>

<pallas_src>
import jax
import jax.numpy as jnp
from jax.experimental import pallas as pl
from jax.experimental.pallas import tpu as pltpu

IN_FEATURES = 1024                 # CustomClip.in_features
HID_FEATURES = IN_FEATURES // 2    # 512
OUT_FEATURES = 1024                # CustomClip.out_features

COMPUTE_DTYPE = jnp.bfloat16       # weight / activation storage dtype
DEFAULT_BLOCK_B = 1024             # batch-tile rows (per-step VMEM ~20.5 MiB)
TINY_BATCH = 256                   # <= this: one full-extent block, no masking
# > v5e's 16 MiB scoped default, comfortably under v7x's 64 MiB physical VMEM
# and leaves headroom over the ~20.5 MiB needed at tb=1024
# (x 2x2MiB + out 2x2MiB + weights 2.5MiB single-buffered + ~10MiB f32/bf16
#  intermediates).
VMEM_LIMIT_BYTES = 48 * 1024 * 1024


def _bottleneck_kernel(x_ref, w1_ref, w2_ref, w3_ref, o_ref):
    """Fused 3-layer MLP: relu(relu(x@W1)@W2)@W3  (bias=False).

    Dots accumulate in f32 on the MXU; ReLU runs on the f32 accumulator and is
    only then downcast to the compute dtype for the next matmul.
    """
    x = x_ref[...]
    h1 = jnp.dot(x, w1_ref[...], preferred_element_type=jnp.float32)
    h1 = jnp.maximum(h1, 0.0).astype(x.dtype)        # ReLU in f32, then downcast
    h2 = jnp.dot(h1, w2_ref[...], preferred_element_type=jnp.float32)
    h2 = jnp.maximum(h2, 0.0).astype(x.dtype)        # ReLU in f32, then downcast
    o = jnp.dot(h2, w3_ref[...], preferred_element_type=jnp.float32)
    o_ref[...] = o.astype(o_ref.dtype)


def _round_up(n, m):
    return -(-n // m) * m


def _pick_block_b(batch, block_b):
    """Pick the batch-tile size.

    * tiny batches: one full-extent block (always layout-legal, no masking).
    * otherwise: ~ceil(B/2) rounded up to a sublane multiple (so the
      "parallel" batch axis has >= 2 grid steps and both v7x TensorCores get
      work), capped at block_b to respect the VMEM budget.  A ragged last
      block is handled by Pallas (masked writes); garbage rows only land in
      positions past the array end.
    """
    if batch <= TINY_BATCH:
        return batch
    return min(block_b, _round_up(pl.cdiv(batch, 2), 8))


def bottleneck_pallas(x, w1, w2, w3, *, block_b=DEFAULT_BLOCK_B,
                      activation_buffers=2):
    """Apply the bottleneck MLP to x of shape (B, 1024) -> (B, 1024)."""
    B, F = x.shape
    assert F == IN_FEATURES
    x = x.astype(COMPUTE_DTYPE)
    w1 = w1.astype(COMPUTE_DTYPE)
    w2 = w2.astype(COMPUTE_DTYPE)
    w3 = w3.astype(COMPUTE_DTYPE)

    tb = _pick_block_b(B, block_b)
    grid = (pl.cdiv(B, tb),)

    itemsize = jnp.dtype(COMPUTE_DTYPE).itemsize
    w_elems = (IN_FEATURES * HID_FEATURES
               + HID_FEATURES * HID_FEATURES
               + HID_FEATURES * OUT_FEATURES)
    cost = pl.CostEstimate(
        flops=2 * B * w_elems,
        transcendentals=0,
        bytes_accessed=(B * IN_FEATURES + w_elems + B * OUT_FEATURES) * itemsize,
    )

    # Activation input: default double-buffered; bump to Buffered(3) on v6e if
    # xprof shows the x DMA exposed (roofline knee at tb~512-1024 there).
    if activation_buffers == 2:
        x_spec = pl.BlockSpec((tb, IN_FEATURES), lambda i: (i, 0))
    else:
        x_spec = pl.BlockSpec((tb, IN_FEATURES), lambda i: (i, 0),
                              pipeline_mode=pl.Buffered(activation_buffers))

    out = pl.pallas_call(
        _bottleneck_kernel,
        out_shape=jax.ShapeDtypeStruct((B, OUT_FEATURES), COMPUTE_DTYPE),
        grid_spec=pltpu.PrefetchScalarGridSpec(
            num_scalar_prefetch=0,
            grid=grid,
            in_specs=[
                x_spec,
                # weights: constant index_map -> fetched once and resident in
                # VMEM; single-buffered since the block never changes.
                pl.BlockSpec((IN_FEATURES, HID_FEATURES), lambda i: (0, 0),
                             pipeline_mode=pl.Buffered(1)),
                pl.BlockSpec((HID_FEATURES, HID_FEATURES), lambda i: (0, 0),
                             pipeline_mode=pl.Buffered(1)),
                pl.BlockSpec((HID_FEATURES, OUT_FEATURES), lambda i: (0, 0),
                             pipeline_mode=pl.Buffered(1)),
            ],
            out_specs=pl.BlockSpec((tb, OUT_FEATURES), lambda i: (i, 0)),
        ),
        compiler_params=pltpu.CompilerParams(
            dimension_semantics=("parallel",),   # 2-TC sharding on v7x
            vmem_limit_bytes=VMEM_LIMIT_BYTES,
        ),
        cost_estimate=cost,
    )(x, w1, w2, w3)
    return out


def init_bottleneck_params(key, dtype=COMPUTE_DTYPE):
    """Deterministic stand-in for PyTorch Linear default (kaiming-uniform) init.

    Weights stored as (in, out); PyTorch equivalent weight is the transpose.
    """
    k1, k2, k3 = jax.random.split(key, 3)

    def uniform(k, fan_in, shape):
        bound = 1.0 / jnp.sqrt(float(fan_in))
        w = jax.random.uniform(k, shape, jnp.float32, minval=-bound, maxval=bound)
        return w.astype(dtype)

    w1 = uniform(k1, IN_FEATURES, (IN_FEATURES, HID_FEATURES))
    w2 = uniform(k2, HID_FEATURES, (HID_FEATURES, HID_FEATURES))
    w3 = uniform(k3, HID_FEATURES, (HID_FEATURES, OUT_FEATURES))
    return w1, w2, w3


def custom_clip_forward(x_feat, y, params):
    """CustomClip.forward semantics on pre-encoded features.

    x_feat: (B, 1024) encoder output features (see TODO(synk) above).
    y:      (B', 1024) or None.
    Returns (bottleneck(x_feat), bottleneck(y) or None).

    x and y get independent pallas_calls: re-fetching the 2.5 MiB bf16 weights
    is cheaper than the HBM write+read of a concatenated activation copy for
    anything but tiny combined batches.
    """
    w1, w2, w3 = params
    x_out = bottleneck_pallas(x_feat, w1, w2, w3)
    if y is None:
        return x_out, None
    y_out = bottleneck_pallas(y, w1, w2, w3)
    return x_out, y_out


def _reference_bottleneck(x, w1, w2, w3):
    """Plain-JAX reference with the same bf16-storage / f32-accumulate numerics."""
    x = x.astype(COMPUTE_DTYPE)
    h1 = jnp.maximum(
        jnp.dot(x, w1, preferred_element_type=jnp.float32), 0.0
    ).astype(COMPUTE_DTYPE)
    h2 = jnp.maximum(
        jnp.dot(h1, w2, preferred_element_type=jnp.float32), 0.0
    ).astype(COMPUTE_DTYPE)
    return jnp.dot(h2, w3, preferred_element_type=jnp.float32).astype(COMPUTE_DTYPE)


if __name__ == "__main__":
    key = jax.random.PRNGKey(0)
    k_params, k_x, k_y, k_big = jax.random.split(key, 4)

    batch = 2
    params = init_bottleneck_params(k_params)
    # Pre-encoded CLIP-RN50-visual features (1024-dim), per TODO(synk) above.
    x_feat = jax.random.normal(k_x, (batch, IN_FEATURES), jnp.float32)
    y_feat = jax.random.normal(k_y, (batch, IN_FEATURES), jnp.float32)

    x_out, y_out = custom_clip_forward(x_feat, y_feat, params)
    jax.block_until_ready(x_out)
    jax.block_until_ready(y_out)

    # sanity check against plain-JAX reference (same bf16/f32-acc numerics)
    x_ref = _reference_bottleneck(x_feat, *params)
    y_ref = _reference_bottleneck(y_feat, *params)
    assert x_out.shape == (batch, OUT_FEATURES)
    assert y_out.shape == (batch, OUT_FEATURES)
    assert jnp.allclose(x_out.astype(jnp.float32), x_ref.astype(jnp.float32),
                        atol=2e-2, rtol=2e-2)
    assert jnp.allclose(y_out.astype(jnp.float32), y_ref.astype(jnp.float32),
                        atol=2e-2, rtol=2e-2)

    # also exercise the y=None path
    x_only, y_none = custom_clip_forward(x_feat, None, params)
    jax.block_until_ready(x_only)
    assert y_none is None
    assert jnp.allclose(x_only.astype(jnp.float32), x_ref.astype(jnp.float32),
                        atol=2e-2, rtol=2e-2)

    # exercise the multi-step grid with a ragged (masked) last block:
    # B=260 -> tb=136, grid=(2,), second block has 124 valid rows.
    big = jax.random.normal(k_big, (260, IN_FEATURES), jnp.float32)
    big_out = bottleneck_pallas(big, *params)
    jax.block_until_ready(big_out)
    big_ref = _reference_bottleneck(big, *params)
    assert big_out.shape == (260, OUT_FEATURES)
    assert jnp.allclose(big_out.astype(jnp.float32), big_ref.astype(jnp.float32),
                        atol=2e-2, rtol=2e-2)

    print("KERNEL_OK")
</pallas_src>

<mosaic_0001>
module attributes {stable_mosaic.version = 11 : i64} {
  func.func @_bottleneck_kernel(%arg0: i32, %arg1: memref<2x1024xbf16, #tpu.memory_space<vmem>>, %arg2: memref<1024x512xbf16, #tpu.memory_space<vmem>>, %arg3: memref<512x512xbf16, #tpu.memory_space<vmem>>, %arg4: memref<512x1024xbf16, #tpu.memory_space<vmem>>, %arg5: memref<2x1024xbf16, #tpu.memory_space<vmem>>) attributes {dimension_semantics = [#tpu.dimension_semantics<parallel>], iteration_bounds = array<i64: 1>, scalar_prefetch = 0 : i64, scratch_operands = 0 : i64, tpu.core_type = #tpu.core_type<tc>, window_params = [{transform_indices = @transform_0, window_bounds = array<i64: 2, 1024>}, {pipeline_mode = #tpu.pipeline_mode<synchronous>, transform_indices = @transform_1, window_bounds = array<i64: 1024, 512>}, {pipeline_mode = #tpu.pipeline_mode<synchronous>, transform_indices = @transform_2, window_bounds = array<i64: 512, 512>}, {pipeline_mode = #tpu.pipeline_mode<synchronous>, transform_indices = @transform_3, window_bounds = array<i64: 512, 1024>}, {transform_indices = @transform_4, window_bounds = array<i64: 2, 1024>}]} {
    %c0 = arith.constant 0 : index
    %c0_0 = arith.constant 0 : index
    %0 = vector.load %arg1[%c0, %c0_0] : memref<2x1024xbf16, #tpu.memory_space<vmem>>, vector<2x1024xbf16>
    %c0_1 = arith.constant 0 : index
    %c0_2 = arith.constant 0 : index
    %1 = vector.load %arg2[%c0_1, %c0_2] : memref<1024x512xbf16, #tpu.memory_space<vmem>>, vector<1024x512xbf16>
    %cst = arith.constant dense<0.000000e+00> : vector<2x512xf32>
    %2 = tpu.matmul %0, %1, %cst {dimension_numbers = #tpu.dot_dimension_numbers<[1], [0], [0], [1], [0, 0, 1, 1], [], []>} : vector<2x1024xbf16>, vector<1024x512xbf16>, vector<2x512xf32> -> vector<2x512xf32>
    %cst_3 = arith.constant 0.000000e+00 : f32
    %3 = vector.broadcast %cst_3 : f32 to vector<2x512xf32>
    %4 = arith.maximumf %2, %3 : vector<2x512xf32>
    %5 = arith.truncf %4 : vector<2x512xf32> to vector<2x512xbf16>
    %c0_4 = arith.constant 0 : index
    %c0_5 = arith.constant 0 : index
    %6 = vector.load %arg3[%c0_4, %c0_5] : memref<512x512xbf16, #tpu.memory_space<vmem>>, vector<512x512xbf16>
    %cst_6 = arith.constant dense<0.000000e+00> : vector<2x512xf32>
    %7 = tpu.matmul %5, %6, %cst_6 {dimension_numbers = #tpu.dot_dimension_numbers<[1], [0], [0], [1], [0, 0, 1, 1], [], []>} : vector<2x512xbf16>, vector<512x512xbf16>, vector<2x512xf32> -> vector<2x512xf32>
    %cst_7 = arith.constant 0.000000e+00 : f32
    %8 = vector.broadcast %cst_7 : f32 to vector<2x512xf32>
    %9 = arith.maximumf %7, %8 : vector<2x512xf32>
    %10 = arith.truncf %9 : vector<2x512xf32> to vector<2x512xbf16>
    %c0_8 = arith.constant 0 : index
    %c0_9 = arith.constant 0 : index
    %11 = vector.load %arg4[%c0_8, %c0_9] : memref<512x1024xbf16, #tpu.memory_space<vmem>>, vector<512x1024xbf16>
    %cst_10 = arith.constant dense<0.000000e+00> : vector<2x1024xf32>
    %12 = tpu.matmul %10, %11, %cst_10 {dimension_numbers = #tpu.dot_dimension_numbers<[1], [0], [0], [1], [0, 0, 1, 1], [], []>} : vector<2x512xbf16>, vector<512x1024xbf16>, vector<2x1024xf32> -> vector<2x1024xf32>
    %13 = arith.truncf %12 : vector<2x1024xf32> to vector<2x1024xbf16>
    %c0_11 = arith.constant 0 : index
    %c0_12 = arith.constant 0 : index
    %14 = vector.load %arg5[%c0_11, %c0_12] : memref<2x1024xbf16, #tpu.memory_space<vmem>>, vector<2x1024xbf16>
    tpu.vector_store %arg5[%c0_11, %c0_12], %13 {strides = array<i32>} : memref<2x1024xbf16, #tpu.memory_space<vmem>>, vector<2x1024xbf16>,
    return
  }
  func.func @transform_0(%arg0: i32) -> (i32, i32) {
    %c0_i32 = arith.constant 0 : i32
    %c0_i32_0 = arith.constant 0 : i32
    return %arg0, %c0_i32 : i32, i32
  }
  func.func @transform_1(%arg0: i32) -> (i32, i32) {
    %c0_i32 = arith.constant 0 : i32
    %c0_i32_0 = arith.constant 0 : i32
    %c0_i32_1 = arith.constant 0 : i32
    return %c0_i32, %c0_i32_0 : i32, i32
  }
  func.func @transform_2(%arg0: i32) -> (i32, i32) {
    %c0_i32 = arith.constant 0 : i32
    %c0_i32_0 = arith.constant 0 : i32
    %c0_i32_1 = arith.constant 0 : i32
    return %c0_i32, %c0_i32_0 : i32, i32
  }
  func.func @transform_3(%arg0: i32) -> (i32, i32) {
    %c0_i32 = arith.constant 0 : i32
    %c0_i32_0 = arith.constant 0 : i32
    %c0_i32_1 = arith.constant 0 : i32
    return %c0_i32, %c0_i32_0 : i32, i32
  }
  func.func @transform_4(%arg0: i32) -> (i32, i32) {
    %c0_i32 = arith.constant 0 : i32
    %c0_i32_0 = arith.constant 0 : i32
    return %arg0, %c0_i32 : i32, i32
  }
}

</mosaic_0001>

<llo_original>
// kernel: tpu_custom_call.1
$region0: #{tpu_custom_call.1}
  #allocation0 [shape = 'u32[]', space=smem, size = 0x4, offset = 0x4, fixed_abs, tag = 'smem constant byte address 0x4 - core index']
  #allocation1 [shape = 'u32[144,128]{1,0:T(1,128)}', space=vmem, size = 0x12000, scoped, tag = 'internal scratch']
  %s0 = inlined_call_operand.hbm [shape: bf16[2,1024], index: 0, kind: input, shape index: {}]
  %s1 = inlined_call_operand.hbm [shape: bf16[1024,512], index: 1, kind: input, shape index: {}]
  %s2 = inlined_call_operand.hbm [shape: bf16[512,512], index: 2, kind: input, shape index: {}]
  %s3 = inlined_call_operand.hbm [shape: bf16[512,1024], index: 3, kind: input, shape index: {}]
  %s4 = inlined_call_operand.hbm [shape: bf16[2,1024], index: 4, kind: output, shape index: {}]
  %s5 = sld [smem:[#allocation0]]
  $region42: #{tpu_custom_call.1} parent=0
    _
  %s7 = ssub.s32 1, %s5
  %s8 = scalar_select 0, %s7, %s5
  $region1: #{tpu_custom_call.1} parent=0
    #allocation2 [shape = 'u8[4096]{0}', space=vmem, size = 0x1000, scoped, tag = 'input window, operand 0, single buffered']
    #allocation3 [shape = 's32[1]{0}', space=sflag, size = 0x4, scoped, tag = 'scoped memory for tpu_custom_call.1']
    #allocation4 [shape = 's32[1]{0}', space=sflag, size = 0x4, scoped, tag = 'scoped memory for tpu_custom_call.1']
    #allocation5 [shape = 'u8[1048576]{0}', space=vmem, size = 0x100000, scoped, tag = 'input window, operand 1, single buffered']
    #allocation6 [shape = 's32[1]{0}', space=sflag, size = 0x4, scoped, tag = 'scoped memory for tpu_custom_call.1']
    #allocation7 [shape = 'u8[524288]{0}', space=vmem, size = 0x80000, scoped, tag = 'input window, operand 2, single buffered']
    #allocation8 [shape = 'u8[1048576]{0}', space=vmem, size = 0x100000, scoped, tag = 'input window, operand 3, single buffered']
    #allocation9 [shape = 's32[1]{0}', space=sflag, size = 0x4, scoped, tag = 'scoped memory for tpu_custom_call.1']
    #allocation10 [shape = 'u8[4096]{0}', space=vmem, size = 0x1000, scoped, tag = 'output window, operand 0, single buffered']
    %9 = vsyncpa [#allocation3], 0
    %10 = vsyncpa [#allocation6], 0
    %11 = vsyncpa [#allocation9], 0
    %12 = vsyncpa [#allocation4], 0
    // Predicated region
    $region2: #{tpu_custom_call.1} parent=1 // pred_check
      _
    $region3: #{tpu_custom_call.1} parent=1 // pred_check_branch
      %14 = sbr.rel (0) target = $region5
    $region4: #{tpu_custom_call.1} parent=1 // pred_region
      %s16 = ssub.s32 128, 128
      %17 = vsyncadd [#allocation3], %s16
      %s19 = sshll.u32 [#allocation2], 4
      %s20 = int_to_ptr.vmem [resolvable:$true] %s19
      %22 = dma.hbm_to_vmem [thread:$0]  %s0, 128, %s20, [#allocation3]
    $region5: #{tpu_custom_call.1} parent=1 // pred_fallthru
      _
    // Predicated region
    $region6: #{tpu_custom_call.1} parent=1 // pred_check
      _
    $region7: #{tpu_custom_call.1} parent=1 // pred_check_branch
      %24 = sbr.rel (0) target = $region9
    $region8: #{tpu_custom_call.1} parent=1 // pred_region
      %s26 = ssub.s32 32768, 32768
      %27 = vsyncadd [#allocation6], %s26
      %s28 = sshll.u32 [#allocation5], 4
      %s29 = int_to_ptr.vmem [resolvable:$true] %s28
      %34 = dma.hbm_to_vmem [thread:$0]  %s1, 32768, %s29, [#allocation6], 256, 256, 16
    $region9: #{tpu_custom_call.1} parent=1 // pred_fallthru
      _
    // Predicated region
    $region10: #{tpu_custom_call.1} parent=1 // pred_check
      _
    $region11: #{tpu_custom_call.1} parent=1 // pred_check_branch
      %36 = sbr.rel (0) target = $region13
    $region12: #{tpu_custom_call.1} parent=1 // pred_region
      %s38 = ssub.s32 16384, 16384
      %39 = vsyncadd [#allocation6], %s38
      %s40 = sshll.u32 [#allocation7], 4
      %s41 = int_to_ptr.vmem [resolvable:$true] %s40
      %46 = dma.hbm_to_vmem [thread:$0]  %s2, 16384, %s41, [#allocation6], 256, 256, 16
    $region13: #{tpu_custom_call.1} parent=1 // pred_fallthru
      _
    // Predicated region
    $region14: #{tpu_custom_call.1} parent=1 // pred_check
      _
    $region15: #{tpu_custom_call.1} parent=1 // pred_check_branch
      %48 = sbr.rel (0) target = $region17
    $region16: #{tpu_custom_call.1} parent=1 // pred_region
      %s50 = ssub.s32 32768, 32768
      %51 = vsyncadd [#allocation9], %s50
      %s52 = sshll.u32 [#allocation8], 4
      %s53 = int_to_ptr.vmem [resolvable:$true] %s52
      %58 = dma.hbm_to_vmem [thread:$0]  %s3, 32768, %s53, [#allocation9], 512, 512, 32
    $region17: #{tpu_custom_call.1} parent=1 // pred_fallthru
      _
    // Predicated region
    $region18: #{tpu_custom_call.1} parent=1 // pred_check
      _
    $region19: #{tpu_custom_call.1} parent=1 // pred_check_branch
      %60 = sbr.rel (0) target = $region21
    $region20: #{tpu_custom_call.1} parent=1 // pred_region
      %61 = dma.done [#allocation3], 128
    $region21: #{tpu_custom_call.1} parent=1 // pred_fallthru
      _
    // Predicated region
    $region22: #{tpu_custom_call.1} parent=1 // pred_check
      _
    $region23: #{tpu_custom_call.1} parent=1 // pred_check_branch
      %63 = sbr.rel (0) target = $region25
    $region24: #{tpu_custom_call.1} parent=1 // pred_region
      %64 = dma.done [#allocation6], 32768
    $region25: #{tpu_custom_call.1} parent=1 // pred_fallthru
      _
    // Predicated region
    $region26: #{tpu_custom_call.1} parent=1 // pred_check
      _
    $region27: #{tpu_custom_call.1} parent=1 // pred_check_branch
      %66 = sbr.rel (0) target = $region29
    $region28: #{tpu_custom_call.1} parent=1 // pred_region
      %67 = dma.done [#allocation6], 16384
    $region29: #{tpu_custom_call.1} parent=1 // pred_fallthru
      _
    // Predicated region
    $region30: #{tpu_custom_call.1} parent=1 // pred_check
      _
    $region31: #{tpu_custom_call.1} parent=1 // pred_check_branch
      %69 = sbr.rel (0) target = $region33
    $region32: #{tpu_custom_call.1} parent=1 // pred_region
      %70 = dma.done [#allocation9], 32768
    $region33: #{tpu_custom_call.1} parent=1 // pred_fallthru
      _
    %v71 = vld [vmem:[#allocation2] sm:$0xff]
    %v72 = vld [vmem:[#allocation5] sm:$0xff]
    %v73 = vld [vmem:[#allocation5 + $0x8] sm:$0xff]
    %v74 = vld [vmem:[#allocation5 + $0x10] sm:$0xff]
    %v75 = vld [vmem:[#allocation5 + $0x18] sm:$0xff]
    %v76 = vld [vmem:[#allocation5 + $0x20] sm:$0xff]
    %v77 = vld [vmem:[#allocation5 + $0x28] sm:$0xff]
    %v78 = vld [vmem:[#allocation5 + $0x30] sm:$0xff]
    %v79 = vld [vmem:[#allocation5 + $0x38] sm:$0xff]
    %v80 = vld [vmem:[#allocation5 + $0x40] sm:$0xff]
    %v81 = vld [vmem:[#allocation5 + $0x48] sm:$0xff]
    %v82 = vld [vmem:[#allocation5 + $0x50] sm:$0xff]
    %v83 = vld [vmem:[#allocation5 + $0x58] sm:$0xff]
    %v84 = vld [vmem:[#allocation5 + $0x60] sm:$0xff]
    %v85 = vld [vmem:[#allocation5 + $0x68] sm:$0xff]
    %v86 = vld [vmem:[#allocation5 + $0x70] sm:$0xff]
    %v87 = vld [vmem:[#allocation5 + $0x78] sm:$0xff]
    %v88 = vld [vmem:[#allocation5 + $0x80] sm:$0xff]
    %v89 = vld [vmem:[#allocation5 + $0x88] sm:$0xff]
    %v90 = vld [vmem:[#allocation5 + $0x90] sm:$0xff]
    %v91 = vld [vmem:[#allocation5 + $0x98] sm:$0xff]
    %v92 = vld [vmem:[#allocation5 + $0xa0] sm:$0xff]
    %v93 = vld [vmem:[#allocation5 + $0xa8] sm:$0xff]
    %v94 = vld [vmem:[#allocation5 + $0xb0] sm:$0xff]
    %v95 = vld [vmem:[#allocation5 + $0xb8] sm:$0xff]
    %v96 = vld [vmem:[#allocation5 + $0xc0] sm:$0xff]
    %v97 = vld [vmem:[#allocation5 + $0xc8] sm:$0xff]
    %v98 = vld [vmem:[#allocation5 + $0xd0] sm:$0xff]
    %v99 = vld [vmem:[#allocation5 + $0xd8] sm:$0xff]
    %v100 = vld [vmem:[#allocation5 + $0xe0] sm:$0xff]
    %v101 = vld [vmem:[#allocation5 + $0xe8] sm:$0xff]
    %v102 = vld [vmem:[#allocation5 + $0xf0] sm:$0xff]
    %v103 = vld [vmem:[#allocation5 + $0xf8] sm:$0xff]
    %v104 = vld [vmem:[#allocation5 + $0x100] sm:$0xff]
    %v105 = vld [vmem:[#allocation5 + $0x108] sm:$0xff]
    %v106 = vld [vmem:[#allocation5 + $0x110] sm:$0xff]
    %v107 = vld [vmem:[#allocation5 + $0x118] sm:$0xff]
    %v108 = vld [vmem:[#allocation5 + $0x120] sm:$0xff]
    %v109 = vld [vmem:[#allocation5 + $0x128] sm:$0xff]
    %v110 = vld [vmem:[#allocation5 + $0x130] sm:$0xff]
    %v111 = vld [vmem:[#allocation5 + $0x138] sm:$0xff]
    %v112 = vld [vmem:[#allocation5 + $0x140] sm:$0xff]
    %v113 = vld [vmem:[#allocation5 + $0x148] sm:$0xff]
    %v114 = vld [vmem:[#allocation5 + $0x150] sm:$0xff]
    %v115 = vld [vmem:[#allocation5 + $0x158] sm:$0xff]
    %v116 = vld [vmem:[#allocation5 + $0x160] sm:$0xff]
    %v117 = vld [vmem:[#allocation5 + $0x168] sm:$0xff]
    %v118 = vld [vmem:[#allocation5 + $0x170] sm:$0xff]
    %v119 = vld [vmem:[#allocation5 + $0x178] sm:$0xff]
    %v120 = vld [vmem:[#allocation5 + $0x180] sm:$0xff]
    %v121 = vld [vmem:[#allocation5 + $0x188] sm:$0xff]
    %v122 = vld [vmem:[#allocation5 + $0x190] sm:$0xff]
    %v123 = vld [vmem:[#allocation5 + $0x198] sm:$0xff]
    %v124 = vld [vmem:[#allocation5 + $0x1a0] sm:$0xff]
    %v125 = vld [vmem:[#allocation5 + $0x1a8] sm:$0xff]
    %v126 = vld [vmem:[#allocation5 + $0x1b0] sm:$0xff]
    %v127 = vld [vmem:[#allocation5 + $0x1b8] sm:$0xff]
    %v128 = vld [vmem:[#allocation5 + $0x1c0] sm:$0xff]
    %v129 = vld [vmem:[#allocation5 + $0x1c8] sm:$0xff]
    %v130 = vld [vmem:[#allocation5 + $0x1d0] sm:$0xff]
    %v131 = vld [vmem:[#allocation5 + $0x1d8] sm:$0xff]
    %v132 = vld [vmem:[#allocation5 + $0x1e0] sm:$0xff]
    %v133 = vld [vmem:[#allocation5 + $0x1e8] sm:$0xff]
    %v134 = vld [vmem:[#allocation5 + $0x1f0] sm:$0xff]
    %v135 = vld [vmem:[#allocation5 + $0x1f8] sm:$0xff]
    %v136 = vld [vmem:[#allocation5 + $0x200] sm:$0xff]
    %v137 = vld [vmem:[#allocation5 + $0x208] sm:$0xff]
    %v138 = vld [vmem:[#allocation5 + $0x210] sm:$0xff]
    %v139 = vld [vmem:[#allocation5 + $0x218] sm:$0xff]
    %v140 = vld [vmem:[#allocation5 + $0x220] sm:$0xff]
    %v141 = vld [vmem:[#allocation5 + $0x228] sm:$0xff]
    %v142 = vld [vmem:[#allocation5 + $0x230] sm:$0xff]
    %v143 = vld [vmem:[#allocation5 + $0x238] sm:$0xff]
    %v144 = vld [vmem:[#allocation5 + $0x240] sm:$0xff]
    %v145 = vld [vmem:[#allocation5 + $0x248] sm:$0xff]
    %v146 = vld [vmem:[#allocation5 + $0x250] sm:$0xff]
    %v147 = vld [vmem:[#allocation5 + $0x258] sm:$0xff]
    %v148 = vld [vmem:[#allocation5 + $0x260] sm:$0xff]
    %v149 = vld [vmem:[#allocation5 + $0x268] sm:$0xff]
    %v150 = vld [vmem:[#allocation5 + $0x270] sm:$0xff]
    %v151 = vld [vmem:[#allocation5 + $0x278] sm:$0xff]
    %v152 = vld [vmem:[#allocation5 + $0x280] sm:$0xff]
    %v153 = vld [vmem:[#allocation5 + $0x288] sm:$0xff]
    %v154 = vld [vmem:[#allocation5 + $0x290] sm:$0xff]
    %v155 = vld [vmem:[#allocation5 + $0x298] sm:$0xff]
    %v156 = vld [vmem:[#allocation5 + $0x2a0] sm:$0xff]
    %v157 = vld [vmem:[#allocation5 + $0x2a8] sm:$0xff]
    %v158 = vld [vmem:[#allocation5 + $0x2b0] sm:$0xff]
    %v159 = vld [vmem:[#allocation5 + $0x2b8] sm:$0xff]
    %v160 = vld [vmem:[#allocation5 + $0x2c0] sm:$0xff]
    %v161 = vld [vmem:[#allocation5 + $0x2c8] sm:$0xff]
    %v162 = vld [vmem:[#allocation5 + $0x2d0] sm:$0xff]
    %v163 = vld [vmem:[#allocation5 + $0x2d8] sm:$0xff]
    %v164 = vld [vmem:[#allocation5 + $0x2e0] sm:$0xff]
    %v165 = vld [vmem:[#allocation5 + $0x2e8] sm:$0xff]
    %v166 = vld [vmem:[#allocation5 + $0x2f0] sm:$0xff]
    %v167 = vld [vmem:[#allocation5 + $0x2f8] sm:$0xff]
    %v168 = vld [vmem:[#allocation5 + $0x300] sm:$0xff]
    %v169 = vld [vmem:[#allocation5 + $0x308] sm:$0xff]
    %v170 = vld [vmem:[#allocation5 + $0x310] sm:$0xff]
    %v171 = vld [vmem:[#allocation5 + $0x318] sm:$0xff]
    %v172 = vld [vmem:[#allocation5 + $0x320] sm:$0xff]
    %v173 = vld [vmem:[#allocation5 + $0x328] sm:$0xff]
    %v174 = vld [vmem:[#allocation5 + $0x330] sm:$0xff]
    %v175 = vld [vmem:[#allocation5 + $0x338] sm:$0xff]
    %v176 = vld [vmem:[#allocation5 + $0x340] sm:$0xff]
    %v177 = vld [vmem:[#allocation5 + $0x348] sm:$0xff]
    %v178 = vld [vmem:[#allocation5 + $0x350] sm:$0xff]
    %v179 = vld [vmem:[#allocation5 + $0x358] sm:$0xff]
    %v180 = vld [vmem:[#allocation5 + $0x360] sm:$0xff]
    %v181 = vld [vmem:[#allocation5 + $0x368] sm:$0xff]
    %v182 = vld [vmem:[#allocation5 + $0x370] sm:$0xff]
    %v183 = vld [vmem:[#allocation5 + $0x378] sm:$0xff]
    %v184 = vld [vmem:[#allocation5 + $0x380] sm:$0xff]
    %v185 = vld [vmem:[#allocation5 + $0x388] sm:$0xff]
    %v186 = vld [vmem:[#allocation5 + $0x390] sm:$0xff]
    %v187 = vld [vmem:[#allocation5 + $0x398] sm:$0xff]
    %v188 = vld [vmem:[#allocation5 + $0x3a0] sm:$0xff]
    %v189 = vld [vmem:[#allocation5 + $0x3a8] sm:$0xff]
    %v190 = vld [vmem:[#allocation5 + $0x3b0] sm:$0xff]
    %v191 = vld [vmem:[#allocation5 + $0x3b8] sm:$0xff]
    %v192 = vld [vmem:[#allocation5 + $0x3c0] sm:$0xff]
    %v193 = vld [vmem:[#allocation5 + $0x3c8] sm:$0xff]
    %v194 = vld [vmem:[#allocation5 + $0x3d0] sm:$0xff]
    %v195 = vld [vmem:[#allocation5 + $0x3d8] sm:$0xff]
    %v196 = vld [vmem:[#allocation5 + $0x3e0] sm:$0xff]
    %v197 = vld [vmem:[#allocation5 + $0x3e8] sm:$0xff]
    %v198 = vld [vmem:[#allocation5 + $0x3f0] sm:$0xff]
    %v199 = vld [vmem:[#allocation5 + $0x3f8] sm:$0xff]
    %v200 = vld [vmem:[#allocation5 + $0x400] sm:$0xff]
    %v201 = vld [vmem:[#allocation5 + $0x408] sm:$0xff]
    %v202 = vld [vmem:[#allocation5 + $0x410] sm:$0xff]
    %v203 = vld [vmem:[#allocation5 + $0x418] sm:$0xff]
    %v204 = vld [vmem:[#allocation5 + $0x420] sm:$0xff]
    %v205 = vld [vmem:[#allocation5 + $0x428] sm:$0xff]
    %v206 = vld [vmem:[#allocation5 + $0x430] sm:$0xff]
    %v207 = vld [vmem:[#allocation5 + $0x438] sm:$0xff]
    %v208 = vld [vmem:[#allocation5 + $0x440] sm:$0xff]
    %v209 = vld [vmem:[#allocation5 + $0x448] sm:$0xff]
    %v210 = vld [vmem:[#allocation5 + $0x450] sm:$0xff]
    %v211 = vld [vmem:[#allocation5 + $0x458] sm:$0xff]
    %v212 = vld [vmem:[#allocation5 + $0x460] sm:$0xff]
    %v213 = vld [vmem:[#allocation5 + $0x468] sm:$0xff]
    %v214 = vld [vmem:[#allocation5 + $0x470] sm:$0xff]
    %v215 = vld [vmem:[#allocation5 + $0x478] sm:$0xff]
    %v216 = vld [vmem:[#allocation5 + $0x480] sm:$0xff]
    %v217 = vld [vmem:[#allocation5 + $0x488] sm:$0xff]
    %v218 = vld [vmem:[#allocation5 + $0x490] sm:$0xff]
    %v219 = vld [vmem:[#allocation5 + $0x498] sm:$0xff]
    %v220 = vld [vmem:[#allocation5 + $0x4a0] sm:$0xff]
    %v221 = vld [vmem:[#allocation5 + $0x4a8] sm:$0xff]
    %v222 = vld [vmem:[#allocation5 + $0x4b0] sm:$0xff]
    %v223 = vld [vmem:[#allocation5 + $0x4b8] sm:$0xff]
    %v224 = vld [vmem:[#allocation5 + $0x4c0] sm:$0xff]
    %v225 = vld [vmem:[#allocation5 + $0x4c8] sm:$0xff]
    %v226 = vld [vmem:[#allocation5 + $0x4d0] sm:$0xff]
    %v227 = vld [vmem:[#allocation5 + $0x4d8] sm:$0xff]
    %v228 = vld [vmem:[#allocation5 + $0x4e0] sm:$0xff]
    %v229 = vld [vmem:[#allocation5 + $0x4e8] sm:$0xff]
    %v230 = vld [vmem:[#allocation5 + $0x4f0] sm:$0xff]
    %v231 = vld [vmem:[#allocation5 + $0x4f8] sm:$0xff]
    %v232 = vld [vmem:[#allocation5 + $0x500] sm:$0xff]
    %v233 = vld [vmem:[#allocation5 + $0x508] sm:$0xff]
    %v234 = vld [vmem:[#allocation5 + $0x510] sm:$0xff]
    %v235 = vld [vmem:[#allocation5 + $0x518] sm:$0xff]
    %v236 = vld [vmem:[#allocation5 + $0x520] sm:$0xff]
    %v237 = vld [vmem:[#allocation5 + $0x528] sm:$0xff]
    %v238 = vld [vmem:[#allocation5 + $0x530] sm:$0xff]
    %v239 = vld [vmem:[#allocation5 + $0x538] sm:$0xff]
    %v240 = vld [vmem:[#allocation5 + $0x540] sm:$0xff]
    %v241 = vld [vmem:[#allocation5 + $0x548] sm:$0xff]
    %v242 = vld [vmem:[#allocation5 + $0x550] sm:$0xff]
    %v243 = vld [vmem:[#allocation5 + $0x558] sm:$0xff]
    %v244 = vld [vmem:[#allocation5 + $0x560] sm:$0xff]
    %v245 = vld [vmem:[#allocation5 + $0x568] sm:$0xff]
    %v246 = vld [vmem:[#allocation5 + $0x570] sm:$0xff]
    %v247 = vld [vmem:[#allocation5 + $0x578] sm:$0xff]
    %v248 = vld [vmem:[#allocation5 + $0x580] sm:$0xff]
    %v249 = vld [vmem:[#allocation5 + $0x588] sm:$0xff]
    %v250 = vld [vmem:[#allocation5 + $0x590] sm:$0xff]
    %v251 = vld [vmem:[#allocation5 + $0x598] sm:$0xff]
    %v252 = vld [vmem:[#allocation5 + $0x5a0] sm:$0xff]
    %v253 = vld [vmem:[#allocation5 + $0x5a8] sm:$0xff]
    %v254 = vld [vmem:[#allocation5 + $0x5b0] sm:$0xff]
    %v255 = vld [vmem:[#allocation5 + $0x5b8] sm:$0xff]
    %v256 = vld [vmem:[#allocation5 + $0x5c0] sm:$0xff]
    %v257 = vld [vmem:[#allocation5 + $0x5c8] sm:$0xff]
    %v258 = vld [vmem:[#allocation5 + $0x5d0] sm:$0xff]
    %v259 = vld [vmem:[#allocation5 + $0x5d8] sm:$0xff]
    %v260 = vld [vmem:[#allocation5 + $0x5e0] sm:$0xff]
    %v261 = vld [vmem:[#allocation5 + $0x5e8] sm:$0xff]
    %v262 = vld [vmem:[#allocation5 + $0x5f0] sm:$0xff]
    %v263 = vld [vmem:[#allocation5 + $0x5f8] sm:$0xff]
    %v264 = vld [vmem:[#allocation5 + $0x600] sm:$0xff]
    %v265 = vld [vmem:[#allocation5 + $0x608] sm:$0xff]
    %v266 = vld [vmem:[#allocation5 + $0x610] sm:$0xff]
    %v267 = vld [vmem:[#allocation5 + $0x618] sm:$0xff]
    %v268 = vld [vmem:[#allocation5 + $0x620] sm:$0xff]
    %v269 = vld [vmem:[#allocation5 + $0x628] sm:$0xff]
    %v270 = vld [vmem:[#allocation5 + $0x630] sm:$0xff]
    %v271 = vld [vmem:[#allocation5 + $0x638] sm:$0xff]
    %v272 = vld [vmem:[#allocation5 + $0x640] sm:$0xff]
    %v273 = vld [vmem:[#allocation5 + $0x648] sm:$0xff]
    %v274 = vld [vmem:[#allocation5 + $0x650] sm:$0xff]
    %v275 = vld [vmem:[#allocation5 + $0x658] sm:$0xff]
    %v276 = vld [vmem:[#allocation5 + $0x660] sm:$0xff]
    %v277 = vld [vmem:[#allocation5 + $0x668] sm:$0xff]
    %v278 = vld [vmem:[#allocation5 + $0x670] sm:$0xff]
    %v279 = vld [vmem:[#allocation5 + $0x678] sm:$0xff]
    %v280 = vld [vmem:[#allocation5 + $0x680] sm:$0xff]
    %v281 = vld [vmem:[#allocation5 + $0x688] sm:$0xff]
    %v282 = vld [vmem:[#allocation5 + $0x690] sm:$0xff]
    %v283 = vld [vmem:[#allocation5 + $0x698] sm:$0xff]
    %v284 = vld [vmem:[#allocation5 + $0x6a0] sm:$0xff]
    %v285 = vld [vmem:[#allocation5 + $0x6a8] sm:$0xff]
    %v286 = vld [vmem:[#allocation5 + $0x6b0] sm:$0xff]
    %v287 = vld [vmem:[#allocation5 + $0x6b8] sm:$0xff]
    %v288 = vld [vmem:[#allocation5 + $0x6c0] sm:$0xff]
    %v289 = vld [vmem:[#allocation5 + $0x6c8] sm:$0xff]
    %v290 = vld [vmem:[#allocation5 + $0x6d0] sm:$0xff]
    %v291 = vld [vmem:[#allocation5 + $0x6d8] sm:$0xff]
    %v292 = vld [vmem:[#allocation5 + $0x6e0] sm:$0xff]
    %v293 = vld [vmem:[#allocation5 + $0x6e8] sm:$0xff]
    %v294 = vld [vmem:[#allocation5 + $0x6f0] sm:$0xff]
    %v295 = vld [vmem:[#allocation5 + $0x6f8] sm:$0xff]
    %v296 = vld [vmem:[#allocation5 + $0x700] sm:$0xff]
    %v297 = vld [vmem:[#allocation5 + $0x708] sm:$0xff]
    %v298 = vld [vmem:[#allocation5 + $0x710] sm:$0xff]
    %v299 = vld [vmem:[#allocation5 + $0x718] sm:$0xff]
    %v300 = vld [vmem:[#allocation5 + $0x720] sm:$0xff]
    %v301 = vld [vmem:[#allocation5 + $0x728] sm:$0xff]
    %v302 = vld [vmem:[#allocation5 + $0x730] sm:$0xff]
    %v303 = vld [vmem:[#allocation5 + $0x738] sm:$0xff]
    %v304 = vld [vmem:[#allocation5 + $0x740] sm:$0xff]
    %v305 = vld [vmem:[#allocation5 + $0x748] sm:$0xff]
    %v306 = vld [vmem:[#allocation5 + $0x750] sm:$0xff]
    %v307 = vld [vmem:[#allocation5 + $0x758] sm:$0xff]
    %v308 = vld [vmem:[#allocation5 + $0x760] sm:$0xff]
    %v309 = vld [vmem:[#allocation5 + $0x768] sm:$0xff]
    %v310 = vld [vmem:[#allocation5 + $0x770] sm:$0xff]
    %v311 = vld [vmem:[#allocation5 + $0x778] sm:$0xff]
    %v312 = vld [vmem:[#allocation5 + $0x780] sm:$0xff]
    %v313 = vld [vmem:[#allocation5 + $0x788] sm:$0xff]
    %v314 = vld [vmem:[#allocation5 + $0x790] sm:$0xff]
    %v315 = vld [vmem:[#allocation5 + $0x798] sm:$0xff]
    %v316 = vld [vmem:[#allocation5 + $0x7a0] sm:$0xff]
    %v317 = vld [vmem:[#allocation5 + $0x7a8] sm:$0xff]
    %v318 = vld [vmem:[#allocation5 + $0x7b0] sm:$0xff]
    %v319 = vld [vmem:[#allocation5 + $0x7b8] sm:$0xff]
    %v320 = vld [vmem:[#allocation5 + $0x7c0] sm:$0xff]
    %v321 = vld [vmem:[#allocation5 + $0x7c8] sm:$0xff]
    %v322 = vld [vmem:[#allocation5 + $0x7d0] sm:$0xff]
    %v323 = vld [vmem:[#allocation5 + $0x7d8] sm:$0xff]
    %v324 = vld [vmem:[#allocation5 + $0x7e0] sm:$0xff]
    %v325 = vld [vmem:[#allocation5 + $0x7e8] sm:$0xff]
    %v326 = vld [vmem:[#allocation5 + $0x7f0] sm:$0xff]
    %v327 = vld [vmem:[#allocation5 + $0x7f8] sm:$0xff]
    %v329 = vcombine.high %v71, %v71
    %v331 = vunpack.c.l.s4 1966171168
    %v332 = vunpack.c.0.s8 %v331
    %v333 = vlaneseq
    %v334 = vshrl.u32 %v333, 7
    %v335 = vsub.s32 %v332, %v334
    %v336 = vrot.slane %v71, %v335
    %v338 = vunpack.c.l.s4 1966171168
    %v339 = vunpack.c.0.s8 %v338
    %v340 = vlaneseq
    %v341 = vshrl.u32 %v340, 7
    %v342 = vsub.s32 %v339, %v341
    %v343 = vrot.slane %v329, %v342
    %v344 = vcombine.high %v336, %v336
    %v345 = vcombine.high %v343, %v343
    %v347 = vunpack.c.l.s4 1966171168
    %v348 = vunpack.c.0.s8 %v347
    %v349 = vlaneseq
    %v350 = vshrl.u32 %v349, 7
    %v351 = vsub.s32 %v348, %v350
    %v352 = vrot.slane %v336, %v351
    %v354 = vunpack.c.l.s4 1966171168
    %v355 = vunpack.c.0.s8 %v354
    %v356 = vlaneseq
    %v357 = vshrl.u32 %v356, 7
    %v358 = vsub.s32 %v355, %v357
    %v359 = vrot.slane %v343, %v358
    %v361 = vunpack.c.l.s4 1966171168
    %v362 = vunpack.c.0.s8 %v361
    %v363 = vlaneseq
    %v364 = vshrl.u32 %v363, 7
    %v365 = vsub.s32 %v362, %v364
    %v366 = vrot.slane %v344, %v365
    %v368 = vunpack.c.l.s4 1966171168
    %v369 = vunpack.c.0.s8 %v368
    %v370 = vlaneseq
    %v371 = vshrl.u32 %v370, 7
    %v372 = vsub.s32 %v369, %v371
    %v373 = vrot.slane %v345, %v372
    %v374 = vcombine.high %v352, %v352
    %v375 = vcombine.high %v359, %v359
    %v376 = vcombine.high %v366, %v366
    %v377 = vcombine.high %v373, %v373
    %v642 = vunpack.c.l.b16 %v72
    %v643 = vunpack.c.h.b16 %v72
    %v644 = vunpack.c.l.b16 %v73
    %v645 = vunpack.c.h.b16 %v73
    %v646 = vunpack.c.l.b16 %v74
    %v647 = vunpack.c.h.b16 %v74
    %v648 = vunpack.c.l.b16 %v75
    %v649 = vunpack.c.h.b16 %v75
    %v650 = vunpack.c.l.b16 %v76
    %v651 = vunpack.c.h.b16 %v76
    %v652 = vunpack.c.l.b16 %v77
    %v653 = vunpack.c.h.b16 %v77
    %v654 = vunpack.c.l.b16 %v78
    %v655 = vunpack.c.h.b16 %v78
    %v656 = vunpack.c.l.b16 %v79
    %v657 = vunpack.c.h.b16 %v79
    %v658 = vunpack.c.l.b16 %v80
    %v659 = vunpack.c.h.b16 %v80
    %v660 = vunpack.c.l.b16 %v81
    %v661 = vunpack.c.h.b16 %v81
    %v662 = vunpack.c.l.b16 %v82
    %v663 = vunpack.c.h.b16 %v82
    %v664 = vunpack.c.l.b16 %v83
    %v665 = vunpack.c.h.b16 %v83
    %v666 = vunpack.c.l.b16 %v84
    %v667 = vunpack.c.h.b16 %v84
    %v668 = vunpack.c.l.b16 %v85
    %v669 = vunpack.c.h.b16 %v85
    %v670 = vunpack.c.l.b16 %v86
    %v671 = vunpack.c.h.b16 %v86
    %v672 = vunpack.c.l.b16 %v87
    %v673 = vunpack.c.h.b16 %v87
    %v674 = vunpack.c.l.b16 %v88
    %v675 = vunpack.c.h.b16 %v88
    %v676 = vunpack.c.l.b16 %v89
    %v677 = vunpack.c.h.b16 %v89
    %v678 = vunpack.c.l.b16 %v90
    %v679 = vunpack.c.h.b16 %v90
    %v680 = vunpack.c.l.b16 %v91
    %v681 = vunpack.c.h.b16 %v91
    %v682 = vunpack.c.l.b16 %v92
    %v683 = vunpack.c.h.b16 %v92
    %v684 = vunpack.c.l.b16 %v93
    %v685 = vunpack.c.h.b16 %v93
    %v686 = vunpack.c.l.b16 %v94
    %v687 = vunpack.c.h.b16 %v94
    %v688 = vunpack.c.l.b16 %v95
    %v689 = vunpack.c.h.b16 %v95
    %v690 = vunpack.c.l.b16 %v96
    %v691 = vunpack.c.h.b16 %v96
    %v692 = vunpack.c.l.b16 %v97
    %v693 = vunpack.c.h.b16 %v97
    %v694 = vunpack.c.l.b16 %v98
    %v695 = vunpack.c.h.b16 %v98
    %v696 = vunpack.c.l.b16 %v99
    %v697 = vunpack.c.h.b16 %v99
    %v698 = vunpack.c.l.b16 %v100
    %v699 = vunpack.c.h.b16 %v100
    %v700 = vunpack.c.l.b16 %v101
    %v701 = vunpack.c.h.b16 %v101
    %v702 = vunpack.c.l.b16 %v102
    %v703 = vunpack.c.h.b16 %v102
    %v704 = vunpack.c.l.b16 %v103
    %v705 = vunpack.c.h.b16 %v103
    %v706 = vunpack.c.l.b16 %v104
    %v707 = vunpack.c.h.b16 %v104
    %v708 = vunpack.c.l.b16 %v105
    %v709 = vunpack.c.h.b16 %v105
    %v710 = vunpack.c.l.b16 %v106
    %v711 = vunpack.c.h.b16 %v106
    %v712 = vunpack.c.l.b16 %v107
    %v713 = vunpack.c.h.b16 %v107
    %v714 = vunpack.c.l.b16 %v108
    %v715 = vunpack.c.h.b16 %v108
    %v716 = vunpack.c.l.b16 %v109
    %v717 = vunpack.c.h.b16 %v109
    %v718 = vunpack.c.l.b16 %v110
    %v719 = vunpack.c.h.b16 %v110
    %v720 = vunpack.c.l.b16 %v111
    %v721 = vunpack.c.h.b16 %v111
    %v722 = vunpack.c.l.b16 %v112
    %v723 = vunpack.c.h.b16 %v112
    %v724 = vunpack.c.l.b16 %v113
    %v725 = vunpack.c.h.b16 %v113
    %v726 = vunpack.c.l.b16 %v114
    %v727 = vunpack.c.h.b16 %v114
    %v728 = vunpack.c.l.b16 %v115
    %v729 = vunpack.c.h.b16 %v115
    %v730 = vunpack.c.l.b16 %v116
    %v731 = vunpack.c.h.b16 %v116
    %v732 = vunpack.c.l.b16 %v117
    %v733 = vunpack.c.h.b16 %v117
    %v734 = vunpack.c.l.b16 %v118
    %v735 = vunpack.c.h.b16 %v118
    %v736 = vunpack.c.l.b16 %v119
    %v737 = vunpack.c.h.b16 %v119
    %v738 = vunpack.c.l.b16 %v120
    %v739 = vunpack.c.h.b16 %v120
    %v740 = vunpack.c.l.b16 %v121
    %v741 = vunpack.c.h.b16 %v121
    %v742 = vunpack.c.l.b16 %v122
    %v743 = vunpack.c.h.b16 %v122
    %v744 = vunpack.c.l.b16 %v123
    %v745 = vunpack.c.h.b16 %v123
    %v746 = vunpack.c.l.b16 %v124
    %v747 = vunpack.c.h.b16 %v124
    %v748 = vunpack.c.l.b16 %v125
    %v749 = vunpack.c.h.b16 %v125
    %v750 = vunpack.c.l.b16 %v126
    %v751 = vunpack.c.h.b16 %v126
    %v752 = vunpack.c.l.b16 %v127
    %v753 = vunpack.c.h.b16 %v127
    %v754 = vunpack.c.l.b16 %v128
    %v755 = vunpack.c.h.b16 %v128
    %v756 = vunpack.c.l.b16 %v129
    %v757 = vunpack.c.h.b16 %v129
    %v758 = vunpack.c.l.b16 %v130
    %v759 = vunpack.c.h.b16 %v130
    %v760 = vunpack.c.l.b16 %v131
    %v761 = vunpack.c.h.b16 %v131
    %v762 = vunpack.c.l.b16 %v132
    %v763 = vunpack.c.h.b16 %v132
    %v764 = vunpack.c.l.b16 %v133
    %v765 = vunpack.c.h.b16 %v133
    %v766 = vunpack.c.l.b16 %v134
    %v767 = vunpack.c.h.b16 %v134
    %v768 = vunpack.c.l.b16 %v135
    %v769 = vunpack.c.h.b16 %v135
    %v770 = vunpack.c.l.b16 %v136
    %v771 = vunpack.c.h.b16 %v136
    %v772 = vunpack.c.l.b16 %v137
    %v773 = vunpack.c.h.b16 %v137
    %v774 = vunpack.c.l.b16 %v138
    %v775 = vunpack.c.h.b16 %v138
    %v776 = vunpack.c.l.b16 %v139
    %v777 = vunpack.c.h.b16 %v139
    %v778 = vunpack.c.l.b16 %v140
    %v779 = vunpack.c.h.b16 %v140
    %v780 = vunpack.c.l.b16 %v141
    %v781 = vunpack.c.h.b16 %v141
    %v782 = vunpack.c.l.b16 %v142
    %v783 = vunpack.c.h.b16 %v142
    %v784 = vunpack.c.l.b16 %v143
    %v785 = vunpack.c.h.b16 %v143
    %v786 = vunpack.c.l.b16 %v144
    %v787 = vunpack.c.h.b16 %v144
    %v788 = vunpack.c.l.b16 %v145
    %v789 = vunpack.c.h.b16 %v145
    %v790 = vunpack.c.l.b16 %v146
    %v791 = vunpack.c.h.b16 %v146
    %v792 = vunpack.c.l.b16 %v147
    %v793 = vunpack.c.h.b16 %v147
    %v794 = vunpack.c.l.b16 %v148
    %v795 = vunpack.c.h.b16 %v148
    %v796 = vunpack.c.l.b16 %v149
    %v797 = vunpack.c.h.b16 %v149
    %v798 = vunpack.c.l.b16 %v150
    %v799 = vunpack.c.h.b16 %v150
    %v800 = vunpack.c.l.b16 %v151
    %v801 = vunpack.c.h.b16 %v151
    %v802 = vunpack.c.l.b16 %v152
    %v803 = vunpack.c.h.b16 %v152
    %v804 = vunpack.c.l.b16 %v153
    %v805 = vunpack.c.h.b16 %v153
    %v806 = vunpack.c.l.b16 %v154
    %v807 = vunpack.c.h.b16 %v154
    %v808 = vunpack.c.l.b16 %v155
    %v809 = vunpack.c.h.b16 %v155
    %v810 = vunpack.c.l.b16 %v156
    %v811 = vunpack.c.h.b16 %v156
    %v812 = vunpack.c.l.b16 %v157
    %v813 = vunpack.c.h.b16 %v157
    %v814 = vunpack.c.l.b16 %v158
    %v815 = vunpack.c.h.b16 %v158
    %v816 = vunpack.c.l.b16 %v159
    %v817 = vunpack.c.h.b16 %v159
    %v818 = vunpack.c.l.b16 %v160
    %v819 = vunpack.c.h.b16 %v160
    %v820 = vunpack.c.l.b16 %v161
    %v821 = vunpack.c.h.b16 %v161
    %v822 = vunpack.c.l.b16 %v162
    %v823 = vunpack.c.h.b16 %v162
    %v824 = vunpack.c.l.b16 %v163
    %v825 = vunpack.c.h.b16 %v163
    %v826 = vunpack.c.l.b16 %v164
    %v827 = vunpack.c.h.b16 %v164
    %v828 = vunpack.c.l.b16 %v165
    %v829 = vunpack.c.h.b16 %v165
    %v830 = vunpack.c.l.b16 %v166
    %v831 = vunpack.c.h.b16 %v166
    %v832 = vunpack.c.l.b16 %v167
    %v833 = vunpack.c.h.b16 %v167
    %v834 = vunpack.c.l.b16 %v168
    %v835 = vunpack.c.h.b16 %v168
    %v836 = vunpack.c.l.b16 %v169
    %v837 = vunpack.c.h.b16 %v169
    %v838 = vunpack.c.l.b16 %v170
    %v839 = vunpack.c.h.b16 %v170
    %v840 = vunpack.c.l.b16 %v171
    %v841 = vunpack.c.h.b16 %v171
    %v842 = vunpack.c.l.b16 %v172
    %v843 = vunpack.c.h.b16 %v172
    %v844 = vunpack.c.l.b16 %v173
    %v845 = vunpack.c.h.b16 %v173
    %v846 = vunpack.c.l.b16 %v174
    %v847 = vunpack.c.h.b16 %v174
    %v848 = vunpack.c.l.b16 %v175
    %v849 = vunpack.c.h.b16 %v175
    %v850 = vunpack.c.l.b16 %v176
    %v851 = vunpack.c.h.b16 %v176
    %v852 = vunpack.c.l.b16 %v177
    %v853 = vunpack.c.h.b16 %v177
    %v854 = vunpack.c.l.b16 %v178
    %v855 = vunpack.c.h.b16 %v178
    %v856 = vunpack.c.l.b16 %v179
    %v857 = vunpack.c.h.b16 %v179
    %v858 = vunpack.c.l.b16 %v180
    %v859 = vunpack.c.h.b16 %v180
    %v860 = vunpack.c.l.b16 %v181
    %v861 = vunpack.c.h.b16 %v181
    %v862 = vunpack.c.l.b16 %v182
    %v863 = vunpack.c.h.b16 %v182
    %v864 = vunpack.c.l.b16 %v183
    %v865 = vunpack.c.h.b16 %v183
    %v866 = vunpack.c.l.b16 %v184
    %v867 = vunpack.c.h.b16 %v184
    %v868 = vunpack.c.l.b16 %v185
    %v869 = vunpack.c.h.b16 %v185
    %v870 = vunpack.c.l.b16 %v186
    %v871 = vunpack.c.h.b16 %v186
    %v872 = vunpack.c.l.b16 %v187
    %v873 = vunpack.c.h.b16 %v187
    %v874 = vunpack.c.l.b16 %v188
    %v875 = vunpack.c.h.b16 %v188
    %v876 = vunpack.c.l.b16 %v189
    %v877 = vunpack.c.h.b16 %v189
    %v878 = vunpack.c.l.b16 %v190
    %v879 = vunpack.c.h.b16 %v190
    %v880 = vunpack.c.l.b16 %v191
    %v881 = vunpack.c.h.b16 %v191
    %v882 = vunpack.c.l.b16 %v192
    %v883 = vunpack.c.h.b16 %v192
    %v884 = vunpack.c.l.b16 %v193
    %v885 = vunpack.c.h.b16 %v193
    %v886 = vunpack.c.l.b16 %v194
    %v887 = vunpack.c.h.b16 %v194
    %v888 = vunpack.c.l.b16 %v195
    %v889 = vunpack.c.h.b16 %v195
    %v890 = vunpack.c.l.b16 %v196
    %v891 = vunpack.c.h.b16 %v196
    %v892 = vunpack.c.l.b16 %v197
    %v893 = vunpack.c.h.b16 %v197
    %v894 = vunpack.c.l.b16 %v198
    %v895 = vunpack.c.h.b16 %v198
    %v896 = vunpack.c.l.b16 %v199
    %v897 = vunpack.c.h.b16 %v199
    %v898 = vunpack.c.l.b16 %v200
    %v899 = vunpack.c.h.b16 %v200
    %v900 = vunpack.c.l.b16 %v201
    %v901 = vunpack.c.h.b16 %v201
    %v902 = vunpack.c.l.b16 %v202
    %v903 = vunpack.c.h.b16 %v202
    %v904 = vunpack.c.l.b16 %v203
    %v905 = vunpack.c.h.b16 %v203
    %v906 = vunpack.c.l.b16 %v204
    %v907 = vunpack.c.h.b16 %v204
    %v908 = vunpack.c.l.b16 %v205
    %v909 = vunpack.c.h.b16 %v205
    %v910 = vunpack.c.l.b16 %v206
    %v911 = vunpack.c.h.b16 %v206
    %v912 = vunpack.c.l.b16 %v207
    %v913 = vunpack.c.h.b16 %v207
    %v914 = vunpack.c.l.b16 %v208
    %v915 = vunpack.c.h.b16 %v208
    %v916 = vunpack.c.l.b16 %v209
    %v917 = vunpack.c.h.b16 %v209
    %v918 = vunpack.c.l.b16 %v210
    %v919 = vunpack.c.h.b16 %v210
    %v920 = vunpack.c.l.b16 %v211
    %v921 = vunpack.c.h.b16 %v211
    %v922 = vunpack.c.l.b16 %v212
    %v923 = vunpack.c.h.b16 %v212
    %v924 = vunpack.c.l.b16 %v213
    %v925 = vunpack.c.h.b16 %v213
    %v926 = vunpack.c.l.b16 %v214
    %v927 = vunpack.c.h.b16 %v214
    %v928 = vunpack.c.l.b16 %v215
    %v929 = vunpack.c.h.b16 %v215
    %v930 = vunpack.c.l.b16 %v216
    %v931 = vunpack.c.h.b16 %v216
    %v932 = vunpack.c.l.b16 %v217
    %v933 = vunpack.c.h.b16 %v217
    %v934 = vunpack.c.l.b16 %v218
    %v935 = vunpack.c.h.b16 %v218
    %v936 = vunpack.c.l.b16 %v219
    %v937 = vunpack.c.h.b16 %v219
    %v938 = vunpack.c.l.b16 %v220
    %v939 = vunpack.c.h.b16 %v220
    %v940 = vunpack.c.l.b16 %v221
    %v941 = vunpack.c.h.b16 %v221
    %v942 = vunpack.c.l.b16 %v222
    %v943 = vunpack.c.h.b16 %v222
    %v944 = vunpack.c.l.b16 %v223
    %v945 = vunpack.c.h.b16 %v223
    %v946 = vunpack.c.l.b16 %v224
    %v947 = vunpack.c.h.b16 %v224
    %v948 = vunpack.c.l.b16 %v225
    %v949 = vunpack.c.h.b16 %v225
    %v950 = vunpack.c.l.b16 %v226
    %v951 = vunpack.c.h.b16 %v226
    %v952 = vunpack.c.l.b16 %v227
    %v953 = vunpack.c.h.b16 %v227
    %v954 = vunpack.c.l.b16 %v228
    %v955 = vunpack.c.h.b16 %v228
    %v956 = vunpack.c.l.b16 %v229
    %v957 = vunpack.c.h.b16 %v229
    %v958 = vunpack.c.l.b16 %v230
    %v959 = vunpack.c.h.b16 %v230
    %v960 = vunpack.c.l.b16 %v231
    %v961 = vunpack.c.h.b16 %v231
    %v962 = vunpack.c.l.b16 %v232
    %v963 = vunpack.c.h.b16 %v232
    %v964 = vunpack.c.l.b16 %v233
    %v965 = vunpack.c.h.b16 %v233
    %v966 = vunpack.c.l.b16 %v234
    %v967 = vunpack.c.h.b16 %v234
    %v968 = vunpack.c.l.b16 %v235
    %v969 = vunpack.c.h.b16 %v235
    %v970 = vunpack.c.l.b16 %v236
    %v971 = vunpack.c.h.b16 %v236
    %v972 = vunpack.c.l.b16 %v237
    %v973 = vunpack.c.h.b16 %v237
    %v974 = vunpack.c.l.b16 %v238
    %v975 = vunpack.c.h.b16 %v238
    %v976 = vunpack.c.l.b16 %v239
    %v977 = vunpack.c.h.b16 %v239
    %v978 = vunpack.c.l.b16 %v240
    %v979 = vunpack.c.h.b16 %v240
    %v980 = vunpack.c.l.b16 %v241
    %v981 = vunpack.c.h.b16 %v241
    %v982 = vunpack.c.l.b16 %v242
    %v983 = vunpack.c.h.b16 %v242
    %v984 = vunpack.c.l.b16 %v243
    %v985 = vunpack.c.h.b16 %v243
    %v986 = vunpack.c.l.b16 %v244
    %v987 = vunpack.c.h.b16 %v244
    %v988 = vunpack.c.l.b16 %v245
    %v989 = vunpack.c.h.b16 %v245
    %v990 = vunpack.c.l.b16 %v246
    %v991 = vunpack.c.h.b16 %v246
    %v992 = vunpack.c.l.b16 %v247
    %v993 = vunpack.c.h.b16 %v247
    %v994 = vunpack.c.l.b16 %v248
    %v995 = vunpack.c.h.b16 %v248
    %v996 = vunpack.c.l.b16 %v249
    %v997 = vunpack.c.h.b16 %v249
    %v998 = vunpack.c.l.b16 %v250
    %v999 = vunpack.c.h.b16 %v250
    %v1000 = vunpack.c.l.b16 %v251
    %v1001 = vunpack.c.h.b16 %v251
    %v1002 = vunpack.c.l.b16 %v252
    %v1003 = vunpack.c.h.b16 %v252
    %v1004 = vunpack.c.l.b16 %v253
    %v1005 = vunpack.c.h.b16 %v253
    %v1006 = vunpack.c.l.b16 %v254
    %v1007 = vunpack.c.h.b16 %v254
    %v1008 = vunpack.c.l.b16 %v255
    %v1009 = vunpack.c.h.b16 %v255
    %v1010 = vunpack.c.l.b16 %v256
    %v1011 = vunpack.c.h.b16 %v256
    %v1012 = vunpack.c.l.b16 %v257
    %v1013 = vunpack.c.h.b16 %v257
    %v1014 = vunpack.c.l.b16 %v258
    %v1015 = vunpack.c.h.b16 %v258
    %v1016 = vunpack.c.l.b16 %v259
    %v1017 = vunpack.c.h.b16 %v259
    %v1018 = vunpack.c.l.b16 %v260
    %v1019 = vunpack.c.h.b16 %v260
    %v1020 = vunpack.c.l.b16 %v261
    %v1021 = vunpack.c.h.b16 %v261
    %v1022 = vunpack.c.l.b16 %v262
    %v1023 = vunpack.c.h.b16 %v262
    %v1024 = vunpack.c.l.b16 %v263
    %v1025 = vunpack.c.h.b16 %v263
    %v1026 = vunpack.c.l.b16 %v264
    %v1027 = vunpack.c.h.b16 %v264
    %v1028 = vunpack.c.l.b16 %v265
    %v1029 = vunpack.c.h.b16 %v265
    %v1030 = vunpack.c.l.b16 %v266
    %v1031 = vunpack.c.h.b16 %v266
    %v1032 = vunpack.c.l.b16 %v267
    %v1033 = vunpack.c.h.b16 %v267
    %v1034 = vunpack.c.l.b16 %v268
    %v1035 = vunpack.c.h.b16 %v268
    %v1036 = vunpack.c.l.b16 %v269
    %v1037 = vunpack.c.h.b16 %v269
    %v1038 = vunpack.c.l.b16 %v270
    %v1039 = vunpack.c.h.b16 %v270
    %v1040 = vunpack.c.l.b16 %v271
    %v1041 = vunpack.c.h.b16 %v271
    %v1042 = vunpack.c.l.b16 %v272
    %v1043 = vunpack.c.h.b16 %v272
    %v1044 = vunpack.c.l.b16 %v273
    %v1045 = vunpack.c.h.b16 %v273
    %v1046 = vunpack.c.l.b16 %v274
    %v1047 = vunpack.c.h.b16 %v274
    %v1048 = vunpack.c.l.b16 %v275
    %v1049 = vunpack.c.h.b16 %v275
    %v1050 = vunpack.c.l.b16 %v276
    %v1051 = vunpack.c.h.b16 %v276
    %v1052 = vunpack.c.l.b16 %v277
    %v1053 = vunpack.c.h.b16 %v277
    %v1054 = vunpack.c.l.b16 %v278
    %v1055 = vunpack.c.h.b16 %v278
    %v1056 = vunpack.c.l.b16 %v279
    %v1057 = vunpack.c.h.b16 %v279
    %v1058 = vunpack.c.l.b16 %v280
    %v1059 = vunpack.c.h.b16 %v280
    %v1060 = vunpack.c.l.b16 %v281
    %v1061 = vunpack.c.h.b16 %v281
    %v1062 = vunpack.c.l.b16 %v282
    %v1063 = vunpack.c.h.b16 %v282
    %v1064 = vunpack.c.l.b16 %v283
    %v1065 = vunpack.c.h.b16 %v283
    %v1066 = vunpack.c.l.b16 %v284
    %v1067 = vunpack.c.h.b16 %v284
    %v1068 = vunpack.c.l.b16 %v285
    %v1069 = vunpack.c.h.b16 %v285
    %v1070 = vunpack.c.l.b16 %v286
    %v1071 = vunpack.c.h.b16 %v286
    %v1072 = vunpack.c.l.b16 %v287
    %v1073 = vunpack.c.h.b16 %v287
    %v1074 = vunpack.c.l.b16 %v288
    %v1075 = vunpack.c.h.b16 %v288
    %v1076 = vunpack.c.l.b16 %v289
    %v1077 = vunpack.c.h.b16 %v289
    %v1078 = vunpack.c.l.b16 %v290
    %v1079 = vunpack.c.h.b16 %v290
    %v1080 = vunpack.c.l.b16 %v291
    %v1081 = vunpack.c.h.b16 %v291
    %v1082 = vunpack.c.l.b16 %v292
    %v1083 = vunpack.c.h.b16 %v292
    %v1084 = vunpack.c.l.b16 %v293
    %v1085 = vunpack.c.h.b16 %v293
    %v1086 = vunpack.c.l.b16 %v294
    %v1087 = vunpack.c.h.b16 %v294
    %v1088 = vunpack.c.l.b16 %v295
    %v1089 = vunpack.c.h.b16 %v295
    %v1090 = vunpack.c.l.b16 %v296
    %v1091 = vunpack.c.h.b16 %v296
    %v1092 = vunpack.c.l.b16 %v297
    %v1093 = vunpack.c.h.b16 %v297
    %v1094 = vunpack.c.l.b16 %v298
    %v1095 = vunpack.c.h.b16 %v298
    %v1096 = vunpack.c.l.b16 %v299
    %v1097 = vunpack.c.h.b16 %v299
    %v1098 = vunpack.c.l.b16 %v300
    %v1099 = vunpack.c.h.b16 %v300
    %v1100 = vunpack.c.l.b16 %v301
    %v1101 = vunpack.c.h.b16 %v301
    %v1102 = vunpack.c.l.b16 %v302
    %v1103 = vunpack.c.h.b16 %v302
    %v1104 = vunpack.c.l.b16 %v303
    %v1105 = vunpack.c.h.b16 %v303
    %v1106 = vunpack.c.l.b16 %v304
    %v1107 = vunpack.c.h.b16 %v304
    %v1108 = vunpack.c.l.b16 %v305
    %v1109 = vunpack.c.h.b16 %v305
    %v1110 = vunpack.c.l.b16 %v306
    %v1111 = vunpack.c.h.b16 %v306
    %v1112 = vunpack.c.l.b16 %v307
    %v1113 = vunpack.c.h.b16 %v307
    %v1114 = vunpack.c.l.b16 %v308
    %v1115 = vunpack.c.h.b16 %v308
    %v1116 = vunpack.c.l.b16 %v309
    %v1117 = vunpack.c.h.b16 %v309
    %v1118 = vunpack.c.l.b16 %v310
    %v1119 = vunpack.c.h.b16 %v310
    %v1120 = vunpack.c.l.b16 %v311
    %v1121 = vunpack.c.h.b16 %v311
    %v1122 = vunpack.c.l.b16 %v312
    %v1123 = vunpack.c.h.b16 %v312
    %v1124 = vunpack.c.l.b16 %v313
    %v1125 = vunpack.c.h.b16 %v313
    %v1126 = vunpack.c.l.b16 %v314
    %v1127 = vunpack.c.h.b16 %v314
    %v1128 = vunpack.c.l.b16 %v315
    %v1129 = vunpack.c.h.b16 %v315
    %v1130 = vunpack.c.l.b16 %v316
    %v1131 = vunpack.c.h.b16 %v316
    %v1132 = vunpack.c.l.b16 %v317
    %v1133 = vunpack.c.h.b16 %v317
    %v1134 = vunpack.c.l.b16 %v318
    %v1135 = vunpack.c.h.b16 %v318
    %v1136 = vunpack.c.l.b16 %v319
    %v1137 = vunpack.c.h.b16 %v319
    %v1138 = vunpack.c.l.b16 %v320
    %v1139 = vunpack.c.h.b16 %v320
    %v1140 = vunpack.c.l.b16 %v321
    %v1141 = vunpack.c.h.b16 %v321
    %v1142 = vunpack.c.l.b16 %v322
    %v1143 = vunpack.c.h.b16 %v322
    %v1144 = vunpack.c.l.b16 %v323
    %v1145 = vunpack.c.h.b16 %v323
    %v1146 = vunpack.c.l.b16 %v324
    %v1147 = vunpack.c.h.b16 %v324
    %v1148 = vunpack.c.l.b16 %v325
    %v1149 = vunpack.c.h.b16 %v325
    %v1150 = vunpack.c.l.b16 %v326
    %v1151 = vunpack.c.h.b16 %v326
    %v1152 = vunpack.c.l.b16 %v327
    %v1153 = vunpack.c.h.b16 %v327
    %v1154 = vpack.c.b16 %v646, %v642
    %v1155 = vpack.c.b16 %v647, %v643
    %v1156 = vpack.c.b16 %v648, %v644
    %v1157 = vpack.c.b16 %v649, %v645
    %v1158 = vpack.c.b16 %v654, %v650
    %v1159 = vpack.c.b16 %v655, %v651
    %v1160 = vpack.c.b16 %v656, %v652
    %v1161 = vpack.c.b16 %v657, %v653
    %v1162 = vpack.c.b16 %v662, %v658
    %v1163 = vpack.c.b16 %v663, %v659
    %v1164 = vpack.c.b16 %v664, %v660
    %v1165 = vpack.c.b16 %v665, %v661
    %v1166 = vpack.c.b16 %v670, %v666
    %v1167 = vpack.c.b16 %v671, %v667
    %v1168 = vpack.c.b16 %v672, %v668
    %v1169 = vpack.c.b16 %v673, %v669
    %v1170 = vpack.c.b16 %v678, %v674
    %v1171 = vpack.c.b16 %v679, %v675
    %v1172 = vpack.c.b16 %v680, %v676
    %v1173 = vpack.c.b16 %v681, %v677
    %v1174 = vpack.c.b16 %v686, %v682
    %v1175 = vpack.c.b16 %v687, %v683
    %v1176 = vpack.c.b16 %v688, %v684
    %v1177 = vpack.c.b16 %v689, %v685
    %v1178 = vpack.c.b16 %v694, %v690
    %v1179 = vpack.c.b16 %v695, %v691
    %v1180 = vpack.c.b16 %v696, %v692
    %v1181 = vpack.c.b16 %v697, %v693
    %v1182 = vpack.c.b16 %v702, %v698
    %v1183 = vpack.c.b16 %v703, %v699
    %v1184 = vpack.c.b16 %v704, %v700
    %v1185 = vpack.c.b16 %v705, %v701
    %v1186 = vpack.c.b16 %v710, %v706
    %v1187 = vpack.c.b16 %v711, %v707
    %v1188 = vpack.c.b16 %v712, %v708
    %v1189 = vpack.c.b16 %v713, %v709
    %v1190 = vpack.c.b16 %v718, %v714
    %v1191 = vpack.c.b16 %v719, %v715
    %v1192 = vpack.c.b16 %v720, %v716
    %v1193 = vpack.c.b16 %v721, %v717
    %v1194 = vpack.c.b16 %v726, %v722
    %v1195 = vpack.c.b16 %v727, %v723
    %v1196 = vpack.c.b16 %v728, %v724
    %v1197 = vpack.c.b16 %v729, %v725
    %v1198 = vpack.c.b16 %v734, %v730
    %v1199 = vpack.c.b16 %v735, %v731
    %v1200 = vpack.c.b16 %v736, %v732
    %v1201 = vpack.c.b16 %v737, %v733
    %v1202 = vpack.c.b16 %v742, %v738
    %v1203 = vpack.c.b16 %v743, %v739
    %v1204 = vpack.c.b16 %v744, %v740
    %v1205 = vpack.c.b16 %v745, %v741
    %v1206 = vpack.c.b16 %v750, %v746
    %v1207 = vpack.c.b16 %v751, %v747
    %v1208 = vpack.c.b16 %v752, %v748
    %v1209 = vpack.c.b16 %v753, %v749
    %v1210 = vpack.c.b16 %v758, %v754
    %v1211 = vpack.c.b16 %v759, %v755
    %v1212 = vpack.c.b16 %v760, %v756
    %v1213 = vpack.c.b16 %v761, %v757
    %v1214 = vpack.c.b16 %v766, %v762
    %v1215 = vpack.c.b16 %v767, %v763
    %v1216 = vpack.c.b16 %v768, %v764
    %v1217 = vpack.c.b16 %v769, %v765
    %v1218 = vpack.c.b16 %v774, %v770
    %v1219 = vpack.c.b16 %v775, %v771
    %v1220 = vpack.c.b16 %v776, %v772
    %v1221 = vpack.c.b16 %v777, %v773
    %v1222 = vpack.c.b16 %v782, %v778
    %v1223 = vpack.c.b16 %v783, %v779
    %v1224 = vpack.c.b16 %v784, %v780
    %v1225 = vpack.c.b16 %v785, %v781
    %v1226 = vpack.c.b16 %v790, %v786
    %v1227 = vpack.c.b16 %v791, %v787
    %v1228 = vpack.c.b16 %v792, %v788
    %v1229 = vpack.c.b16 %v793, %v789
    %v1230 = vpack.c.b16 %v798, %v794
    %v1231 = vpack.c.b16 %v799, %v795
    %v1232 = vpack.c.b16 %v800, %v796
    %v1233 = vpack.c.b16 %v801, %v797
    %v1234 = vpack.c.b16 %v806, %v802
    %v1235 = vpack.c.b16 %v807, %v803
    %v1236 = vpack.c.b16 %v808, %v804
    %v1237 = vpack.c.b16 %v809, %v805
    %v1238 = vpack.c.b16 %v814, %v810
    %v1239 = vpack.c.b16 %v815, %v811
    %v1240 = vpack.c.b16 %v816, %v812
    %v1241 = vpack.c.b16 %v817, %v813
    %v1242 = vpack.c.b16 %v822, %v818
    %v1243 = vpack.c.b16 %v823, %v819
    %v1244 = vpack.c.b16 %v824, %v820
    %v1245 = vpack.c.b16 %v825, %v821
    %v1246 = vpack.c.b16 %v830, %v826
    %v1247 = vpack.c.b16 %v831, %v827
    %v1248 = vpack.c.b16 %v832, %v828
    %v1249 = vpack.c.b16 %v833, %v829
    %v1250 = vpack.c.b16 %v838, %v834
    %v1251 = vpack.c.b16 %v839, %v835
    %v1252 = vpack.c.b16 %v840, %v836
    %v1253 = vpack.c.b16 %v841, %v837
    %v1254 = vpack.c.b16 %v846, %v842
    %v1255 = vpack.c.b16 %v847, %v843
    %v1256 = vpack.c.b16 %v848, %v844
    %v1257 = vpack.c.b16 %v849, %v845
    %v1258 = vpack.c.b16 %v854, %v850
    %v1259 = vpack.c.b16 %v855, %v851
    %v1260 = vpack.c.b16 %v856, %v852
    %v1261 = vpack.c.b16 %v857, %v853
    %v1262 = vpack.c.b16 %v862, %v858
    %v1263 = vpack.c.b16 %v863, %v859
    %v1264 = vpack.c.b16 %v864, %v860
    %v1265 = vpack.c.b16 %v865, %v861
    %v1266 = vpack.c.b16 %v870, %v866
    %v1267 = vpack.c.b16 %v871, %v867
    %v1268 = vpack.c.b16 %v872, %v868
    %v1269 = vpack.c.b16 %v873, %v869
    %v1270 = vpack.c.b16 %v878, %v874
    %v1271 = vpack.c.b16 %v879, %v875
    %v1272 = vpack.c.b16 %v880, %v876
    %v1273 = vpack.c.b16 %v881, %v877
    %v1274 = vpack.c.b16 %v886, %v882
    %v1275 = vpack.c.b16 %v887, %v883
    %v1276 = vpack.c.b16 %v888, %v884
    %v1277 = vpack.c.b16 %v889, %v885
    %v1278 = vpack.c.b16 %v894, %v890
    %v1279 = vpack.c.b16 %v895, %v891
    %v1280 = vpack.c.b16 %v896, %v892
    %v1281 = vpack.c.b16 %v897, %v893
    %v1282 = vpack.c.b16 %v902, %v898
    %v1283 = vpack.c.b16 %v903, %v899
    %v1284 = vpack.c.b16 %v904, %v900
    %v1285 = vpack.c.b16 %v905, %v901
    %v1286 = vpack.c.b16 %v910, %v906
    %v1287 = vpack.c.b16 %v911, %v907
    %v1288 = vpack.c.b16 %v912, %v908
    %v1289 = vpack.c.b16 %v913, %v909
    %v1290 = vpack.c.b16 %v918, %v914
    %v1291 = vpack.c.b16 %v919, %v915
    %v1292 = vpack.c.b16 %v920, %v916
    %v1293 = vpack.c.b16 %v921, %v917
    %v1294 = vpack.c.b16 %v926, %v922
    %v1295 = vpack.c.b16 %v927, %v923
    %v1296 = vpack.c.b16 %v928, %v924
    %v1297 = vpack.c.b16 %v929, %v925
    %v1298 = vpack.c.b16 %v934, %v930
    %v1299 = vpack.c.b16 %v935, %v931
    %v1300 = vpack.c.b16 %v936, %v932
    %v1301 = vpack.c.b16 %v937, %v933
    %v1302 = vpack.c.b16 %v942, %v938
    %v1303 = vpack.c.b16 %v943, %v939
    %v1304 = vpack.c.b16 %v944, %v940
    %v1305 = vpack.c.b16 %v945, %v941
    %v1306 = vpack.c.b16 %v950, %v946
    %v1307 = vpack.c.b16 %v951, %v947
    %v1308 = vpack.c.b16 %v952, %v948
    %v1309 = vpack.c.b16 %v953, %v949
    %v1310 = vpack.c.b16 %v958, %v954
    %v1311 = vpack.c.b16 %v959, %v955
    %v1312 = vpack.c.b16 %v960, %v956
    %v1313 = vpack.c.b16 %v961, %v957
    %v1314 = vpack.c.b16 %v966, %v962
    %v1315 = vpack.c.b16 %v967, %v963
    %v1316 = vpack.c.b16 %v968, %v964
    %v1317 = vpack.c.b16 %v969, %v965
    %v1318 = vpack.c.b16 %v974, %v970
    %v1319 = vpack.c.b16 %v975, %v971
    %v1320 = vpack.c.b16 %v976, %v972
    %v1321 = vpack.c.b16 %v977, %v973
    %v1322 = vpack.c.b16 %v982, %v978
    %v1323 = vpack.c.b16 %v983, %v979
    %v1324 = vpack.c.b16 %v984, %v980
    %v1325 = vpack.c.b16 %v985, %v981
    %v1326 = vpack.c.b16 %v990, %v986
    %v1327 = vpack.c.b16 %v991, %v987
    %v1328 = vpack.c.b16 %v992, %v988
    %v1329 = vpack.c.b16 %v993, %v989
    %v1330 = vpack.c.b16 %v998, %v994
    %v1331 = vpack.c.b16 %v999, %v995
    %v1332 = vpack.c.b16 %v1000, %v996
    %v1333 = vpack.c.b16 %v1001, %v997
    %v1334 = vpack.c.b16 %v1006, %v1002
    %v1335 = vpack.c.b16 %v1007, %v1003
    %v1336 = vpack.c.b16 %v1008, %v1004
    %v1337 = vpack.c.b16 %v1009, %v1005
    %v1338 = vpack.c.b16 %v1014, %v1010
    %v1339 = vpack.c.b16 %v1015, %v1011
    %v1340 = vpack.c.b16 %v1016, %v1012
    %v1341 = vpack.c.b16 %v1017, %v1013
    %v1342 = vpack.c.b16 %v1022, %v1018
    %v1343 = vpack.c.b16 %v1023, %v1019
    %v1344 = vpack.c.b16 %v1024, %v1020
    %v1345 = vpack.c.b16 %v1025, %v1021
    %v1346 = vpack.c.b16 %v1030, %v1026
    %v1347 = vpack.c.b16 %v1031, %v1027
    %v1348 = vpack.c.b16 %v1032, %v1028
    %v1349 = vpack.c.b16 %v1033, %v1029
    %v1350 = vpack.c.b16 %v1038, %v1034
    %v1351 = vpack.c.b16 %v1039, %v1035
    %v1352 = vpack.c.b16 %v1040, %v1036
    %v1353 = vpack.c.b16 %v1041, %v1037
    %v1354 = vpack.c.b16 %v1046, %v1042
    %v1355 = vpack.c.b16 %v1047, %v1043
    %v1356 = vpack.c.b16 %v1048, %v1044
    %v1357 = vpack.c.b16 %v1049, %v1045
    %v1358 = vpack.c.b16 %v1054, %v1050
    %v1359 = vpack.c.b16 %v1055, %v1051
    %v1360 = vpack.c.b16 %v1056, %v1052
    %v1361 = vpack.c.b16 %v1057, %v1053
    %v1362 = vpack.c.b16 %v1062, %v1058
    %v1363 = vpack.c.b16 %v1063, %v1059
    %v1364 = vpack.c.b16 %v1064, %v1060
    %v1365 = vpack.c.b16 %v1065, %v1061
    %v1366 = vpack.c.b16 %v1070, %v1066
    %v1367 = vpack.c.b16 %v1071, %v1067
    %v1368 = vpack.c.b16 %v1072, %v1068
    %v1369 = vpack.c.b16 %v1073, %v1069
    %v1370 = vpack.c.b16 %v1078, %v1074
    %v1371 = vpack.c.b16 %v1079, %v1075
    %v1372 = vpack.c.b16 %v1080, %v1076
    %v1373 = vpack.c.b16 %v1081, %v1077
    %v1374 = vpack.c.b16 %v1086, %v1082
    %v1375 = vpack.c.b16 %v1087, %v1083
    %v1376 = vpack.c.b16 %v1088, %v1084
    %v1377 = vpack.c.b16 %v1089, %v1085
    %v1378 = vpack.c.b16 %v1094, %v1090
    %v1379 = vpack.c.b16 %v1095, %v1091
    %v1380 = vpack.c.b16 %v1096, %v1092
    %v1381 = vpack.c.b16 %v1097, %v1093
    %v1382 = vpack.c.b16 %v1102, %v1098
    %v1383 = vpack.c.b16 %v1103, %v1099
    %v1384 = vpack.c.b16 %v1104, %v1100
    %v1385 = vpack.c.b16 %v1105, %v1101
    %v1386 = vpack.c.b16 %v1110, %v1106
    %v1387 = vpack.c.b16 %v1111, %v1107
    %v1388 = vpack.c.b16 %v1112, %v1108
    %v1389 = vpack.c.b16 %v1113, %v1109
    %v1390 = vpack.c.b16 %v1118, %v1114
    %v1391 = vpack.c.b16 %v1119, %v1115
    %v1392 = vpack.c.b16 %v1120, %v1116
    %v1393 = vpack.c.b16 %v1121, %v1117
    %v1394 = vpack.c.b16 %v1126, %v1122
    %v1395 = vpack.c.b16 %v1127, %v1123
    %v1396 = vpack.c.b16 %v1128, %v1124
    %v1397 = vpack.c.b16 %v1129, %v1125
    %v1398 = vpack.c.b16 %v1134, %v1130
    %v1399 = vpack.c.b16 %v1135, %v1131
    %v1400 = vpack.c.b16 %v1136, %v1132
    %v1401 = vpack.c.b16 %v1137, %v1133
    %v1402 = vpack.c.b16 %v1142, %v1138
    %v1403 = vpack.c.b16 %v1143, %v1139
    %v1404 = vpack.c.b16 %v1144, %v1140
    %v1405 = vpack.c.b16 %v1145, %v1141
    %v1406 = vpack.c.b16 %v1150, %v1146
    %v1407 = vpack.c.b16 %v1151, %v1147
    %v1408 = vpack.c.b16 %v1152, %v1148
    %v1409 = vpack.c.b16 %v1153, %v1149
    %1666 = vmatprep.subr.bf16.mxu0 %v1155
    %1667 = vmatpush1.bf16.msra.mxu0 %v1154
    %1668 = vmatprep.subr.bf16.mxu0 %v1159
    %1669 = vmatpush1.bf16.msra.mxu0 %v1158
    %1670 = vmatprep.subr.bf16.mxu0 %v1163
    %1671 = vmatpush1.bf16.msra.mxu0 %v1162
    %1672 = vmatprep.subr.bf16.mxu0 %v1167
    %1673 = vmatpush1.bf16.msra.mxu0 %v1166
    %1674 = vmatprep.subr.bf16.mxu0 %v1171
    %1675 = vmatpush1.bf16.msra.mxu0 %v1170
    %1676 = vmatprep.subr.bf16.mxu0 %v1175
    %1677 = vmatpush1.bf16.msra.mxu0 %v1174
    %1678 = vmatprep.subr.bf16.mxu0 %v1179
    %1679 = vmatpush1.bf16.msra.mxu0 %v1178
    %1680 = vmatprep.subr.bf16.mxu0 %v1183
    %1681 = vmatpush1.bf16.msra.mxu0 %v1182
    %1682 = vmatprep.subr.bf16.mxu0 %v1187
    %1683 = vmatpush1.bf16.msra.mxu0 %v1186
    %1684 = vmatprep.subr.bf16.mxu0 %v1191
    %1685 = vmatpush1.bf16.msra.mxu0 %v1190
    %1686 = vmatprep.subr.bf16.mxu0 %v1195
    %1687 = vmatpush1.bf16.msra.mxu0 %v1194
    %1688 = vmatprep.subr.bf16.mxu0 %v1199
    %1689 = vmatpush1.bf16.msra.mxu0 %v1198
    %1690 = vmatprep.subr.bf16.mxu0 %v1203
    %1691 = vmatpush1.bf16.msra.mxu0 %v1202
    %1692 = vmatprep.subr.bf16.mxu0 %v1207
    %1693 = vmatpush1.bf16.msra.mxu0 %v1206
    %1694 = vmatprep.subr.bf16.mxu0 %v1211
    %1695 = vmatpush1.bf16.msra.mxu0 %v1210
    %1696 = vmatprep.subr.bf16.mxu0 %v1215
    %1697 = vmatpush1.bf16.msra.mxu0 %v1214
    %1698 = vmatprep.mubr.bf16.mxu0 %v366
    %1699 = vmatmul.mubr.bf16.gmra.mrb[0].mxu0 %v352
    %v1700 = vpop.f32.mrb[0].mxu0
    %v1701 = vadd.f32 0.0, %v1700
    %v1702 = vpop.f32.mrb[0].mxu0
    %v1703 = vadd.f32 0.0, %v1702
    %v1704 = vpop.f32.mrb[0].mxu0
    %v1705 = vpop.f32.mrb[0].mxu0
    %1706 = vdwg.mxu0
    %1707 = vmatprep.subr.bf16.mxu0 %v1219
    %1708 = vmatpush1.bf16.msra.mxu0 %v1218
    %1709 = vmatprep.subr.bf16.mxu0 %v1223
    %1710 = vmatpush1.bf16.msra.mxu0 %v1222
    %1711 = vmatprep.subr.bf16.mxu0 %v1227
    %1712 = vmatpush1.bf16.msra.mxu0 %v1226
    %1713 = vmatprep.subr.bf16.mxu0 %v1231
    %1714 = vmatpush1.bf16.msra.mxu0 %v1230
    %1715 = vmatprep.subr.bf16.mxu0 %v1235
    %1716 = vmatpush1.bf16.msra.mxu0 %v1234
    %1717 = vmatprep.subr.bf16.mxu0 %v1239
    %1718 = vmatpush1.bf16.msra.mxu0 %v1238
    %1719 = vmatprep.subr.bf16.mxu0 %v1243
    %1720 = vmatpush1.bf16.msra.mxu0 %v1242
    %1721 = vmatprep.subr.bf16.mxu0 %v1247
    %1722 = vmatpush1.bf16.msra.mxu0 %v1246
    %1723 = vmatprep.subr.bf16.mxu0 %v1251
    %1724 = vmatpush1.bf16.msra.mxu0 %v1250
    %1725 = vmatprep.subr.bf16.mxu0 %v1255
    %1726 = vmatpush1.bf16.msra.mxu0 %v1254
    %1727 = vmatprep.subr.bf16.mxu0 %v1259
    %1728 = vmatpush1.bf16.msra.mxu0 %v1258
    %1729 = vmatprep.subr.bf16.mxu0 %v1263
    %1730 = vmatpush1.bf16.msra.mxu0 %v1262
    %1731 = vmatprep.subr.bf16.mxu0 %v1267
    %1732 = vmatpush1.bf16.msra.mxu0 %v1266
    %1733 = vmatprep.subr.bf16.mxu0 %v1271
    %1734 = vmatpush1.bf16.msra.mxu0 %v1270
    %1735 = vmatprep.subr.bf16.mxu0 %v1275
    %1736 = vmatpush1.bf16.msra.mxu0 %v1274
    %1737 = vmatprep.subr.bf16.mxu0 %v1279
    %1738 = vmatpush1.bf16.msra.mxu0 %v1278
    %1739 = vmatprep.mubr.bf16.mxu0 %v376
    %1740 = vmatmul.mubr.bf16.gmra.mrb[0].mxu0 %v374
    %v1741 = vpop.f32.mrb[0].mxu0
    %v1742 = vadd.f32 %v1701, %v1741
    %v1743 = vpop.f32.mrb[0].mxu0
    %v1744 = vadd.f32 %v1703, %v1743
    %v1745 = vpop.f32.mrb[0].mxu0
    %v1746 = vpop.f32.mrb[0].mxu0
    %1747 = vdwg.mxu0
    %1748 = vmatprep.subr.bf16.mxu0 %v1283
    %1749 = vmatpush1.bf16.msra.mxu0 %v1282
    %1750 = vmatprep.subr.bf16.mxu0 %v1287
    %1751 = vmatpush1.bf16.msra.mxu0 %v1286
    %1752 = vmatprep.subr.bf16.mxu0 %v1291
    %1753 = vmatpush1.bf16.msra.mxu0 %v1290
    %1754 = vmatprep.subr.bf16.mxu0 %v1295
    %1755 = vmatpush1.bf16.msra.mxu0 %v1294
    %1756 = vmatprep.subr.bf16.mxu0 %v1299
    %1757 = vmatpush1.bf16.msra.mxu0 %v1298
    %1758 = vmatprep.subr.bf16.mxu0 %v1303
    %1759 = vmatpush1.bf16.msra.mxu0 %v1302
    %1760 = vmatprep.subr.bf16.mxu0 %v1307
    %1761 = vmatpush1.bf16.msra.mxu0 %v1306
    %1762 = vmatprep.subr.bf16.mxu0 %v1311
    %1763 = vmatpush1.bf16.msra.mxu0 %v1310
    %1764 = vmatprep.subr.bf16.mxu0 %v1315
    %1765 = vmatpush1.bf16.msra.mxu0 %v1314
    %1766 = vmatprep.subr.bf16.mxu0 %v1319
    %1767 = vmatpush1.bf16.msra.mxu0 %v1318
    %1768 = vmatprep.subr.bf16.mxu0 %v1323
    %1769 = vmatpush1.bf16.msra.mxu0 %v1322
    %1770 = vmatprep.subr.bf16.mxu0 %v1327
    %1771 = vmatpush1.bf16.msra.mxu0 %v1326
    %1772 = vmatprep.subr.bf16.mxu0 %v1331
    %1773 = vmatpush1.bf16.msra.mxu0 %v1330
    %1774 = vmatprep.subr.bf16.mxu0 %v1335
    %1775 = vmatpush1.bf16.msra.mxu0 %v1334
    %1776 = vmatprep.subr.bf16.mxu0 %v1339
    %1777 = vmatpush1.bf16.msra.mxu0 %v1338
    %1778 = vmatprep.subr.bf16.mxu0 %v1343
    %1779 = vmatpush1.bf16.msra.mxu0 %v1342
    %1780 = vmatprep.mubr.bf16.mxu0 %v373
    %1781 = vmatmul.mubr.bf16.gmra.mrb[0].mxu0 %v359
    %v1782 = vpop.f32.mrb[0].mxu0
    %v1783 = vadd.f32 %v1742, %v1782
    %v1784 = vpop.f32.mrb[0].mxu0
    %v1785 = vadd.f32 %v1744, %v1784
    %v1786 = vpop.f32.mrb[0].mxu0
    %v1787 = vpop.f32.mrb[0].mxu0
    %1788 = vdwg.mxu0
    %1789 = vmatprep.subr.bf16.mxu0 %v1347
    %1790 = vmatpush1.bf16.msra.mxu0 %v1346
    %1791 = vmatprep.subr.bf16.mxu0 %v1351
    %1792 = vmatpush1.bf16.msra.mxu0 %v1350
    %1793 = vmatprep.subr.bf16.mxu0 %v1355
    %1794 = vmatpush1.bf16.msra.mxu0 %v1354
    %1795 = vmatprep.subr.bf16.mxu0 %v1359
    %1796 = vmatpush1.bf16.msra.mxu0 %v1358
    %1797 = vmatprep.subr.bf16.mxu0 %v1363
    %1798 = vmatpush1.bf16.msra.mxu0 %v1362
    %1799 = vmatprep.subr.bf16.mxu0 %v1367
    %1800 = vmatpush1.bf16.msra.mxu0 %v1366
    %1801 = vmatprep.subr.bf16.mxu0 %v1371
    %1802 = vmatpush1.bf16.msra.mxu0 %v1370
    %1803 = vmatprep.subr.bf16.mxu0 %v1375
    %1804 = vmatpush1.bf16.msra.mxu0 %v1374
    %1805 = vmatprep.subr.bf16.mxu0 %v1379
    %1806 = vmatpush1.bf16.msra.mxu0 %v1378
    %1807 = vmatprep.subr.bf16.mxu0 %v1383
    %1808 = vmatpush1.bf16.msra.mxu0 %v1382
    %1809 = vmatprep.subr.bf16.mxu0 %v1387
    %1810 = vmatpush1.bf16.msra.mxu0 %v1386
    %1811 = vmatprep.subr.bf16.mxu0 %v1391
    %1812 = vmatpush1.bf16.msra.mxu0 %v1390
    %1813 = vmatprep.subr.bf16.mxu0 %v1395
    %1814 = vmatpush1.bf16.msra.mxu0 %v1394
    %1815 = vmatprep.subr.bf16.mxu0 %v1399
    %1816 = vmatpush1.bf16.msra.mxu0 %v1398
    %1817 = vmatprep.subr.bf16.mxu0 %v1403
    %1818 = vmatpush1.bf16.msra.mxu0 %v1402
    %1819 = vmatprep.subr.bf16.mxu0 %v1407
    %1820 = vmatpush1.bf16.msra.mxu0 %v1406
    %1821 = vmatprep.mubr.bf16.mxu0 %v377
    %1822 = vmatmul.mubr.bf16.gmra.mrb[0].mxu0 %v375
    %v1823 = vpop.f32.mrb[0].mxu0
    %v1824 = vadd.f32 %v1783, %v1823
    %v1825 = vpop.f32.mrb[0].mxu0
    %v1826 = vadd.f32 %v1785, %v1825
    %v1827 = vpop.f32.mrb[0].mxu0
    %v1828 = vpop.f32.mrb[0].mxu0
    %1829 = vdwg.mxu0
    %1830 = vmatprep.subr.bf16.mxu0 %v1157
    %1831 = vmatpush1.bf16.msra.mxu0 %v1156
    %1832 = vmatprep.subr.bf16.mxu0 %v1161
    %1833 = vmatpush1.bf16.msra.mxu0 %v1160
    %1834 = vmatprep.subr.bf16.mxu0 %v1165
    %1835 = vmatpush1.bf16.msra.mxu0 %v1164
    %1836 = vmatprep.subr.bf16.mxu0 %v1169
    %1837 = vmatpush1.bf16.msra.mxu0 %v1168
    %1838 = vmatprep.subr.bf16.mxu0 %v1173
    %1839 = vmatpush1.bf16.msra.mxu0 %v1172
    %1840 = vmatprep.subr.bf16.mxu0 %v1177
    %1841 = vmatpush1.bf16.msra.mxu0 %v1176
    %1842 = vmatprep.subr.bf16.mxu0 %v1181
    %1843 = vmatpush1.bf16.msra.mxu0 %v1180
    %1844 = vmatprep.subr.bf16.mxu0 %v1185
    %1845 = vmatpush1.bf16.msra.mxu0 %v1184
    %1846 = vmatprep.subr.bf16.mxu0 %v1189
    %1847 = vmatpush1.bf16.msra.mxu0 %v1188
    %1848 = vmatprep.subr.bf16.mxu0 %v1193
    %1849 = vmatpush1.bf16.msra.mxu0 %v1192
    %1850 = vmatprep.subr.bf16.mxu0 %v1197
    %1851 = vmatpush1.bf16.msra.mxu0 %v1196
    %1852 = vmatprep.subr.bf16.mxu0 %v1201
    %1853 = vmatpush1.bf16.msra.mxu0 %v1200
    %1854 = vmatprep.subr.bf16.mxu0 %v1205
    %1855 = vmatpush1.bf16.msra.mxu0 %v1204
    %1856 = vmatprep.subr.bf16.mxu0 %v1209
    %1857 = vmatpush1.bf16.msra.mxu0 %v1208
    %1858 = vmatprep.subr.bf16.mxu0 %v1213
    %1859 = vmatpush1.bf16.msra.mxu0 %v1212
    %1860 = vmatprep.subr.bf16.mxu0 %v1217
    %1861 = vmatpush1.bf16.msra.mxu0 %v1216
    %1862 = vmatprep.mubr.bf16.mxu0 %v366
    %1863 = vmatmul.mubr.bf16.gmra.mrb[0].mxu0 %v352
    %v1864 = vpop.f32.mrb[0].mxu0
    %v1865 = vadd.f32 0.0, %v1864
    %v1866 = vpop.f32.mrb[0].mxu0
    %v1867 = vadd.f32 0.0, %v1866
    %v1868 = vpop.f32.mrb[0].mxu0
    %v1869 = vpop.f32.mrb[0].mxu0
    %1870 = vdwg.mxu0
    %1871 = vmatprep.subr.bf16.mxu0 %v1221
    %1872 = vmatpush1.bf16.msra.mxu0 %v1220
    %1873 = vmatprep.subr.bf16.mxu0 %v1225
    %1874 = vmatpush1.bf16.msra.mxu0 %v1224
    %1875 = vmatprep.subr.bf16.mxu0 %v1229
    %1876 = vmatpush1.bf16.msra.mxu0 %v1228
    %1877 = vmatprep.subr.bf16.mxu0 %v1233
    %1878 = vmatpush1.bf16.msra.mxu0 %v1232
    %1879 = vmatprep.subr.bf16.mxu0 %v1237
    %1880 = vmatpush1.bf16.msra.mxu0 %v1236
    %1881 = vmatprep.subr.bf16.mxu0 %v1241
    %1882 = vmatpush1.bf16.msra.mxu0 %v1240
    %1883 = vmatprep.subr.bf16.mxu0 %v1245
    %1884 = vmatpush1.bf16.msra.mxu0 %v1244
    %1885 = vmatprep.subr.bf16.mxu0 %v1249
    %1886 = vmatpush1.bf16.msra.mxu0 %v1248
    %1887 = vmatprep.subr.bf16.mxu0 %v1253
    %1888 = vmatpush1.bf16.msra.mxu0 %v1252
    %1889 = vmatprep.subr.bf16.mxu0 %v1257
    %1890 = vmatpush1.bf16.msra.mxu0 %v1256
    %1891 = vmatprep.subr.bf16.mxu0 %v1261
    %1892 = vmatpush1.bf16.msra.mxu0 %v1260
    %1893 = vmatprep.subr.bf16.mxu0 %v1265
    %1894 = vmatpush1.bf16.msra.mxu0 %v1264
    %1895 = vmatprep.subr.bf16.mxu0 %v1269
    %1896 = vmatpush1.bf16.msra.mxu0 %v1268
    %1897 = vmatprep.subr.bf16.mxu0 %v1273
    %1898 = vmatpush1.bf16.msra.mxu0 %v1272
    %1899 = vmatprep.subr.bf16.mxu0 %v1277
    %1900 = vmatpush1.bf16.msra.mxu0 %v1276
    %1901 = vmatprep.subr.bf16.mxu0 %v1281
    %1902 = vmatpush1.bf16.msra.mxu0 %v1280
    %1903 = vmatprep.mubr.bf16.mxu0 %v376
    %1904 = vmatmul.mubr.bf16.gmra.mrb[0].mxu0 %v374
    %v1905 = vpop.f32.mrb[0].mxu0
    %v1906 = vadd.f32 %v1865, %v1905
    %v1907 = vpop.f32.mrb[0].mxu0
    %v1908 = vadd.f32 %v1867, %v1907
    %v1909 = vpop.f32.mrb[0].mxu0
    %v1910 = vpop.f32.mrb[0].mxu0
    %1911 = vdwg.mxu0
    %1912 = vmatprep.subr.bf16.mxu0 %v1285
    %1913 = vmatpush1.bf16.msra.mxu0 %v1284
    %1914 = vmatprep.subr.bf16.mxu0 %v1289
    %1915 = vmatpush1.bf16.msra.mxu0 %v1288
    %1916 = vmatprep.subr.bf16.mxu0 %v1293
    %1917 = vmatpush1.bf16.msra.mxu0 %v1292
    %1918 = vmatprep.subr.bf16.mxu0 %v1297
    %1919 = vmatpush1.bf16.msra.mxu0 %v1296
    %1920 = vmatprep.subr.bf16.mxu0 %v1301
    %1921 = vmatpush1.bf16.msra.mxu0 %v1300
    %1922 = vmatprep.subr.bf16.mxu0 %v1305
    %1923 = vmatpush1.bf16.msra.mxu0 %v1304
    %1924 = vmatprep.subr.bf16.mxu0 %v1309
    %1925 = vmatpush1.bf16.msra.mxu0 %v1308
    %1926 = vmatprep.subr.bf16.mxu0 %v1313
    %1927 = vmatpush1.bf16.msra.mxu0 %v1312
    %1928 = vmatprep.subr.bf16.mxu0 %v1317
    %1929 = vmatpush1.bf16.msra.mxu0 %v1316
    %1930 = vmatprep.subr.bf16.mxu0 %v1321
    %1931 = vmatpush1.bf16.msra.mxu0 %v1320
    %1932 = vmatprep.subr.bf16.mxu0 %v1325
    %1933 = vmatpush1.bf16.msra.mxu0 %v1324
    %1934 = vmatprep.subr.bf16.mxu0 %v1329
    %1935 = vmatpush1.bf16.msra.mxu0 %v1328
    %1936 = vmatprep.subr.bf16.mxu0 %v1333
    %1937 = vmatpush1.bf16.msra.mxu0 %v1332
    %1938 = vmatprep.subr.bf16.mxu0 %v1337
    %1939 = vmatpush1.bf16.msra.mxu0 %v1336
    %1940 = vmatprep.subr.bf16.mxu0 %v1341
    %1941 = vmatpush1.bf16.msra.mxu0 %v1340
    %1942 = vmatprep.subr.bf16.mxu0 %v1345
    %1943 = vmatpush1.bf16.msra.mxu0 %v1344
    %1944 = vmatprep.mubr.bf16.mxu0 %v373
    %1945 = vmatmul.mubr.bf16.gmra.mrb[0].mxu0 %v359
    %v1946 = vpop.f32.mrb[0].mxu0
    %v1947 = vadd.f32 %v1906, %v1946
    %v1948 = vpop.f32.mrb[0].mxu0
    %v1949 = vadd.f32 %v1908, %v1948
    %v1950 = vpop.f32.mrb[0].mxu0
    %v1951 = vpop.f32.mrb[0].mxu0
    %1952 = vdwg.mxu0
    %1953 = vmatprep.subr.bf16.mxu0 %v1349
    %1954 = vmatpush1.bf16.msra.mxu0 %v1348
    %1955 = vmatprep.subr.bf16.mxu0 %v1353
    %1956 = vmatpush1.bf16.msra.mxu0 %v1352
    %1957 = vmatprep.subr.bf16.mxu0 %v1357
    %1958 = vmatpush1.bf16.msra.mxu0 %v1356
    %1959 = vmatprep.subr.bf16.mxu0 %v1361
    %1960 = vmatpush1.bf16.msra.mxu0 %v1360
    %1961 = vmatprep.subr.bf16.mxu0 %v1365
    %1962 = vmatpush1.bf16.msra.mxu0 %v1364
    %1963 = vmatprep.subr.bf16.mxu0 %v1369
    %1964 = vmatpush1.bf16.msra.mxu0 %v1368
    %1965 = vmatprep.subr.bf16.mxu0 %v1373
    %1966 = vmatpush1.bf16.msra.mxu0 %v1372
    %1967 = vmatprep.subr.bf16.mxu0 %v1377
    %1968 = vmatpush1.bf16.msra.mxu0 %v1376
    %1969 = vmatprep.subr.bf16.mxu0 %v1381
    %1970 = vmatpush1.bf16.msra.mxu0 %v1380
    %1971 = vmatprep.subr.bf16.mxu0 %v1385
    %1972 = vmatpush1.bf16.msra.mxu0 %v1384
    %1973 = vmatprep.subr.bf16.mxu0 %v1389
    %1974 = vmatpush1.bf16.msra.mxu0 %v1388
    %1975 = vmatprep.subr.bf16.mxu0 %v1393
    %1976 = vmatpush1.bf16.msra.mxu0 %v1392
    %1977 = vmatprep.subr.bf16.mxu0 %v1397
    %1978 = vmatpush1.bf16.msra.mxu0 %v1396
    %1979 = vmatprep.subr.bf16.mxu0 %v1401
    %1980 = vmatpush1.bf16.msra.mxu0 %v1400
    %1981 = vmatprep.subr.bf16.mxu0 %v1405
    %1982 = vmatpush1.bf16.msra.mxu0 %v1404
    %1983 = vmatprep.subr.bf16.mxu0 %v1409
    %1984 = vmatpush1.bf16.msra.mxu0 %v1408
    %1985 = vmatprep.mubr.bf16.mxu0 %v377
    %1986 = vmatmul.mubr.bf16.gmra.mrb[0].mxu0 %v375
    %v1987 = vpop.f32.mrb[0].mxu0
    %v1988 = vadd.f32 %v1947, %v1987
    %v1989 = vpop.f32.mrb[0].mxu0
    %v1990 = vadd.f32 %v1949, %v1989
    %v1991 = vpop.f32.mrb[0].mxu0
    %v1992 = vpop.f32.mrb[0].mxu0
    %1993 = vdwg.mxu0
    %v1994 = vmax.f32 %v1824, 0.0
    %v1995 = vmax.f32 %v1826, 0.0
    %v1996 = vmax.f32 %v1988, 0.0
    %v1997 = vmax.f32 %v1990, 0.0
    %v1998 = vpack.c.bf16 %v1994, %v1994
    %v1999 = vpack.c.bf16 %v1995, %v1995
    %v2000 = vpack.c.bf16 %v1996, %v1996
    %v2001 = vpack.c.bf16 %v1997, %v1997
    %v2002 = vld [vmem:[#allocation7] sm:$0xff]
    %v2003 = vld [vmem:[#allocation7 + $0x8] sm:$0xff]
    %v2004 = vld [vmem:[#allocation7 + $0x10] sm:$0xff]
    %v2005 = vld [vmem:[#allocation7 + $0x18] sm:$0xff]
    %v2006 = vld [vmem:[#allocation7 + $0x20] sm:$0xff]
    %v2007 = vld [vmem:[#allocation7 + $0x28] sm:$0xff]
    %v2008 = vld [vmem:[#allocation7 + $0x30] sm:$0xff]
    %v2009 = vld [vmem:[#allocation7 + $0x38] sm:$0xff]
    %v2010 = vld [vmem:[#allocation7 + $0x40] sm:$0xff]
    %v2011 = vld [vmem:[#allocation7 + $0x48] sm:$0xff]
    %v2012 = vld [vmem:[#allocation7 + $0x50] sm:$0xff]
    %v2013 = vld [vmem:[#allocation7 + $0x58] sm:$0xff]
    %v2014 = vld [vmem:[#allocation7 + $0x60] sm:$0xff]
    %v2015 = vld [vmem:[#allocation7 + $0x68] sm:$0xff]
    %v2016 = vld [vmem:[#allocation7 + $0x70] sm:$0xff]
    %v2017 = vld [vmem:[#allocation7 + $0x78] sm:$0xff]
    %v2018 = vld [vmem:[#allocation7 + $0x80] sm:$0xff]
    %v2019 = vld [vmem:[#allocation7 + $0x88] sm:$0xff]
    %v2020 = vld [vmem:[#allocation7 + $0x90] sm:$0xff]
    %v2021 = vld [vmem:[#allocation7 + $0x98] sm:$0xff]
    %v2022 = vld [vmem:[#allocation7 + $0xa0] sm:$0xff]
    %v2023 = vld [vmem:[#allocation7 + $0xa8] sm:$0xff]
    %v2024 = vld [vmem:[#allocation7 + $0xb0] sm:$0xff]
    %v2025 = vld [vmem:[#allocation7 + $0xb8] sm:$0xff]
    %v2026 = vld [vmem:[#allocation7 + $0xc0] sm:$0xff]
    %v2027 = vld [vmem:[#allocation7 + $0xc8] sm:$0xff]
    %v2028 = vld [vmem:[#allocation7 + $0xd0] sm:$0xff]
    %v2029 = vld [vmem:[#allocation7 + $0xd8] sm:$0xff]
    %v2030 = vld [vmem:[#allocation7 + $0xe0] sm:$0xff]
    %v2031 = vld [vmem:[#allocation7 + $0xe8] sm:$0xff]
    %v2032 = vld [vmem:[#allocation7 + $0xf0] sm:$0xff]
    %v2033 = vld [vmem:[#allocation7 + $0xf8] sm:$0xff]
    %v2034 = vld [vmem:[#allocation7 + $0x100] sm:$0xff]
    %v2035 = vld [vmem:[#allocation7 + $0x108] sm:$0xff]
    %v2036 = vld [vmem:[#allocation7 + $0x110] sm:$0xff]
    %v2037 = vld [vmem:[#allocation7 + $0x118] sm:$0xff]
    %v2038 = vld [vmem:[#allocation7 + $0x120] sm:$0xff]
    %v2039 = vld [vmem:[#allocation7 + $0x128] sm:$0xff]
    %v2040 = vld [vmem:[#allocation7 + $0x130] sm:$0xff]
    %v2041 = vld [vmem:[#allocation7 + $0x138] sm:$0xff]
    %v2042 = vld [vmem:[#allocation7 + $0x140] sm:$0xff]
    %v2043 = vld [vmem:[#allocation7 + $0x148] sm:$0xff]
    %v2044 = vld [vmem:[#allocation7 + $0x150] sm:$0xff]
    %v2045 = vld [vmem:[#allocation7 + $0x158] sm:$0xff]
    %v2046 = vld [vmem:[#allocation7 + $0x160] sm:$0xff]
    %v2047 = vld [vmem:[#allocation7 + $0x168] sm:$0xff]
    %v2048 = vld [vmem:[#allocation7 + $0x170] sm:$0xff]
    %v2049 = vld [vmem:[#allocation7 + $0x178] sm:$0xff]
    %v2050 = vld [vmem:[#allocation7 + $0x180] sm:$0xff]
    %v2051 = vld [vmem:[#allocation7 + $0x188] sm:$0xff]
    %v2052 = vld [vmem:[#allocation7 + $0x190] sm:$0xff]
    %v2053 = vld [vmem:[#allocation7 + $0x198] sm:$0xff]
    %v2054 = vld [vmem:[#allocation7 + $0x1a0] sm:$0xff]
    %v2055 = vld [vmem:[#allocation7 + $0x1a8] sm:$0xff]
    %v2056 = vld [vmem:[#allocation7 + $0x1b0] sm:$0xff]
    %v2057 = vld [vmem:[#allocation7 + $0x1b8] sm:$0xff]
    %v2058 = vld [vmem:[#allocation7 + $0x1c0] sm:$0xff]
    %v2059 = vld [vmem:[#allocation7 + $0x1c8] sm:$0xff]
    %v2060 = vld [vmem:[#allocation7 + $0x1d0] sm:$0xff]
    %v2061 = vld [vmem:[#allocation7 + $0x1d8] sm:$0xff]
    %v2062 = vld [vmem:[#allocation7 + $0x1e0] sm:$0xff]
    %v2063 = vld [vmem:[#allocation7 + $0x1e8] sm:$0xff]
    %v2064 = vld [vmem:[#allocation7 + $0x1f0] sm:$0xff]
    %v2065 = vld [vmem:[#allocation7 + $0x1f8] sm:$0xff]
    %v2066 = vld [vmem:[#allocation7 + $0x200] sm:$0xff]
    %v2067 = vld [vmem:[#allocation7 + $0x208] sm:$0xff]
    %v2068 = vld [vmem:[#allocation7 + $0x210] sm:$0xff]
    %v2069 = vld [vmem:[#allocation7 + $0x218] sm:$0xff]
    %v2070 = vld [vmem:[#allocation7 + $0x220] sm:$0xff]
    %v2071 = vld [vmem:[#allocation7 + $0x228] sm:$0xff]
    %v2072 = vld [vmem:[#allocation7 + $0x230] sm:$0xff]
    %v2073 = vld [vmem:[#allocation7 + $0x238] sm:$0xff]
    %v2074 = vld [vmem:[#allocation7 + $0x240] sm:$0xff]
    %v2075 = vld [vmem:[#allocation7 + $0x248] sm:$0xff]
    %v2076 = vld [vmem:[#allocation7 + $0x250] sm:$0xff]
    %v2077 = vld [vmem:[#allocation7 + $0x258] sm:$0xff]
    %v2078 = vld [vmem:[#allocation7 + $0x260] sm:$0xff]
    %v2079 = vld [vmem:[#allocation7 + $0x268] sm:$0xff]
    %v2080 = vld [vmem:[#allocation7 + $0x270] sm:$0xff]
    %v2081 = vld [vmem:[#allocation7 + $0x278] sm:$0xff]
    %v2082 = vld [vmem:[#allocation7 + $0x280] sm:$0xff]
    %v2083 = vld [vmem:[#allocation7 + $0x288] sm:$0xff]
    %v2084 = vld [vmem:[#allocation7 + $0x290] sm:$0xff]
    %v2085 = vld [vmem:[#allocation7 + $0x298] sm:$0xff]
    %v2086 = vld [vmem:[#allocation7 + $0x2a0] sm:$0xff]
    %v2087 = vld [vmem:[#allocation7 + $0x2a8] sm:$0xff]
    %v2088 = vld [vmem:[#allocation7 + $0x2b0] sm:$0xff]
    %v2089 = vld [vmem:[#allocation7 + $0x2b8] sm:$0xff]
    %v2090 = vld [vmem:[#allocation7 + $0x2c0] sm:$0xff]
    %v2091 = vld [vmem:[#allocation7 + $0x2c8] sm:$0xff]
    %v2092 = vld [vmem:[#allocation7 + $0x2d0] sm:$0xff]
    %v2093 = vld [vmem:[#allocation7 + $0x2d8] sm:$0xff]
    %v2094 = vld [vmem:[#allocation7 + $0x2e0] sm:$0xff]
    %v2095 = vld [vmem:[#allocation7 + $0x2e8] sm:$0xff]
    %v2096 = vld [vmem:[#allocation7 + $0x2f0] sm:$0xff]
    %v2097 = vld [vmem:[#allocation7 + $0x2f8] sm:$0xff]
    %v2098 = vld [vmem:[#allocation7 + $0x300] sm:$0xff]
    %v2099 = vld [vmem:[#allocation7 + $0x308] sm:$0xff]
    %v2100 = vld [vmem:[#allocation7 + $0x310] sm:$0xff]
    %v2101 = vld [vmem:[#allocation7 + $0x318] sm:$0xff]
    %v2102 = vld [vmem:[#allocation7 + $0x320] sm:$0xff]
    %v2103 = vld [vmem:[#allocation7 + $0x328] sm:$0xff]
    %v2104 = vld [vmem:[#allocation7 + $0x330] sm:$0xff]
    %v2105 = vld [vmem:[#allocation7 + $0x338] sm:$0xff]
    %v2106 = vld [vmem:[#allocation7 + $0x340] sm:$0xff]
    %v2107 = vld [vmem:[#allocation7 + $0x348] sm:$0xff]
    %v2108 = vld [vmem:[#allocation7 + $0x350] sm:$0xff]
    %v2109 = vld [vmem:[#allocation7 + $0x358] sm:$0xff]
    %v2110 = vld [vmem:[#allocation7 + $0x360] sm:$0xff]
    %v2111 = vld [vmem:[#allocation7 + $0x368] sm:$0xff]
    %v2112 = vld [vmem:[#allocation7 + $0x370] sm:$0xff]
    %v2113 = vld [vmem:[#allocation7 + $0x378] sm:$0xff]
    %v2114 = vld [vmem:[#allocation7 + $0x380] sm:$0xff]
    %v2115 = vld [vmem:[#allocation7 + $0x388] sm:$0xff]
    %v2116 = vld [vmem:[#allocation7 + $0x390] sm:$0xff]
    %v2117 = vld [vmem:[#allocation7 + $0x398] sm:$0xff]
    %v2118 = vld [vmem:[#allocation7 + $0x3a0] sm:$0xff]
    %v2119 = vld [vmem:[#allocation7 + $0x3a8] sm:$0xff]
    %v2120 = vld [vmem:[#allocation7 + $0x3b0] sm:$0xff]
    %v2121 = vld [vmem:[#allocation7 + $0x3b8] sm:$0xff]
    %v2122 = vld [vmem:[#allocation7 + $0x3c0] sm:$0xff]
    %v2123 = vld [vmem:[#allocation7 + $0x3c8] sm:$0xff]
    %v2124 = vld [vmem:[#allocation7 + $0x3d0] sm:$0xff]
    %v2125 = vld [vmem:[#allocation7 + $0x3d8] sm:$0xff]
    %v2126 = vld [vmem:[#allocation7 + $0x3e0] sm:$0xff]
    %v2127 = vld [vmem:[#allocation7 + $0x3e8] sm:$0xff]
    %v2128 = vld [vmem:[#allocation7 + $0x3f0] sm:$0xff]
    %v2129 = vld [vmem:[#allocation7 + $0x3f8] sm:$0xff]
    %v2258 = vunpack.c.l.b16 %v2002
    %v2259 = vunpack.c.h.b16 %v2002
    %v2260 = vunpack.c.l.b16 %v2003
    %v2261 = vunpack.c.h.b16 %v2003
    %v2262 = vunpack.c.l.b16 %v2004
    %v2263 = vunpack.c.h.b16 %v2004
    %v2264 = vunpack.c.l.b16 %v2005
    %v2265 = vunpack.c.h.b16 %v2005
    %v2266 = vunpack.c.l.b16 %v2006
    %v2267 = vunpack.c.h.b16 %v2006
    %v2268 = vunpack.c.l.b16 %v2007
    %v2269 = vunpack.c.h.b16 %v2007
    %v2270 = vunpack.c.l.b16 %v2008
    %v2271 = vunpack.c.h.b16 %v2008
    %v2272 = vunpack.c.l.b16 %v2009
    %v2273 = vunpack.c.h.b16 %v2009
    %v2274 = vunpack.c.l.b16 %v2010
    %v2275 = vunpack.c.h.b16 %v2010
    %v2276 = vunpack.c.l.b16 %v2011
    %v2277 = vunpack.c.h.b16 %v2011
    %v2278 = vunpack.c.l.b16 %v2012
    %v2279 = vunpack.c.h.b16 %v2012
    %v2280 = vunpack.c.l.b16 %v2013
    %v2281 = vunpack.c.h.b16 %v2013
    %v2282 = vunpack.c.l.b16 %v2014
    %v2283 = vunpack.c.h.b16 %v2014
    %v2284 = vunpack.c.l.b16 %v2015
    %v2285 = vunpack.c.h.b16 %v2015
    %v2286 = vunpack.c.l.b16 %v2016
    %v2287 = vunpack.c.h.b16 %v2016
    %v2288 = vunpack.c.l.b16 %v2017
    %v2289 = vunpack.c.h.b16 %v2017
    %v2290 = vunpack.c.l.b16 %v2018
    %v2291 = vunpack.c.h.b16 %v2018
    %v2292 = vunpack.c.l.b16 %v2019
    %v2293 = vunpack.c.h.b16 %v2019
    %v2294 = vunpack.c.l.b16 %v2020
    %v2295 = vunpack.c.h.b16 %v2020
    %v2296 = vunpack.c.l.b16 %v2021
    %v2297 = vunpack.c.h.b16 %v2021
    %v2298 = vunpack.c.l.b16 %v2022
    %v2299 = vunpack.c.h.b16 %v2022
    %v2300 = vunpack.c.l.b16 %v2023
    %v2301 = vunpack.c.h.b16 %v2023
    %v2302 = vunpack.c.l.b16 %v2024
    %v2303 = vunpack.c.h.b16 %v2024
    %v2304 = vunpack.c.l.b16 %v2025
    %v2305 = vunpack.c.h.b16 %v2025
    %v2306 = vunpack.c.l.b16 %v2026
    %v2307 = vunpack.c.h.b16 %v2026
    %v2308 = vunpack.c.l.b16 %v2027
    %v2309 = vunpack.c.h.b16 %v2027
    %v2310 = vunpack.c.l.b16 %v2028
    %v2311 = vunpack.c.h.b16 %v2028
    %v2312 = vunpack.c.l.b16 %v2029
    %v2313 = vunpack.c.h.b16 %v2029
    %v2314 = vunpack.c.l.b16 %v2030
    %v2315 = vunpack.c.h.b16 %v2030
    %v2316 = vunpack.c.l.b16 %v2031
    %v2317 = vunpack.c.h.b16 %v2031
    %v2318 = vunpack.c.l.b16 %v2032
    %v2319 = vunpack.c.h.b16 %v2032
    %v2320 = vunpack.c.l.b16 %v2033
    %v2321 = vunpack.c.h.b16 %v2033
    %v2322 = vunpack.c.l.b16 %v2034
    %v2323 = vunpack.c.h.b16 %v2034
    %v2324 = vunpack.c.l.b16 %v2035
    %v2325 = vunpack.c.h.b16 %v2035
    %v2326 = vunpack.c.l.b16 %v2036
    %v2327 = vunpack.c.h.b16 %v2036
    %v2328 = vunpack.c.l.b16 %v2037
    %v2329 = vunpack.c.h.b16 %v2037
    %v2330 = vunpack.c.l.b16 %v2038
    %v2331 = vunpack.c.h.b16 %v2038
    %v2332 = vunpack.c.l.b16 %v2039
    %v2333 = vunpack.c.h.b16 %v2039
    %v2334 = vunpack.c.l.b16 %v2040
    %v2335 = vunpack.c.h.b16 %v2040
    %v2336 = vunpack.c.l.b16 %v2041
    %v2337 = vunpack.c.h.b16 %v2041
    %v2338 = vunpack.c.l.b16 %v2042
    %v2339 = vunpack.c.h.b16 %v2042
    %v2340 = vunpack.c.l.b16 %v2043
    %v2341 = vunpack.c.h.b16 %v2043
    %v2342 = vunpack.c.l.b16 %v2044
    %v2343 = vunpack.c.h.b16 %v2044
    %v2344 = vunpack.c.l.b16 %v2045
    %v2345 = vunpack.c.h.b16 %v2045
    %v2346 = vunpack.c.l.b16 %v2046
    %v2347 = vunpack.c.h.b16 %v2046
    %v2348 = vunpack.c.l.b16 %v2047
    %v2349 = vunpack.c.h.b16 %v2047
    %v2350 = vunpack.c.l.b16 %v2048
    %v2351 = vunpack.c.h.b16 %v2048
    %v2352 = vunpack.c.l.b16 %v2049
    %v2353 = vunpack.c.h.b16 %v2049
    %v2354 = vunpack.c.l.b16 %v2050
    %v2355 = vunpack.c.h.b16 %v2050
    %v2356 = vunpack.c.l.b16 %v2051
    %v2357 = vunpack.c.h.b16 %v2051
    %v2358 = vunpack.c.l.b16 %v2052
    %v2359 = vunpack.c.h.b16 %v2052
    %v2360 = vunpack.c.l.b16 %v2053
    %v2361 = vunpack.c.h.b16 %v2053
    %v2362 = vunpack.c.l.b16 %v2054
    %v2363 = vunpack.c.h.b16 %v2054
    %v2364 = vunpack.c.l.b16 %v2055
    %v2365 = vunpack.c.h.b16 %v2055
    %v2366 = vunpack.c.l.b16 %v2056
    %v2367 = vunpack.c.h.b16 %v2056
    %v2368 = vunpack.c.l.b16 %v2057
    %v2369 = vunpack.c.h.b16 %v2057
    %v2370 = vunpack.c.l.b16 %v2058
    %v2371 = vunpack.c.h.b16 %v2058
    %v2372 = vunpack.c.l.b16 %v2059
    %v2373 = vunpack.c.h.b16 %v2059
    %v2374 = vunpack.c.l.b16 %v2060
    %v2375 = vunpack.c.h.b16 %v2060
    %v2376 = vunpack.c.l.b16 %v2061
    %v2377 = vunpack.c.h.b16 %v2061
    %v2378 = vunpack.c.l.b16 %v2062
    %v2379 = vunpack.c.h.b16 %v2062
    %v2380 = vunpack.c.l.b16 %v2063
    %v2381 = vunpack.c.h.b16 %v2063
    %v2382 = vunpack.c.l.b16 %v2064
    %v2383 = vunpack.c.h.b16 %v2064
    %v2384 = vunpack.c.l.b16 %v2065
    %v2385 = vunpack.c.h.b16 %v2065
    %v2386 = vunpack.c.l.b16 %v2066
    %v2387 = vunpack.c.h.b16 %v2066
    %v2388 = vunpack.c.l.b16 %v2067
    %v2389 = vunpack.c.h.b16 %v2067
    %v2390 = vunpack.c.l.b16 %v2068
    %v2391 = vunpack.c.h.b16 %v2068
    %v2392 = vunpack.c.l.b16 %v2069
    %v2393 = vunpack.c.h.b16 %v2069
    %v2394 = vunpack.c.l.b16 %v2070
    %v2395 = vunpack.c.h.b16 %v2070
    %v2396 = vunpack.c.l.b16 %v2071
    %v2397 = vunpack.c.h.b16 %v2071
    %v2398 = vunpack.c.l.b16 %v2072
    %v2399 = vunpack.c.h.b16 %v2072
    %v2400 = vunpack.c.l.b16 %v2073
    %v2401 = vunpack.c.h.b16 %v2073
    %v2402 = vunpack.c.l.b16 %v2074
    %v2403 = vunpack.c.h.b16 %v2074
    %v2404 = vunpack.c.l.b16 %v2075
    %v2405 = vunpack.c.h.b16 %v2075
    %v2406 = vunpack.c.l.b16 %v2076
    %v2407 = vunpack.c.h.b16 %v2076
    %v2408 = vunpack.c.l.b16 %v2077
    %v2409 = vunpack.c.h.b16 %v2077
    %v2410 = vunpack.c.l.b16 %v2078
    %v2411 = vunpack.c.h.b16 %v2078
    %v2412 = vunpack.c.l.b16 %v2079
    %v2413 = vunpack.c.h.b16 %v2079
    %v2414 = vunpack.c.l.b16 %v2080
    %v2415 = vunpack.c.h.b16 %v2080
    %v2416 = vunpack.c.l.b16 %v2081
    %v2417 = vunpack.c.h.b16 %v2081
    %v2418 = vunpack.c.l.b16 %v2082
    %v2419 = vunpack.c.h.b16 %v2082
    %v2420 = vunpack.c.l.b16 %v2083
    %v2421 = vunpack.c.h.b16 %v2083
    %v2422 = vunpack.c.l.b16 %v2084
    %v2423 = vunpack.c.h.b16 %v2084
    %v2424 = vunpack.c.l.b16 %v2085
    %v2425 = vunpack.c.h.b16 %v2085
    %v2426 = vunpack.c.l.b16 %v2086
    %v2427 = vunpack.c.h.b16 %v2086
    %v2428 = vunpack.c.l.b16 %v2087
    %v2429 = vunpack.c.h.b16 %v2087
    %v2430 = vunpack.c.l.b16 %v2088
    %v2431 = vunpack.c.h.b16 %v2088
    %v2432 = vunpack.c.l.b16 %v2089
    %v2433 = vunpack.c.h.b16 %v2089
    %v2434 = vunpack.c.l.b16 %v2090
    %v2435 = vunpack.c.h.b16 %v2090
    %v2436 = vunpack.c.l.b16 %v2091
    %v2437 = vunpack.c.h.b16 %v2091
    %v2438 = vunpack.c.l.b16 %v2092
    %v2439 = vunpack.c.h.b16 %v2092
    %v2440 = vunpack.c.l.b16 %v2093
    %v2441 = vunpack.c.h.b16 %v2093
    %v2442 = vunpack.c.l.b16 %v2094
    %v2443 = vunpack.c.h.b16 %v2094
    %v2444 = vunpack.c.l.b16 %v2095
    %v2445 = vunpack.c.h.b16 %v2095
    %v2446 = vunpack.c.l.b16 %v2096
    %v2447 = vunpack.c.h.b16 %v2096
    %v2448 = vunpack.c.l.b16 %v2097
    %v2449 = vunpack.c.h.b16 %v2097
    %v2450 = vunpack.c.l.b16 %v2098
    %v2451 = vunpack.c.h.b16 %v2098
    %v2452 = vunpack.c.l.b16 %v2099
    %v2453 = vunpack.c.h.b16 %v2099
    %v2454 = vunpack.c.l.b16 %v2100
    %v2455 = vunpack.c.h.b16 %v2100
    %v2456 = vunpack.c.l.b16 %v2101
    %v2457 = vunpack.c.h.b16 %v2101
    %v2458 = vunpack.c.l.b16 %v2102
    %v2459 = vunpack.c.h.b16 %v2102
    %v2460 = vunpack.c.l.b16 %v2103
    %v2461 = vunpack.c.h.b16 %v2103
    %v2462 = vunpack.c.l.b16 %v2104
    %v2463 = vunpack.c.h.b16 %v2104
    %v2464 = vunpack.c.l.b16 %v2105
    %v2465 = vunpack.c.h.b16 %v2105
    %v2466 = vunpack.c.l.b16 %v2106
    %v2467 = vunpack.c.h.b16 %v2106
    %v2468 = vunpack.c.l.b16 %v2107
    %v2469 = vunpack.c.h.b16 %v2107
    %v2470 = vunpack.c.l.b16 %v2108
    %v2471 = vunpack.c.h.b16 %v2108
    %v2472 = vunpack.c.l.b16 %v2109
    %v2473 = vunpack.c.h.b16 %v2109
    %v2474 = vunpack.c.l.b16 %v2110
    %v2475 = vunpack.c.h.b16 %v2110
    %v2476 = vunpack.c.l.b16 %v2111
    %v2477 = vunpack.c.h.b16 %v2111
    %v2478 = vunpack.c.l.b16 %v2112
    %v2479 = vunpack.c.h.b16 %v2112
    %v2480 = vunpack.c.l.b16 %v2113
    %v2481 = vunpack.c.h.b16 %v2113
    %v2482 = vunpack.c.l.b16 %v2114
    %v2483 = vunpack.c.h.b16 %v2114
    %v2484 = vunpack.c.l.b16 %v2115
    %v2485 = vunpack.c.h.b16 %v2115
    %v2486 = vunpack.c.l.b16 %v2116
    %v2487 = vunpack.c.h.b16 %v2116
    %v2488 = vunpack.c.l.b16 %v2117
    %v2489 = vunpack.c.h.b16 %v2117
    %v2490 = vunpack.c.l.b16 %v2118
    %v2491 = vunpack.c.h.b16 %v2118
    %v2492 = vunpack.c.l.b16 %v2119
    %v2493 = vunpack.c.h.b16 %v2119
    %v2494 = vunpack.c.l.b16 %v2120
    %v2495 = vunpack.c.h.b16 %v2120
    %v2496 = vunpack.c.l.b16 %v2121
    %v2497 = vunpack.c.h.b16 %v2121
    %v2498 = vunpack.c.l.b16 %v2122
    %v2499 = vunpack.c.h.b16 %v2122
    %v2500 = vunpack.c.l.b16 %v2123
    %v2501 = vunpack.c.h.b16 %v2123
    %v2502 = vunpack.c.l.b16 %v2124
    %v2503 = vunpack.c.h.b16 %v2124
    %v2504 = vunpack.c.l.b16 %v2125
    %v2505 = vunpack.c.h.b16 %v2125
    %v2506 = vunpack.c.l.b16 %v2126
    %v2507 = vunpack.c.h.b16 %v2126
    %v2508 = vunpack.c.l.b16 %v2127
    %v2509 = vunpack.c.h.b16 %v2127
    %v2510 = vunpack.c.l.b16 %v2128
    %v2511 = vunpack.c.h.b16 %v2128
    %v2512 = vunpack.c.l.b16 %v2129
    %v2513 = vunpack.c.h.b16 %v2129
    %v2514 = vpack.c.b16 %v2262, %v2258
    %v2515 = vpack.c.b16 %v2263, %v2259
    %v2516 = vpack.c.b16 %v2264, %v2260
    %v2517 = vpack.c.b16 %v2265, %v2261
    %v2518 = vpack.c.b16 %v2270, %v2266
    %v2519 = vpack.c.b16 %v2271, %v2267
    %v2520 = vpack.c.b16 %v2272, %v2268
    %v2521 = vpack.c.b16 %v2273, %v2269
    %v2522 = vpack.c.b16 %v2278, %v2274
    %v2523 = vpack.c.b16 %v2279, %v2275
    %v2524 = vpack.c.b16 %v2280, %v2276
    %v2525 = vpack.c.b16 %v2281, %v2277
    %v2526 = vpack.c.b16 %v2286, %v2282
    %v2527 = vpack.c.b16 %v2287, %v2283
    %v2528 = vpack.c.b16 %v2288, %v2284
    %v2529 = vpack.c.b16 %v2289, %v2285
    %v2530 = vpack.c.b16 %v2294, %v2290
    %v2531 = vpack.c.b16 %v2295, %v2291
    %v2532 = vpack.c.b16 %v2296, %v2292
    %v2533 = vpack.c.b16 %v2297, %v2293
    %v2534 = vpack.c.b16 %v2302, %v2298
    %v2535 = vpack.c.b16 %v2303, %v2299
    %v2536 = vpack.c.b16 %v2304, %v2300
    %v2537 = vpack.c.b16 %v2305, %v2301
    %v2538 = vpack.c.b16 %v2310, %v2306
    %v2539 = vpack.c.b16 %v2311, %v2307
    %v2540 = vpack.c.b16 %v2312, %v2308
    %v2541 = vpack.c.b16 %v2313, %v2309
    %v2542 = vpack.c.b16 %v2318, %v2314
    %v2543 = vpack.c.b16 %v2319, %v2315
    %v2544 = vpack.c.b16 %v2320, %v2316
    %v2545 = vpack.c.b16 %v2321, %v2317
    %v2546 = vpack.c.b16 %v2326, %v2322
    %v2547 = vpack.c.b16 %v2327, %v2323
    %v2548 = vpack.c.b16 %v2328, %v2324
    %v2549 = vpack.c.b16 %v2329, %v2325
    %v2550 = vpack.c.b16 %v2334, %v2330
    %v2551 = vpack.c.b16 %v2335, %v2331
    %v2552 = vpack.c.b16 %v2336, %v2332
    %v2553 = vpack.c.b16 %v2337, %v2333
    %v2554 = vpack.c.b16 %v2342, %v2338
    %v2555 = vpack.c.b16 %v2343, %v2339
    %v2556 = vpack.c.b16 %v2344, %v2340
    %v2557 = vpack.c.b16 %v2345, %v2341
    %v2558 = vpack.c.b16 %v2350, %v2346
    %v2559 = vpack.c.b16 %v2351, %v2347
    %v2560 = vpack.c.b16 %v2352, %v2348
    %v2561 = vpack.c.b16 %v2353, %v2349
    %v2562 = vpack.c.b16 %v2358, %v2354
    %v2563 = vpack.c.b16 %v2359, %v2355
    %v2564 = vpack.c.b16 %v2360, %v2356
    %v2565 = vpack.c.b16 %v2361, %v2357
    %v2566 = vpack.c.b16 %v2366, %v2362
    %v2567 = vpack.c.b16 %v2367, %v2363
    %v2568 = vpack.c.b16 %v2368, %v2364
    %v2569 = vpack.c.b16 %v2369, %v2365
    %v2570 = vpack.c.b16 %v2374, %v2370
    %v2571 = vpack.c.b16 %v2375, %v2371
    %v2572 = vpack.c.b16 %v2376, %v2372
    %v2573 = vpack.c.b16 %v2377, %v2373
    %v2574 = vpack.c.b16 %v2382, %v2378
    %v2575 = vpack.c.b16 %v2383, %v2379
    %v2576 = vpack.c.b16 %v2384, %v2380
    %v2577 = vpack.c.b16 %v2385, %v2381
    %v2578 = vpack.c.b16 %v2390, %v2386
    %v2579 = vpack.c.b16 %v2391, %v2387
    %v2580 = vpack.c.b16 %v2392, %v2388
    %v2581 = vpack.c.b16 %v2393, %v2389
    %v2582 = vpack.c.b16 %v2398, %v2394
    %v2583 = vpack.c.b16 %v2399, %v2395
    %v2584 = vpack.c.b16 %v2400, %v2396
    %v2585 = vpack.c.b16 %v2401, %v2397
    %v2586 = vpack.c.b16 %v2406, %v2402
    %v2587 = vpack.c.b16 %v2407, %v2403
    %v2588 = vpack.c.b16 %v2408, %v2404
    %v2589 = vpack.c.b16 %v2409, %v2405
    %v2590 = vpack.c.b16 %v2414, %v2410
    %v2591 = vpack.c.b16 %v2415, %v2411
    %v2592 = vpack.c.b16 %v2416, %v2412
    %v2593 = vpack.c.b16 %v2417, %v2413
    %v2594 = vpack.c.b16 %v2422, %v2418
    %v2595 = vpack.c.b16 %v2423, %v2419
    %v2596 = vpack.c.b16 %v2424, %v2420
    %v2597 = vpack.c.b16 %v2425, %v2421
    %v2598 = vpack.c.b16 %v2430, %v2426
    %v2599 = vpack.c.b16 %v2431, %v2427
    %v2600 = vpack.c.b16 %v2432, %v2428
    %v2601 = vpack.c.b16 %v2433, %v2429
    %v2602 = vpack.c.b16 %v2438, %v2434
    %v2603 = vpack.c.b16 %v2439, %v2435
    %v2604 = vpack.c.b16 %v2440, %v2436
    %v2605 = vpack.c.b16 %v2441, %v2437
    %v2606 = vpack.c.b16 %v2446, %v2442
    %v2607 = vpack.c.b16 %v2447, %v2443
    %v2608 = vpack.c.b16 %v2448, %v2444
    %v2609 = vpack.c.b16 %v2449, %v2445
    %v2610 = vpack.c.b16 %v2454, %v2450
    %v2611 = vpack.c.b16 %v2455, %v2451
    %v2612 = vpack.c.b16 %v2456, %v2452
    %v2613 = vpack.c.b16 %v2457, %v2453
    %v2614 = vpack.c.b16 %v2462, %v2458
    %v2615 = vpack.c.b16 %v2463, %v2459
    %v2616 = vpack.c.b16 %v2464, %v2460
    %v2617 = vpack.c.b16 %v2465, %v2461
    %v2618 = vpack.c.b16 %v2470, %v2466
    %v2619 = vpack.c.b16 %v2471, %v2467
    %v2620 = vpack.c.b16 %v2472, %v2468
    %v2621 = vpack.c.b16 %v2473, %v2469
    %v2622 = vpack.c.b16 %v2478, %v2474
    %v2623 = vpack.c.b16 %v2479, %v2475
    %v2624 = vpack.c.b16 %v2480, %v2476
    %v2625 = vpack.c.b16 %v2481, %v2477
    %v2626 = vpack.c.b16 %v2486, %v2482
    %v2627 = vpack.c.b16 %v2487, %v2483
    %v2628 = vpack.c.b16 %v2488, %v2484
    %v2629 = vpack.c.b16 %v2489, %v2485
    %v2630 = vpack.c.b16 %v2494, %v2490
    %v2631 = vpack.c.b16 %v2495, %v2491
    %v2632 = vpack.c.b16 %v2496, %v2492
    %v2633 = vpack.c.b16 %v2497, %v2493
    %v2634 = vpack.c.b16 %v2502, %v2498
    %v2635 = vpack.c.b16 %v2503, %v2499
    %v2636 = vpack.c.b16 %v2504, %v2500
    %v2637 = vpack.c.b16 %v2505, %v2501
    %v2638 = vpack.c.b16 %v2510, %v2506
    %v2639 = vpack.c.b16 %v2511, %v2507
    %v2640 = vpack.c.b16 %v2512, %v2508
    %v2641 = vpack.c.b16 %v2513, %v2509
    %2770 = vmatprep.subr.bf16.mxu0 %v2515
    %2771 = vmatpush1.bf16.msra.mxu0 %v2514
    %2772 = vmatprep.subr.bf16.mxu0 %v2519
    %2773 = vmatpush1.bf16.msra.mxu0 %v2518
    %2774 = vmatprep.subr.bf16.mxu0 %v2523
    %2775 = vmatpush1.bf16.msra.mxu0 %v2522
    %2776 = vmatprep.subr.bf16.mxu0 %v2527
    %2777 = vmatpush1.bf16.msra.mxu0 %v2526
    %2778 = vmatprep.subr.bf16.mxu0 %v2531
    %2779 = vmatpush1.bf16.msra.mxu0 %v2530
    %2780 = vmatprep.subr.bf16.mxu0 %v2535
    %2781 = vmatpush1.bf16.msra.mxu0 %v2534
    %2782 = vmatprep.subr.bf16.mxu0 %v2539
    %2783 = vmatpush1.bf16.msra.mxu0 %v2538
    %2784 = vmatprep.subr.bf16.mxu0 %v2543
    %2785 = vmatpush1.bf16.msra.mxu0 %v2542
    %2786 = vmatprep.subr.bf16.mxu0 %v2547
    %2787 = vmatpush1.bf16.msra.mxu0 %v2546
    %2788 = vmatprep.subr.bf16.mxu0 %v2551
    %2789 = vmatpush1.bf16.msra.mxu0 %v2550
    %2790 = vmatprep.subr.bf16.mxu0 %v2555
    %2791 = vmatpush1.bf16.msra.mxu0 %v2554
    %2792 = vmatprep.subr.bf16.mxu0 %v2559
    %2793 = vmatpush1.bf16.msra.mxu0 %v2558
    %2794 = vmatprep.subr.bf16.mxu0 %v2563
    %2795 = vmatpush1.bf16.msra.mxu0 %v2562
    %2796 = vmatprep.subr.bf16.mxu0 %v2567
    %2797 = vmatpush1.bf16.msra.mxu0 %v2566
    %2798 = vmatprep.subr.bf16.mxu0 %v2571
    %2799 = vmatpush1.bf16.msra.mxu0 %v2570
    %2800 = vmatprep.subr.bf16.mxu0 %v2575
    %2801 = vmatpush1.bf16.msra.mxu0 %v2574
    %2802 = vmatprep.mubr.bf16.mxu0 %v1999
    %2803 = vmatmul.mubr.bf16.gmra.mrb[0].mxu0 %v1998
    %v2804 = vpop.f32.mrb[0].mxu0
    %v2805 = vadd.f32 0.0, %v2804
    %v2806 = vpop.f32.mrb[0].mxu0
    %v2807 = vadd.f32 0.0, %v2806
    %v2808 = vpop.f32.mrb[0].mxu0
    %v2809 = vpop.f32.mrb[0].mxu0
    %2810 = vdwg.mxu0
    %2811 = vmatprep.subr.bf16.mxu0 %v2579
    %2812 = vmatpush1.bf16.msra.mxu0 %v2578
    %2813 = vmatprep.subr.bf16.mxu0 %v2583
    %2814 = vmatpush1.bf16.msra.mxu0 %v2582
    %2815 = vmatprep.subr.bf16.mxu0 %v2587
    %2816 = vmatpush1.bf16.msra.mxu0 %v2586
    %2817 = vmatprep.subr.bf16.mxu0 %v2591
    %2818 = vmatpush1.bf16.msra.mxu0 %v2590
    %2819 = vmatprep.subr.bf16.mxu0 %v2595
    %2820 = vmatpush1.bf16.msra.mxu0 %v2594
    %2821 = vmatprep.subr.bf16.mxu0 %v2599
    %2822 = vmatpush1.bf16.msra.mxu0 %v2598
    %2823 = vmatprep.subr.bf16.mxu0 %v2603
    %2824 = vmatpush1.bf16.msra.mxu0 %v2602
    %2825 = vmatprep.subr.bf16.mxu0 %v2607
    %2826 = vmatpush1.bf16.msra.mxu0 %v2606
    %2827 = vmatprep.subr.bf16.mxu0 %v2611
    %2828 = vmatpush1.bf16.msra.mxu0 %v2610
    %2829 = vmatprep.subr.bf16.mxu0 %v2615
    %2830 = vmatpush1.bf16.msra.mxu0 %v2614
    %2831 = vmatprep.subr.bf16.mxu0 %v2619
    %2832 = vmatpush1.bf16.msra.mxu0 %v2618
    %2833 = vmatprep.subr.bf16.mxu0 %v2623
    %2834 = vmatpush1.bf16.msra.mxu0 %v2622
    %2835 = vmatprep.subr.bf16.mxu0 %v2627
    %2836 = vmatpush1.bf16.msra.mxu0 %v2626
    %2837 = vmatprep.subr.bf16.mxu0 %v2631
    %2838 = vmatpush1.bf16.msra.mxu0 %v2630
    %2839 = vmatprep.subr.bf16.mxu0 %v2635
    %2840 = vmatpush1.bf16.msra.mxu0 %v2634
    %2841 = vmatprep.subr.bf16.mxu0 %v2639
    %2842 = vmatpush1.bf16.msra.mxu0 %v2638
    %2843 = vmatprep.mubr.bf16.mxu0 %v2001
    %2844 = vmatmul.mubr.bf16.gmra.mrb[0].mxu0 %v2000
    %v2845 = vpop.f32.mrb[0].mxu0
    %v2846 = vadd.f32 %v2805, %v2845
    %v2847 = vpop.f32.mrb[0].mxu0
    %v2848 = vadd.f32 %v2807, %v2847
    %v2849 = vpop.f32.mrb[0].mxu0
    %v2850 = vpop.f32.mrb[0].mxu0
    %2851 = vdwg.mxu0
    %2852 = vmatprep.subr.bf16.mxu0 %v2517
    %2853 = vmatpush1.bf16.msra.mxu0 %v2516
    %2854 = vmatprep.subr.bf16.mxu0 %v2521
    %2855 = vmatpush1.bf16.msra.mxu0 %v2520
    %2856 = vmatprep.subr.bf16.mxu0 %v2525
    %2857 = vmatpush1.bf16.msra.mxu0 %v2524
    %2858 = vmatprep.subr.bf16.mxu0 %v2529
    %2859 = vmatpush1.bf16.msra.mxu0 %v2528
    %2860 = vmatprep.subr.bf16.mxu0 %v2533
    %2861 = vmatpush1.bf16.msra.mxu0 %v2532
    %2862 = vmatprep.subr.bf16.mxu0 %v2537
    %2863 = vmatpush1.bf16.msra.mxu0 %v2536
    %2864 = vmatprep.subr.bf16.mxu0 %v2541
    %2865 = vmatpush1.bf16.msra.mxu0 %v2540
    %2866 = vmatprep.subr.bf16.mxu0 %v2545
    %2867 = vmatpush1.bf16.msra.mxu0 %v2544
    %2868 = vmatprep.subr.bf16.mxu0 %v2549
    %2869 = vmatpush1.bf16.msra.mxu0 %v2548
    %2870 = vmatprep.subr.bf16.mxu0 %v2553
    %2871 = vmatpush1.bf16.msra.mxu0 %v2552
    %2872 = vmatprep.subr.bf16.mxu0 %v2557
    %2873 = vmatpush1.bf16.msra.mxu0 %v2556
    %2874 = vmatprep.subr.bf16.mxu0 %v2561
    %2875 = vmatpush1.bf16.msra.mxu0 %v2560
    %2876 = vmatprep.subr.bf16.mxu0 %v2565
    %2877 = vmatpush1.bf16.msra.mxu0 %v2564
    %2878 = vmatprep.subr.bf16.mxu0 %v2569
    %2879 = vmatpush1.bf16.msra.mxu0 %v2568
    %2880 = vmatprep.subr.bf16.mxu0 %v2573
    %2881 = vmatpush1.bf16.msra.mxu0 %v2572
    %2882 = vmatprep.subr.bf16.mxu0 %v2577
    %2883 = vmatpush1.bf16.msra.mxu0 %v2576
    %2884 = vmatprep.mubr.bf16.mxu0 %v1999
    %2885 = vmatmul.mubr.bf16.gmra.mrb[0].mxu0 %v1998
    %v2886 = vpop.f32.mrb[0].mxu0
    %v2887 = vadd.f32 0.0, %v2886
    %v2888 = vpop.f32.mrb[0].mxu0
    %v2889 = vadd.f32 0.0, %v2888
    %v2890 = vpop.f32.mrb[0].mxu0
    %v2891 = vpop.f32.mrb[0].mxu0
    %2892 = vdwg.mxu0
    %2893 = vmatprep.subr.bf16.mxu0 %v2581
    %2894 = vmatpush1.bf16.msra.mxu0 %v2580
    %2895 = vmatprep.subr.bf16.mxu0 %v2585
    %2896 = vmatpush1.bf16.msra.mxu0 %v2584
    %2897 = vmatprep.subr.bf16.mxu0 %v2589
    %2898 = vmatpush1.bf16.msra.mxu0 %v2588
    %2899 = vmatprep.subr.bf16.mxu0 %v2593
    %2900 = vmatpush1.bf16.msra.mxu0 %v2592
    %2901 = vmatprep.subr.bf16.mxu0 %v2597
    %2902 = vmatpush1.bf16.msra.mxu0 %v2596
    %2903 = vmatprep.subr.bf16.mxu0 %v2601
    %2904 = vmatpush1.bf16.msra.mxu0 %v2600
    %2905 = vmatprep.subr.bf16.mxu0 %v2605
    %2906 = vmatpush1.bf16.msra.mxu0 %v2604
    %2907 = vmatprep.subr.bf16.mxu0 %v2609
    %2908 = vmatpush1.bf16.msra.mxu0 %v2608
    %2909 = vmatprep.subr.bf16.mxu0 %v2613
    %2910 = vmatpush1.bf16.msra.mxu0 %v2612
    %2911 = vmatprep.subr.bf16.mxu0 %v2617
    %2912 = vmatpush1.bf16.msra.mxu0 %v2616
    %2913 = vmatprep.subr.bf16.mxu0 %v2621
    %2914 = vmatpush1.bf16.msra.mxu0 %v2620
    %2915 = vmatprep.subr.bf16.mxu0 %v2625
    %2916 = vmatpush1.bf16.msra.mxu0 %v2624
    %2917 = vmatprep.subr.bf16.mxu0 %v2629
    %2918 = vmatpush1.bf16.msra.mxu0 %v2628
    %2919 = vmatprep.subr.bf16.mxu0 %v2633
    %2920 = vmatpush1.bf16.msra.mxu0 %v2632
    %2921 = vmatprep.subr.bf16.mxu0 %v2637
    %2922 = vmatpush1.bf16.msra.mxu0 %v2636
    %2923 = vmatprep.subr.bf16.mxu0 %v2641
    %2924 = vmatpush1.bf16.msra.mxu0 %v2640
    %2925 = vmatprep.mubr.bf16.mxu0 %v2001
    %2926 = vmatmul.mubr.bf16.gmra.mrb[0].mxu0 %v2000
    %v2927 = vpop.f32.mrb[0].mxu0
    %v2928 = vadd.f32 %v2887, %v2927
    %v2929 = vpop.f32.mrb[0].mxu0
    %v2930 = vadd.f32 %v2889, %v2929
    %v2931 = vpop.f32.mrb[0].mxu0
    %v2932 = vpop.f32.mrb[0].mxu0
    %2933 = vdwg.mxu0
    %v2934 = vmax.f32 %v2846, 0.0
    %v2935 = vmax.f32 %v2848, 0.0
    %v2936 = vmax.f32 %v2928, 0.0
    %v2937 = vmax.f32 %v2930, 0.0
    %v2938 = vpack.c.bf16 %v2934, %v2934
    %v2939 = vpack.c.bf16 %v2935, %v2935
    %v2940 = vpack.c.bf16 %v2936, %v2936
    %v2941 = vpack.c.bf16 %v2937, %v2937
    %v2942 = vld [vmem:[#allocation8] sm:$0xff]
    %v2943 = vld [vmem:[#allocation8 + $0x8] sm:$0xff]
    %v2944 = vld [vmem:[#allocation8 + $0x10] sm:$0xff]
    %v2945 = vld [vmem:[#allocation8 + $0x18] sm:$0xff]
    %v2946 = vld [vmem:[#allocation8 + $0x20] sm:$0xff]
    %v2947 = vld [vmem:[#allocation8 + $0x28] sm:$0xff]
    %v2948 = vld [vmem:[#allocation8 + $0x30] sm:$0xff]
    %v2949 = vld [vmem:[#allocation8 + $0x38] sm:$0xff]
    %v2950 = vld [vmem:[#allocation8 + $0x40] sm:$0xff]
    %v2951 = vld [vmem:[#allocation8 + $0x48] sm:$0xff]
    %v2952 = vld [vmem:[#allocation8 + $0x50] sm:$0xff]
    %v2953 = vld [vmem:[#allocation8 + $0x58] sm:$0xff]
    %v2954 = vld [vmem:[#allocation8 + $0x60] sm:$0xff]
    %v2955 = vld [vmem:[#allocation8 + $0x68] sm:$0xff]
    %v2956 = vld [vmem:[#allocation8 + $0x70] sm:$0xff]
    %v2957 = vld [vmem:[#allocation8 + $0x78] sm:$0xff]
    %v2958 = vld [vmem:[#allocation8 + $0x80] sm:$0xff]
    %v2959 = vld [vmem:[#allocation8 + $0x88] sm:$0xff]
    %v2960 = vld [vmem:[#allocation8 + $0x90] sm:$0xff]
    %v2961 = vld [vmem:[#allocation8 + $0x98] sm:$0xff]
    %v2962 = vld [vmem:[#allocation8 + $0xa0] sm:$0xff]
    %v2963 = vld [vmem:[#allocation8 + $0xa8] sm:$0xff]
    %v2964 = vld [vmem:[#allocation8 + $0xb0] sm:$0xff]
    %v2965 = vld [vmem:[#allocation8 + $0xb8] sm:$0xff]
    %v2966 = vld [vmem:[#allocation8 + $0xc0] sm:$0xff]
    %v2967 = vld [vmem:[#allocation8 + $0xc8] sm:$0xff]
    %v2968 = vld [vmem:[#allocation8 + $0xd0] sm:$0xff]
    %v2969 = vld [vmem:[#allocation8 + $0xd8] sm:$0xff]
    %v2970 = vld [vmem:[#allocation8 + $0xe0] sm:$0xff]
    %v2971 = vld [vmem:[#allocation8 + $0xe8] sm:$0xff]
    %v2972 = vld [vmem:[#allocation8 + $0xf0] sm:$0xff]
    %v2973 = vld [vmem:[#allocation8 + $0xf8] sm:$0xff]
    %v2974 = vld [vmem:[#allocation8 + $0x100] sm:$0xff]
    %v2975 = vld [vmem:[#allocation8 + $0x108] sm:$0xff]
    %v2976 = vld [vmem:[#allocation8 + $0x110] sm:$0xff]
    %v2977 = vld [vmem:[#allocation8 + $0x118] sm:$0xff]
    %v2978 = vld [vmem:[#allocation8 + $0x120] sm:$0xff]
    %v2979 = vld [vmem:[#allocation8 + $0x128] sm:$0xff]
    %v2980 = vld [vmem:[#allocation8 + $0x130] sm:$0xff]
    %v2981 = vld [vmem:[#allocation8 + $0x138] sm:$0xff]
    %v2982 = vld [vmem:[#allocation8 + $0x140] sm:$0xff]
    %v2983 = vld [vmem:[#allocation8 + $0x148] sm:$0xff]
    %v2984 = vld [vmem:[#allocation8 + $0x150] sm:$0xff]
    %v2985 = vld [vmem:[#allocation8 + $0x158] sm:$0xff]
    %v2986 = vld [vmem:[#allocation8 + $0x160] sm:$0xff]
    %v2987 = vld [vmem:[#allocation8 + $0x168] sm:$0xff]
    %v2988 = vld [vmem:[#allocation8 + $0x170] sm:$0xff]
    %v2989 = vld [vmem:[#allocation8 + $0x178] sm:$0xff]
    %v2990 = vld [vmem:[#allocation8 + $0x180] sm:$0xff]
    %v2991 = vld [vmem:[#allocation8 + $0x188] sm:$0xff]
    %v2992 = vld [vmem:[#allocation8 + $0x190] sm:$0xff]
    %v2993 = vld [vmem:[#allocation8 + $0x198] sm:$0xff]
    %v2994 = vld [vmem:[#allocation8 + $0x1a0] sm:$0xff]
    %v2995 = vld [vmem:[#allocation8 + $0x1a8] sm:$0xff]
    %v2996 = vld [vmem:[#allocation8 + $0x1b0] sm:$0xff]
    %v2997 = vld [vmem:[#allocation8 + $0x1b8] sm:$0xff]
    %v2998 = vld [vmem:[#allocation8 + $0x1c0] sm:$0xff]
    %v2999 = vld [vmem:[#allocation8 + $0x1c8] sm:$0xff]
    %v3000 = vld [vmem:[#allocation8 + $0x1d0] sm:$0xff]
    %v3001 = vld [vmem:[#allocation8 + $0x1d8] sm:$0xff]
    %v3002 = vld [vmem:[#allocation8 + $0x1e0] sm:$0xff]
    %v3003 = vld [vmem:[#allocation8 + $0x1e8] sm:$0xff]
    %v3004 = vld [vmem:[#allocation8 + $0x1f0] sm:$0xff]
    %v3005 = vld [vmem:[#allocation8 + $0x1f8] sm:$0xff]
    %v3006 = vld [vmem:[#allocation8 + $0x200] sm:$0xff]
    %v3007 = vld [vmem:[#allocation8 + $0x208] sm:$0xff]
    %v3008 = vld [vmem:[#allocation8 + $0x210] sm:$0xff]
    %v3009 = vld [vmem:[#allocation8 + $0x218] sm:$0xff]
    %v3010 = vld [vmem:[#allocation8 + $0x220] sm:$0xff]
    %v3011 = vld [vmem:[#allocation8 + $0x228] sm:$0xff]
    %v3012 = vld [vmem:[#allocation8 + $0x230] sm:$0xff]
    %v3013 = vld [vmem:[#allocation8 + $0x238] sm:$0xff]
    %v3014 = vld [vmem:[#allocation8 + $0x240] sm:$0xff]
    %v3015 = vld [vmem:[#allocation8 + $0x248] sm:$0xff]
    %v3016 = vld [vmem:[#allocation8 + $0x250] sm:$0xff]
    %v3017 = vld [vmem:[#allocation8 + $0x258] sm:$0xff]
    %v3018 = vld [vmem:[#allocation8 + $0x260] sm:$0xff]
    %v3019 = vld [vmem:[#allocation8 + $0x268] sm:$0xff]
    %v3020 = vld [vmem:[#allocation8 + $0x270] sm:$0xff]
    %v3021 = vld [vmem:[#allocation8 + $0x278] sm:$0xff]
    %v3022 = vld [vmem:[#allocation8 + $0x280] sm:$0xff]
    %v3023 = vld [vmem:[#allocation8 + $0x288] sm:$0xff]
    %v3024 = vld [vmem:[#allocation8 + $0x290] sm:$0xff]
    %v3025 = vld [vmem:[#allocation8 + $0x298] sm:$0xff]
    %v3026 = vld [vmem:[#allocation8 + $0x2a0] sm:$0xff]
    %v3027 = vld [vmem:[#allocation8 + $0x2a8] sm:$0xff]
    %v3028 = vld [vmem:[#allocation8 + $0x2b0] sm:$0xff]
    %v3029 = vld [vmem:[#allocation8 + $0x2b8] sm:$0xff]
    %v3030 = vld [vmem:[#allocation8 + $0x2c0] sm:$0xff]
    %v3031 = vld [vmem:[#allocation8 + $0x2c8] sm:$0xff]
    %v3032 = vld [vmem:[#allocation8 + $0x2d0] sm:$0xff]
    %v3033 = vld [vmem:[#allocation8 + $0x2d8] sm:$0xff]
    %v3034 = vld [vmem:[#allocation8 + $0x2e0] sm:$0xff]
    %v3035 = vld [vmem:[#allocation8 + $0x2e8] sm:$0xff]
    %v3036 = vld [vmem:[#allocation8 + $0x2f0] sm:$0xff]
    %v3037 = vld [vmem:[#allocation8 + $0x2f8] sm:$0xff]
    %v3038 = vld [vmem:[#allocation8 + $0x300] sm:$0xff]
    %v3039 = vld [vmem:[#allocation8 + $0x308] sm:$0xff]
    %v3040 = vld [vmem:[#allocation8 + $0x310] sm:$0xff]
    %v3041 = vld [vmem:[#allocation8 + $0x318] sm:$0xff]
    %v3042 = vld [vmem:[#allocation8 + $0x320] sm:$0xff]
    %v3043 = vld [vmem:[#allocation8 + $0x328] sm:$0xff]
    %v3044 = vld [vmem:[#allocation8 + $0x330] sm:$0xff]
    %v3045 = vld [vmem:[#allocation8 + $0x338] sm:$0xff]
    %v3046 = vld [vmem:[#allocation8 + $0x340] sm:$0xff]
    %v3047 = vld [vmem:[#allocation8 + $0x348] sm:$0xff]
    %v3048 = vld [vmem:[#allocation8 + $0x350] sm:$0xff]
    %v3049 = vld [vmem:[#allocation8 + $0x358] sm:$0xff]
    %v3050 = vld [vmem:[#allocation8 + $0x360] sm:$0xff]
    %v3051 = vld [vmem:[#allocation8 + $0x368] sm:$0xff]
    %v3052 = vld [vmem:[#allocation8 + $0x370] sm:$0xff]
    %v3053 = vld [vmem:[#allocation8 + $0x378] sm:$0xff]
    %v3054 = vld [vmem:[#allocation8 + $0x380] sm:$0xff]
    %v3055 = vld [vmem:[#allocation8 + $0x388] sm:$0xff]
    %v3056 = vld [vmem:[#allocation8 + $0x390] sm:$0xff]
    %v3057 = vld [vmem:[#allocation8 + $0x398] sm:$0xff]
    %v3058 = vld [vmem:[#allocation8 + $0x3a0] sm:$0xff]
    %v3059 = vld [vmem:[#allocation8 + $0x3a8] sm:$0xff]
    %v3060 = vld [vmem:[#allocation8 + $0x3b0] sm:$0xff]
    %v3061 = vld [vmem:[#allocation8 + $0x3b8] sm:$0xff]
    %v3062 = vld [vmem:[#allocation8 + $0x3c0] sm:$0xff]
    %v3063 = vld [vmem:[#allocation8 + $0x3c8] sm:$0xff]
    %v3064 = vld [vmem:[#allocation8 + $0x3d0] sm:$0xff]
    %v3065 = vld [vmem:[#allocation8 + $0x3d8] sm:$0xff]
    %v3066 = vld [vmem:[#allocation8 + $0x3e0] sm:$0xff]
    %v3067 = vld [vmem:[#allocation8 + $0x3e8] sm:$0xff]
    %v3068 = vld [vmem:[#allocation8 + $0x3f0] sm:$0xff]
    %v3069 = vld [vmem:[#allocation8 + $0x3f8] sm:$0xff]
    %v3070 = vld [vmem:[#allocation8 + $0x400] sm:$0xff]
    %v3071 = vld [vmem:[#allocation8 + $0x408] sm:$0xff]
    %v3072 = vld [vmem:[#allocation8 + $0x410] sm:$0xff]
    %v3073 = vld [vmem:[#allocation8 + $0x418] sm:$0xff]
    %v3074 = vld [vmem:[#allocation8 + $0x420] sm:$0xff]
    %v3075 = vld [vmem:[#allocation8 + $0x428] sm:$0xff]
    %v3076 = vld [vmem:[#allocation8 + $0x430] sm:$0xff]
    %v3077 = vld [vmem:[#allocation8 + $0x438] sm:$0xff]
    %v3078 = vld [vmem:[#allocation8 + $0x440] sm:$0xff]
    %v3079 = vld [vmem:[#allocation8 + $0x448] sm:$0xff]
    %v3080 = vld [vmem:[#allocation8 + $0x450] sm:$0xff]
    %v3081 = vld [vmem:[#allocation8 + $0x458] sm:$0xff]
    %v3082 = vld [vmem:[#allocation8 + $0x460] sm:$0xff]
    %v3083 = vld [vmem:[#allocation8 + $0x468] sm:$0xff]
    %v3084 = vld [vmem:[#allocation8 + $0x470] sm:$0xff]
    %v3085 = vld [vmem:[#allocation8 + $0x478] sm:$0xff]
    %v3086 = vld [vmem:[#allocation8 + $0x480] sm:$0xff]
    %v3087 = vld [vmem:[#allocation8 + $0x488] sm:$0xff]
    %v3088 = vld [vmem:[#allocation8 + $0x490] sm:$0xff]
    %v3089 = vld [vmem:[#allocation8 + $0x498] sm:$0xff]
    %v3090 = vld [vmem:[#allocation8 + $0x4a0] sm:$0xff]
    %v3091 = vld [vmem:[#allocation8 + $0x4a8] sm:$0xff]
    %v3092 = vld [vmem:[#allocation8 + $0x4b0] sm:$0xff]
    %v3093 = vld [vmem:[#allocation8 + $0x4b8] sm:$0xff]
    %v3094 = vld [vmem:[#allocation8 + $0x4c0] sm:$0xff]
    %v3095 = vld [vmem:[#allocation8 + $0x4c8] sm:$0xff]
    %v3096 = vld [vmem:[#allocation8 + $0x4d0] sm:$0xff]
    %v3097 = vld [vmem:[#allocation8 + $0x4d8] sm:$0xff]
    %v3098 = vld [vmem:[#allocation8 + $0x4e0] sm:$0xff]
    %v3099 = vld [vmem:[#allocation8 + $0x4e8] sm:$0xff]
    %v3100 = vld [vmem:[#allocation8 + $0x4f0] sm:$0xff]
    %v3101 = vld [vmem:[#allocation8 + $0x4f8] sm:$0xff]
    %v3102 = vld [vmem:[#allocation8 + $0x500] sm:$0xff]
    %v3103 = vld [vmem:[#allocation8 + $0x508] sm:$0xff]
    %v3104 = vld [vmem:[#allocation8 + $0x510] sm:$0xff]
    %v3105 = vld [vmem:[#allocation8 + $0x518] sm:$0xff]
    %v3106 = vld [vmem:[#allocation8 + $0x520] sm:$0xff]
    %v3107 = vld [vmem:[#allocation8 + $0x528] sm:$0xff]
    %v3108 = vld [vmem:[#allocation8 + $0x530] sm:$0xff]
    %v3109 = vld [vmem:[#allocation8 + $0x538] sm:$0xff]
    %v3110 = vld [vmem:[#allocation8 + $0x540] sm:$0xff]
    %v3111 = vld [vmem:[#allocation8 + $0x548] sm:$0xff]
    %v3112 = vld [vmem:[#allocation8 + $0x550] sm:$0xff]
    %v3113 = vld [vmem:[#allocation8 + $0x558] sm:$0xff]
    %v3114 = vld [vmem:[#allocation8 + $0x560] sm:$0xff]
    %v3115 = vld [vmem:[#allocation8 + $0x568] sm:$0xff]
    %v3116 = vld [vmem:[#allocation8 + $0x570] sm:$0xff]
    %v3117 = vld [vmem:[#allocation8 + $0x578] sm:$0xff]
    %v3118 = vld [vmem:[#allocation8 + $0x580] sm:$0xff]
    %v3119 = vld [vmem:[#allocation8 + $0x588] sm:$0xff]
    %v3120 = vld [vmem:[#allocation8 + $0x590] sm:$0xff]
    %v3121 = vld [vmem:[#allocation8 + $0x598] sm:$0xff]
    %v3122 = vld [vmem:[#allocation8 + $0x5a0] sm:$0xff]
    %v3123 = vld [vmem:[#allocation8 + $0x5a8] sm:$0xff]
    %v3124 = vld [vmem:[#allocation8 + $0x5b0] sm:$0xff]
    %v3125 = vld [vmem:[#allocation8 + $0x5b8] sm:$0xff]
    %v3126 = vld [vmem:[#allocation8 + $0x5c0] sm:$0xff]
    %v3127 = vld [vmem:[#allocation8 + $0x5c8] sm:$0xff]
    %v3128 = vld [vmem:[#allocation8 + $0x5d0] sm:$0xff]
    %v3129 = vld [vmem:[#allocation8 + $0x5d8] sm:$0xff]
    %v3130 = vld [vmem:[#allocation8 + $0x5e0] sm:$0xff]
    %v3131 = vld [vmem:[#allocation8 + $0x5e8] sm:$0xff]
    %v3132 = vld [vmem:[#allocation8 + $0x5f0] sm:$0xff]
    %v3133 = vld [vmem:[#allocation8 + $0x5f8] sm:$0xff]
    %v3134 = vld [vmem:[#allocation8 + $0x600] sm:$0xff]
    %v3135 = vld [vmem:[#allocation8 + $0x608] sm:$0xff]
    %v3136 = vld [vmem:[#allocation8 + $0x610] sm:$0xff]
    %v3137 = vld [vmem:[#allocation8 + $0x618] sm:$0xff]
    %v3138 = vld [vmem:[#allocation8 + $0x620] sm:$0xff]
    %v3139 = vld [vmem:[#allocation8 + $0x628] sm:$0xff]
    %v3140 = vld [vmem:[#allocation8 + $0x630] sm:$0xff]
    %v3141 = vld [vmem:[#allocation8 + $0x638] sm:$0xff]
    %v3142 = vld [vmem:[#allocation8 + $0x640] sm:$0xff]
    %v3143 = vld [vmem:[#allocation8 + $0x648] sm:$0xff]
    %v3144 = vld [vmem:[#allocation8 + $0x650] sm:$0xff]
    %v3145 = vld [vmem:[#allocation8 + $0x658] sm:$0xff]
    %v3146 = vld [vmem:[#allocation8 + $0x660] sm:$0xff]
    %v3147 = vld [vmem:[#allocation8 + $0x668] sm:$0xff]
    %v3148 = vld [vmem:[#allocation8 + $0x670] sm:$0xff]
    %v3149 = vld [vmem:[#allocation8 + $0x678] sm:$0xff]
    %v3150 = vld [vmem:[#allocation8 + $0x680] sm:$0xff]
    %v3151 = vld [vmem:[#allocation8 + $0x688] sm:$0xff]
    %v3152 = vld [vmem:[#allocation8 + $0x690] sm:$0xff]
    %v3153 = vld [vmem:[#allocation8 + $0x698] sm:$0xff]
    %v3154 = vld [vmem:[#allocation8 + $0x6a0] sm:$0xff]
    %v3155 = vld [vmem:[#allocation8 + $0x6a8] sm:$0xff]
    %v3156 = vld [vmem:[#allocation8 + $0x6b0] sm:$0xff]
    %v3157 = vld [vmem:[#allocation8 + $0x6b8] sm:$0xff]
    %v3158 = vld [vmem:[#allocation8 + $0x6c0] sm:$0xff]
    %v3159 = vld [vmem:[#allocation8 + $0x6c8] sm:$0xff]
    %v3160 = vld [vmem:[#allocation8 + $0x6d0] sm:$0xff]
    %v3161 = vld [vmem:[#allocation8 + $0x6d8] sm:$0xff]
    %v3162 = vld [vmem:[#allocation8 + $0x6e0] sm:$0xff]
    %v3163 = vld [vmem:[#allocation8 + $0x6e8] sm:$0xff]
    %v3164 = vld [vmem:[#allocation8 + $0x6f0] sm:$0xff]
    %v3165 = vld [vmem:[#allocation8 + $0x6f8] sm:$0xff]
    %v3166 = vld [vmem:[#allocation8 + $0x700] sm:$0xff]
    %v3167 = vld [vmem:[#allocation8 + $0x708] sm:$0xff]
    %v3168 = vld [vmem:[#allocation8 + $0x710] sm:$0xff]
    %v3169 = vld [vmem:[#allocation8 + $0x718] sm:$0xff]
    %v3170 = vld [vmem:[#allocation8 + $0x720] sm:$0xff]
    %v3171 = vld [vmem:[#allocation8 + $0x728] sm:$0xff]
    %v3172 = vld [vmem:[#allocation8 + $0x730] sm:$0xff]
    %v3173 = vld [vmem:[#allocation8 + $0x738] sm:$0xff]
    %v3174 = vld [vmem:[#allocation8 + $0x740] sm:$0xff]
    %v3175 = vld [vmem:[#allocation8 + $0x748] sm:$0xff]
    %v3176 = vld [vmem:[#allocation8 + $0x750] sm:$0xff]
    %v3177 = vld [vmem:[#allocation8 + $0x758] sm:$0xff]
    %v3178 = vld [vmem:[#allocation8 + $0x760] sm:$0xff]
    %v3179 = vld [vmem:[#allocation8 + $0x768] sm:$0xff]
    %v3180 = vld [vmem:[#allocation8 + $0x770] sm:$0xff]
    %v3181 = vld [vmem:[#allocation8 + $0x778] sm:$0xff]
    %v3182 = vld [vmem:[#allocation8 + $0x780] sm:$0xff]
    %v3183 = vld [vmem:[#allocation8 + $0x788] sm:$0xff]
    %v3184 = vld [vmem:[#allocation8 + $0x790] sm:$0xff]
    %v3185 = vld [vmem:[#allocation8 + $0x798] sm:$0xff]
    %v3186 = vld [vmem:[#allocation8 + $0x7a0] sm:$0xff]
    %v3187 = vld [vmem:[#allocation8 + $0x7a8] sm:$0xff]
    %v3188 = vld [vmem:[#allocation8 + $0x7b0] sm:$0xff]
    %v3189 = vld [vmem:[#allocation8 + $0x7b8] sm:$0xff]
    %v3190 = vld [vmem:[#allocation8 + $0x7c0] sm:$0xff]
    %v3191 = vld [vmem:[#allocation8 + $0x7c8] sm:$0xff]
    %v3192 = vld [vmem:[#allocation8 + $0x7d0] sm:$0xff]
    %v3193 = vld [vmem:[#allocation8 + $0x7d8] sm:$0xff]
    %v3194 = vld [vmem:[#allocation8 + $0x7e0] sm:$0xff]
    %v3195 = vld [vmem:[#allocation8 + $0x7e8] sm:$0xff]
    %v3196 = vld [vmem:[#allocation8 + $0x7f0] sm:$0xff]
    %v3197 = vld [vmem:[#allocation8 + $0x7f8] sm:$0xff]
    %v3454 = vunpack.c.l.b16 %v2942
    %v3455 = vunpack.c.h.b16 %v2942
    %v3456 = vunpack.c.l.b16 %v2943
    %v3457 = vunpack.c.h.b16 %v2943
    %v3458 = vunpack.c.l.b16 %v2944
    %v3459 = vunpack.c.h.b16 %v2944
    %v3460 = vunpack.c.l.b16 %v2945
    %v3461 = vunpack.c.h.b16 %v2945
    %v3462 = vunpack.c.l.b16 %v2946
    %v3463 = vunpack.c.h.b16 %v2946
    %v3464 = vunpack.c.l.b16 %v2947
    %v3465 = vunpack.c.h.b16 %v2947
    %v3466 = vunpack.c.l.b16 %v2948
    %v3467 = vunpack.c.h.b16 %v2948
    %v3468 = vunpack.c.l.b16 %v2949
    %v3469 = vunpack.c.h.b16 %v2949
    %v3470 = vunpack.c.l.b16 %v2950
    %v3471 = vunpack.c.h.b16 %v2950
    %v3472 = vunpack.c.l.b16 %v2951
    %v3473 = vunpack.c.h.b16 %v2951
    %v3474 = vunpack.c.l.b16 %v2952
    %v3475 = vunpack.c.h.b16 %v2952
    %v3476 = vunpack.c.l.b16 %v2953
    %v3477 = vunpack.c.h.b16 %v2953
    %v3478 = vunpack.c.l.b16 %v2954
    %v3479 = vunpack.c.h.b16 %v2954
    %v3480 = vunpack.c.l.b16 %v2955
    %v3481 = vunpack.c.h.b16 %v2955
    %v3482 = vunpack.c.l.b16 %v2956
    %v3483 = vunpack.c.h.b16 %v2956
    %v3484 = vunpack.c.l.b16 %v2957
    %v3485 = vunpack.c.h.b16 %v2957
    %v3486 = vunpack.c.l.b16 %v2958
    %v3487 = vunpack.c.h.b16 %v2958
    %v3488 = vunpack.c.l.b16 %v2959
    %v3489 = vunpack.c.h.b16 %v2959
    %v3490 = vunpack.c.l.b16 %v2960
    %v3491 = vunpack.c.h.b16 %v2960
    %v3492 = vunpack.c.l.b16 %v2961
    %v3493 = vunpack.c.h.b16 %v2961
    %v3494 = vunpack.c.l.b16 %v2962
    %v3495 = vunpack.c.h.b16 %v2962
    %v3496 = vunpack.c.l.b16 %v2963
    %v3497 = vunpack.c.h.b16 %v2963
    %v3498 = vunpack.c.l.b16 %v2964
    %v3499 = vunpack.c.h.b16 %v2964
    %v3500 = vunpack.c.l.b16 %v2965
    %v3501 = vunpack.c.h.b16 %v2965
    %v3502 = vunpack.c.l.b16 %v2966
    %v3503 = vunpack.c.h.b16 %v2966
    %v3504 = vunpack.c.l.b16 %v2967
    %v3505 = vunpack.c.h.b16 %v2967
    %v3506 = vunpack.c.l.b16 %v2968
    %v3507 = vunpack.c.h.b16 %v2968
    %v3508 = vunpack.c.l.b16 %v2969
    %v3509 = vunpack.c.h.b16 %v2969
    %v3510 = vunpack.c.l.b16 %v2970
    %v3511 = vunpack.c.h.b16 %v2970
    %v3512 = vunpack.c.l.b16 %v2971
    %v3513 = vunpack.c.h.b16 %v2971
    %v3514 = vunpack.c.l.b16 %v2972
    %v3515 = vunpack.c.h.b16 %v2972
    %v3516 = vunpack.c.l.b16 %v2973
    %v3517 = vunpack.c.h.b16 %v2973
    %v3518 = vunpack.c.l.b16 %v2974
    %v3519 = vunpack.c.h.b16 %v2974
    %v3520 = vunpack.c.l.b16 %v2975
    %v3521 = vunpack.c.h.b16 %v2975
    %v3522 = vunpack.c.l.b16 %v2976
    %v3523 = vunpack.c.h.b16 %v2976
    %v3524 = vunpack.c.l.b16 %v2977
    %v3525 = vunpack.c.h.b16 %v2977
    %v3526 = vunpack.c.l.b16 %v2978
    %v3527 = vunpack.c.h.b16 %v2978
    %v3528 = vunpack.c.l.b16 %v2979
    %v3529 = vunpack.c.h.b16 %v2979
    %v3530 = vunpack.c.l.b16 %v2980
    %v3531 = vunpack.c.h.b16 %v2980
    %v3532 = vunpack.c.l.b16 %v2981
    %v3533 = vunpack.c.h.b16 %v2981
    %v3534 = vunpack.c.l.b16 %v2982
    %v3535 = vunpack.c.h.b16 %v2982
    %v3536 = vunpack.c.l.b16 %v2983
    %v3537 = vunpack.c.h.b16 %v2983
    %v3538 = vunpack.c.l.b16 %v2984
    %v3539 = vunpack.c.h.b16 %v2984
    %v3540 = vunpack.c.l.b16 %v2985
    %v3541 = vunpack.c.h.b16 %v2985
    %v3542 = vunpack.c.l.b16 %v2986
    %v3543 = vunpack.c.h.b16 %v2986
    %v3544 = vunpack.c.l.b16 %v2987
    %v3545 = vunpack.c.h.b16 %v2987
    %v3546 = vunpack.c.l.b16 %v2988
    %v3547 = vunpack.c.h.b16 %v2988
    %v3548 = vunpack.c.l.b16 %v2989
    %v3549 = vunpack.c.h.b16 %v2989
    %v3550 = vunpack.c.l.b16 %v2990
    %v3551 = vunpack.c.h.b16 %v2990
    %v3552 = vunpack.c.l.b16 %v2991
    %v3553 = vunpack.c.h.b16 %v2991
    %v3554 = vunpack.c.l.b16 %v2992
    %v3555 = vunpack.c.h.b16 %v2992
    %v3556 = vunpack.c.l.b16 %v2993
    %v3557 = vunpack.c.h.b16 %v2993
    %v3558 = vunpack.c.l.b16 %v2994
    %v3559 = vunpack.c.h.b16 %v2994
    %v3560 = vunpack.c.l.b16 %v2995
    %v3561 = vunpack.c.h.b16 %v2995
    %v3562 = vunpack.c.l.b16 %v2996
    %v3563 = vunpack.c.h.b16 %v2996
    %v3564 = vunpack.c.l.b16 %v2997
    %v3565 = vunpack.c.h.b16 %v2997
    %v3566 = vunpack.c.l.b16 %v2998
    %v3567 = vunpack.c.h.b16 %v2998
    %v3568 = vunpack.c.l.b16 %v2999
    %v3569 = vunpack.c.h.b16 %v2999
    %v3570 = vunpack.c.l.b16 %v3000
    %v3571 = vunpack.c.h.b16 %v3000
    %v3572 = vunpack.c.l.b16 %v3001
    %v3573 = vunpack.c.h.b16 %v3001
    %v3574 = vunpack.c.l.b16 %v3002
    %v3575 = vunpack.c.h.b16 %v3002
    %v3576 = vunpack.c.l.b16 %v3003
    %v3577 = vunpack.c.h.b16 %v3003
    %v3578 = vunpack.c.l.b16 %v3004
    %v3579 = vunpack.c.h.b16 %v3004
    %v3580 = vunpack.c.l.b16 %v3005
    %v3581 = vunpack.c.h.b16 %v3005
    %v3582 = vunpack.c.l.b16 %v3006
    %v3583 = vunpack.c.h.b16 %v3006
    %v3584 = vunpack.c.l.b16 %v3007
    %v3585 = vunpack.c.h.b16 %v3007
    %v3586 = vunpack.c.l.b16 %v3008
    %v3587 = vunpack.c.h.b16 %v3008
    %v3588 = vunpack.c.l.b16 %v3009
    %v3589 = vunpack.c.h.b16 %v3009
    %v3590 = vunpack.c.l.b16 %v3010
    %v3591 = vunpack.c.h.b16 %v3010
    %v3592 = vunpack.c.l.b16 %v3011
    %v3593 = vunpack.c.h.b16 %v3011
    %v3594 = vunpack.c.l.b16 %v3012
    %v3595 = vunpack.c.h.b16 %v3012
    %v3596 = vunpack.c.l.b16 %v3013
    %v3597 = vunpack.c.h.b16 %v3013
    %v3598 = vunpack.c.l.b16 %v3014
    %v3599 = vunpack.c.h.b16 %v3014
    %v3600 = vunpack.c.l.b16 %v3015
    %v3601 = vunpack.c.h.b16 %v3015
    %v3602 = vunpack.c.l.b16 %v3016
    %v3603 = vunpack.c.h.b16 %v3016
    %v3604 = vunpack.c.l.b16 %v3017
    %v3605 = vunpack.c.h.b16 %v3017
    %v3606 = vunpack.c.l.b16 %v3018
    %v3607 = vunpack.c.h.b16 %v3018
    %v3608 = vunpack.c.l.b16 %v3019
    %v3609 = vunpack.c.h.b16 %v3019
    %v3610 = vunpack.c.l.b16 %v3020
    %v3611 = vunpack.c.h.b16 %v3020
    %v3612 = vunpack.c.l.b16 %v3021
    %v3613 = vunpack.c.h.b16 %v3021
    %v3614 = vunpack.c.l.b16 %v3022
    %v3615 = vunpack.c.h.b16 %v3022
    %v3616 = vunpack.c.l.b16 %v3023
    %v3617 = vunpack.c.h.b16 %v3023
    %v3618 = vunpack.c.l.b16 %v3024
    %v3619 = vunpack.c.h.b16 %v3024
    %v3620 = vunpack.c.l.b16 %v3025
    %v3621 = vunpack.c.h.b16 %v3025
    %v3622 = vunpack.c.l.b16 %v3026
    %v3623 = vunpack.c.h.b16 %v3026
    %v3624 = vunpack.c.l.b16 %v3027
    %v3625 = vunpack.c.h.b16 %v3027
    %v3626 = vunpack.c.l.b16 %v3028
    %v3627 = vunpack.c.h.b16 %v3028
    %v3628 = vunpack.c.l.b16 %v3029
    %v3629 = vunpack.c.h.b16 %v3029
    %v3630 = vunpack.c.l.b16 %v3030
    %v3631 = vunpack.c.h.b16 %v3030
    %v3632 = vunpack.c.l.b16 %v3031
    %v3633 = vunpack.c.h.b16 %v3031
    %v3634 = vunpack.c.l.b16 %v3032
    %v3635 = vunpack.c.h.b16 %v3032
    %v3636 = vunpack.c.l.b16 %v3033
    %v3637 = vunpack.c.h.b16 %v3033
    %v3638 = vunpack.c.l.b16 %v3034
    %v3639 = vunpack.c.h.b16 %v3034
    %v3640 = vunpack.c.l.b16 %v3035
    %v3641 = vunpack.c.h.b16 %v3035
    %v3642 = vunpack.c.l.b16 %v3036
    %v3643 = vunpack.c.h.b16 %v3036
    %v3644 = vunpack.c.l.b16 %v3037
    %v3645 = vunpack.c.h.b16 %v3037
    %v3646 = vunpack.c.l.b16 %v3038
    %v3647 = vunpack.c.h.b16 %v3038
    %v3648 = vunpack.c.l.b16 %v3039
    %v3649 = vunpack.c.h.b16 %v3039
    %v3650 = vunpack.c.l.b16 %v3040
    %v3651 = vunpack.c.h.b16 %v3040
    %v3652 = vunpack.c.l.b16 %v3041
    %v3653 = vunpack.c.h.b16 %v3041
    %v3654 = vunpack.c.l.b16 %v3042
    %v3655 = vunpack.c.h.b16 %v3042
    %v3656 = vunpack.c.l.b16 %v3043
    %v3657 = vunpack.c.h.b16 %v3043
    %v3658 = vunpack.c.l.b16 %v3044
    %v3659 = vunpack.c.h.b16 %v3044
    %v3660 = vunpack.c.l.b16 %v3045
    %v3661 = vunpack.c.h.b16 %v3045
    %v3662 = vunpack.c.l.b16 %v3046
    %v3663 = vunpack.c.h.b16 %v3046
    %v3664 = vunpack.c.l.b16 %v3047
    %v3665 = vunpack.c.h.b16 %v3047
    %v3666 = vunpack.c.l.b16 %v3048
    %v3667 = vunpack.c.h.b16 %v3048
    %v3668 = vunpack.c.l.b16 %v3049
    %v3669 = vunpack.c.h.b16 %v3049
    %v3670 = vunpack.c.l.b16 %v3050
    %v3671 = vunpack.c.h.b16 %v3050
    %v3672 = vunpack.c.l.b16 %v3051
    %v3673 = vunpack.c.h.b16 %v3051
    %v3674 = vunpack.c.l.b16 %v3052
    %v3675 = vunpack.c.h.b16 %v3052
    %v3676 = vunpack.c.l.b16 %v3053
    %v3677 = vunpack.c.h.b16 %v3053
    %v3678 = vunpack.c.l.b16 %v3054
    %v3679 = vunpack.c.h.b16 %v3054
    %v3680 = vunpack.c.l.b16 %v3055
    %v3681 = vunpack.c.h.b16 %v3055
    %v3682 = vunpack.c.l.b16 %v3056
    %v3683 = vunpack.c.h.b16 %v3056
    %v3684 = vunpack.c.l.b16 %v3057
    %v3685 = vunpack.c.h.b16 %v3057
    %v3686 = vunpack.c.l.b16 %v3058
    %v3687 = vunpack.c.h.b16 %v3058
    %v3688 = vunpack.c.l.b16 %v3059
    %v3689 = vunpack.c.h.b16 %v3059
    %v3690 = vunpack.c.l.b16 %v3060
    %v3691 = vunpack.c.h.b16 %v3060
    %v3692 = vunpack.c.l.b16 %v3061
    %v3693 = vunpack.c.h.b16 %v3061
    %v3694 = vunpack.c.l.b16 %v3062
    %v3695 = vunpack.c.h.b16 %v3062
    %v3696 = vunpack.c.l.b16 %v3063
    %v3697 = vunpack.c.h.b16 %v3063
    %v3698 = vunpack.c.l.b16 %v3064
    %v3699 = vunpack.c.h.b16 %v3064
    %v3700 = vunpack.c.l.b16 %v3065
    %v3701 = vunpack.c.h.b16 %v3065
    %v3702 = vunpack.c.l.b16 %v3066
    %v3703 = vunpack.c.h.b16 %v3066
    %v3704 = vunpack.c.l.b16 %v3067
    %v3705 = vunpack.c.h.b16 %v3067
    %v3706 = vunpack.c.l.b16 %v3068
    %v3707 = vunpack.c.h.b16 %v3068
    %v3708 = vunpack.c.l.b16 %v3069
    %v3709 = vunpack.c.h.b16 %v3069
    %v3710 = vunpack.c.l.b16 %v3070
    %v3711 = vunpack.c.h.b16 %v3070
    %v3712 = vunpack.c.l.b16 %v3071
    %v3713 = vunpack.c.h.b16 %v3071
    %v3714 = vunpack.c.l.b16 %v3072
    %v3715 = vunpack.c.h.b16 %v3072
    %v3716 = vunpack.c.l.b16 %v3073
    %v3717 = vunpack.c.h.b16 %v3073
    %v3718 = vunpack.c.l.b16 %v3074
    %v3719 = vunpack.c.h.b16 %v3074
    %v3720 = vunpack.c.l.b16 %v3075
    %v3721 = vunpack.c.h.b16 %v3075
    %v3722 = vunpack.c.l.b16 %v3076
    %v3723 = vunpack.c.h.b16 %v3076
    %v3724 = vunpack.c.l.b16 %v3077
    %v3725 = vunpack.c.h.b16 %v3077
    %v3726 = vunpack.c.l.b16 %v3078
    %v3727 = vunpack.c.h.b16 %v3078
    %v3728 = vunpack.c.l.b16 %v3079
    %v3729 = vunpack.c.h.b16 %v3079
    %v3730 = vunpack.c.l.b16 %v3080
    %v3731 = vunpack.c.h.b16 %v3080
    %v3732 = vunpack.c.l.b16 %v3081
    %v3733 = vunpack.c.h.b16 %v3081
    %v3734 = vunpack.c.l.b16 %v3082
    %v3735 = vunpack.c.h.b16 %v3082
    %v3736 = vunpack.c.l.b16 %v3083
    %v3737 = vunpack.c.h.b16 %v3083
    %v3738 = vunpack.c.l.b16 %v3084
    %v3739 = vunpack.c.h.b16 %v3084
    %v3740 = vunpack.c.l.b16 %v3085
    %v3741 = vunpack.c.h.b16 %v3085
    %v3742 = vunpack.c.l.b16 %v3086
    %v3743 = vunpack.c.h.b16 %v3086
    %v3744 = vunpack.c.l.b16 %v3087
    %v3745 = vunpack.c.h.b16 %v3087
    %v3746 = vunpack.c.l.b16 %v3088
    %v3747 = vunpack.c.h.b16 %v3088
    %v3748 = vunpack.c.l.b16 %v3089
    %v3749 = vunpack.c.h.b16 %v3089
    %v3750 = vunpack.c.l.b16 %v3090
    %v3751 = vunpack.c.h.b16 %v3090
    %v3752 = vunpack.c.l.b16 %v3091
    %v3753 = vunpack.c.h.b16 %v3091
    %v3754 = vunpack.c.l.b16 %v3092
    %v3755 = vunpack.c.h.b16 %v3092
    %v3756 = vunpack.c.l.b16 %v3093
    %v3757 = vunpack.c.h.b16 %v3093
    %v3758 = vunpack.c.l.b16 %v3094
    %v3759 = vunpack.c.h.b16 %v3094
    %v3760 = vunpack.c.l.b16 %v3095
    %v3761 = vunpack.c.h.b16 %v3095
    %v3762 = vunpack.c.l.b16 %v3096
    %v3763 = vunpack.c.h.b16 %v3096
    %v3764 = vunpack.c.l.b16 %v3097
    %v3765 = vunpack.c.h.b16 %v3097
    %v3766 = vunpack.c.l.b16 %v3098
    %v3767 = vunpack.c.h.b16 %v3098
    %v3768 = vunpack.c.l.b16 %v3099
    %v3769 = vunpack.c.h.b16 %v3099
    %v3770 = vunpack.c.l.b16 %v3100
    %v3771 = vunpack.c.h.b16 %v3100
    %v3772 = vunpack.c.l.b16 %v3101
    %v3773 = vunpack.c.h.b16 %v3101
    %v3774 = vunpack.c.l.b16 %v3102
    %v3775 = vunpack.c.h.b16 %v3102
    %v3776 = vunpack.c.l.b16 %v3103
    %v3777 = vunpack.c.h.b16 %v3103
    %v3778 = vunpack.c.l.b16 %v3104
    %v3779 = vunpack.c.h.b16 %v3104
    %v3780 = vunpack.c.l.b16 %v3105
    %v3781 = vunpack.c.h.b16 %v3105
    %v3782 = vunpack.c.l.b16 %v3106
    %v3783 = vunpack.c.h.b16 %v3106
    %v3784 = vunpack.c.l.b16 %v3107
    %v3785 = vunpack.c.h.b16 %v3107
    %v3786 = vunpack.c.l.b16 %v3108
    %v3787 = vunpack.c.h.b16 %v3108
    %v3788 = vunpack.c.l.b16 %v3109
    %v3789 = vunpack.c.h.b16 %v3109
    %v3790 = vunpack.c.l.b16 %v3110
    %v3791 = vunpack.c.h.b16 %v3110
    %v3792 = vunpack.c.l.b16 %v3111
    %v3793 = vunpack.c.h.b16 %v3111
    %v3794 = vunpack.c.l.b16 %v3112
    %v3795 = vunpack.c.h.b16 %v3112
    %v3796 = vunpack.c.l.b16 %v3113
    %v3797 = vunpack.c.h.b16 %v3113
    %v3798 = vunpack.c.l.b16 %v3114
    %v3799 = vunpack.c.h.b16 %v3114
    %v3800 = vunpack.c.l.b16 %v3115
    %v3801 = vunpack.c.h.b16 %v3115
    %v3802 = vunpack.c.l.b16 %v3116
    %v3803 = vunpack.c.h.b16 %v3116
    %v3804 = vunpack.c.l.b16 %v3117
    %v3805 = vunpack.c.h.b16 %v3117
    %v3806 = vunpack.c.l.b16 %v3118
    %v3807 = vunpack.c.h.b16 %v3118
    %v3808 = vunpack.c.l.b16 %v3119
    %v3809 = vunpack.c.h.b16 %v3119
    %v3810 = vunpack.c.l.b16 %v3120
    %v3811 = vunpack.c.h.b16 %v3120
    %v3812 = vunpack.c.l.b16 %v3121
    %v3813 = vunpack.c.h.b16 %v3121
    %v3814 = vunpack.c.l.b16 %v3122
    %v3815 = vunpack.c.h.b16 %v3122
    %v3816 = vunpack.c.l.b16 %v3123
    %v3817 = vunpack.c.h.b16 %v3123
    %v3818 = vunpack.c.l.b16 %v3124
    %v3819 = vunpack.c.h.b16 %v3124
    %v3820 = vunpack.c.l.b16 %v3125
    %v3821 = vunpack.c.h.b16 %v3125
    %v3822 = vunpack.c.l.b16 %v3126
    %v3823 = vunpack.c.h.b16 %v3126
    %v3824 = vunpack.c.l.b16 %v3127
    %v3825 = vunpack.c.h.b16 %v3127
    %v3826 = vunpack.c.l.b16 %v3128
    %v3827 = vunpack.c.h.b16 %v3128
    %v3828 = vunpack.c.l.b16 %v3129
    %v3829 = vunpack.c.h.b16 %v3129
    %v3830 = vunpack.c.l.b16 %v3130
    %v3831 = vunpack.c.h.b16 %v3130
    %v3832 = vunpack.c.l.b16 %v3131
    %v3833 = vunpack.c.h.b16 %v3131
    %v3834 = vunpack.c.l.b16 %v3132
    %v3835 = vunpack.c.h.b16 %v3132
    %v3836 = vunpack.c.l.b16 %v3133
    %v3837 = vunpack.c.h.b16 %v3133
    %v3838 = vunpack.c.l.b16 %v3134
    %v3839 = vunpack.c.h.b16 %v3134
    %v3840 = vunpack.c.l.b16 %v3135
    %v3841 = vunpack.c.h.b16 %v3135
    %v3842 = vunpack.c.l.b16 %v3136
    %v3843 = vunpack.c.h.b16 %v3136
    %v3844 = vunpack.c.l.b16 %v3137
    %v3845 = vunpack.c.h.b16 %v3137
    %v3846 = vunpack.c.l.b16 %v3138
    %v3847 = vunpack.c.h.b16 %v3138
    %v3848 = vunpack.c.l.b16 %v3139
    %v3849 = vunpack.c.h.b16 %v3139
    %v3850 = vunpack.c.l.b16 %v3140
    %v3851 = vunpack.c.h.b16 %v3140
    %v3852 = vunpack.c.l.b16 %v3141
    %v3853 = vunpack.c.h.b16 %v3141
    %v3854 = vunpack.c.l.b16 %v3142
    %v3855 = vunpack.c.h.b16 %v3142
    %v3856 = vunpack.c.l.b16 %v3143
    %v3857 = vunpack.c.h.b16 %v3143
    %v3858 = vunpack.c.l.b16 %v3144
    %v3859 = vunpack.c.h.b16 %v3144
    %v3860 = vunpack.c.l.b16 %v3145
    %v3861 = vunpack.c.h.b16 %v3145
    %v3862 = vunpack.c.l.b16 %v3146
    %v3863 = vunpack.c.h.b16 %v3146
    %v3864 = vunpack.c.l.b16 %v3147
    %v3865 = vunpack.c.h.b16 %v3147
    %v3866 = vunpack.c.l.b16 %v3148
    %v3867 = vunpack.c.h.b16 %v3148
    %v3868 = vunpack.c.l.b16 %v3149
    %v3869 = vunpack.c.h.b16 %v3149
    %v3870 = vunpack.c.l.b16 %v3150
    %v3871 = vunpack.c.h.b16 %v3150
    %v3872 = vunpack.c.l.b16 %v3151
    %v3873 = vunpack.c.h.b16 %v3151
    %v3874 = vunpack.c.l.b16 %v3152
    %v3875 = vunpack.c.h.b16 %v3152
    %v3876 = vunpack.c.l.b16 %v3153
    %v3877 = vunpack.c.h.b16 %v3153
    %v3878 = vunpack.c.l.b16 %v3154
    %v3879 = vunpack.c.h.b16 %v3154
    %v3880 = vunpack.c.l.b16 %v3155
    %v3881 = vunpack.c.h.b16 %v3155
    %v3882 = vunpack.c.l.b16 %v3156
    %v3883 = vunpack.c.h.b16 %v3156
    %v3884 = vunpack.c.l.b16 %v3157
    %v3885 = vunpack.c.h.b16 %v3157
    %v3886 = vunpack.c.l.b16 %v3158
    %v3887 = vunpack.c.h.b16 %v3158
    %v3888 = vunpack.c.l.b16 %v3159
    %v3889 = vunpack.c.h.b16 %v3159
    %v3890 = vunpack.c.l.b16 %v3160
    %v3891 = vunpack.c.h.b16 %v3160
    %v3892 = vunpack.c.l.b16 %v3161
    %v3893 = vunpack.c.h.b16 %v3161
    %v3894 = vunpack.c.l.b16 %v3162
    %v3895 = vunpack.c.h.b16 %v3162
    %v3896 = vunpack.c.l.b16 %v3163
    %v3897 = vunpack.c.h.b16 %v3163
    %v3898 = vunpack.c.l.b16 %v3164
    %v3899 = vunpack.c.h.b16 %v3164
    %v3900 = vunpack.c.l.b16 %v3165
    %v3901 = vunpack.c.h.b16 %v3165
    %v3902 = vunpack.c.l.b16 %v3166
    %v3903 = vunpack.c.h.b16 %v3166
    %v3904 = vunpack.c.l.b16 %v3167
    %v3905 = vunpack.c.h.b16 %v3167
    %v3906 = vunpack.c.l.b16 %v3168
    %v3907 = vunpack.c.h.b16 %v3168
    %v3908 = vunpack.c.l.b16 %v3169
    %v3909 = vunpack.c.h.b16 %v3169
    %v3910 = vunpack.c.l.b16 %v3170
    %v3911 = vunpack.c.h.b16 %v3170
    %v3912 = vunpack.c.l.b16 %v3171
    %v3913 = vunpack.c.h.b16 %v3171
    %v3914 = vunpack.c.l.b16 %v3172
    %v3915 = vunpack.c.h.b16 %v3172
    %v3916 = vunpack.c.l.b16 %v3173
    %v3917 = vunpack.c.h.b16 %v3173
    %v3918 = vunpack.c.l.b16 %v3174
    %v3919 = vunpack.c.h.b16 %v3174
    %v3920 = vunpack.c.l.b16 %v3175
    %v3921 = vunpack.c.h.b16 %v3175
    %v3922 = vunpack.c.l.b16 %v3176
    %v3923 = vunpack.c.h.b16 %v3176
    %v3924 = vunpack.c.l.b16 %v3177
    %v3925 = vunpack.c.h.b16 %v3177
    %v3926 = vunpack.c.l.b16 %v3178
    %v3927 = vunpack.c.h.b16 %v3178
    %v3928 = vunpack.c.l.b16 %v3179
    %v3929 = vunpack.c.h.b16 %v3179
    %v3930 = vunpack.c.l.b16 %v3180
    %v3931 = vunpack.c.h.b16 %v3180
    %v3932 = vunpack.c.l.b16 %v3181
    %v3933 = vunpack.c.h.b16 %v3181
    %v3934 = vunpack.c.l.b16 %v3182
    %v3935 = vunpack.c.h.b16 %v3182
    %v3936 = vunpack.c.l.b16 %v3183
    %v3937 = vunpack.c.h.b16 %v3183
    %v3938 = vunpack.c.l.b16 %v3184
    %v3939 = vunpack.c.h.b16 %v3184
    %v3940 = vunpack.c.l.b16 %v3185
    %v3941 = vunpack.c.h.b16 %v3185
    %v3942 = vunpack.c.l.b16 %v3186
    %v3943 = vunpack.c.h.b16 %v3186
    %v3944 = vunpack.c.l.b16 %v3187
    %v3945 = vunpack.c.h.b16 %v3187
    %v3946 = vunpack.c.l.b16 %v3188
    %v3947 = vunpack.c.h.b16 %v3188
    %v3948 = vunpack.c.l.b16 %v3189
    %v3949 = vunpack.c.h.b16 %v3189
    %v3950 = vunpack.c.l.b16 %v3190
    %v3951 = vunpack.c.h.b16 %v3190
    %v3952 = vunpack.c.l.b16 %v3191
    %v3953 = vunpack.c.h.b16 %v3191
    %v3954 = vunpack.c.l.b16 %v3192
    %v3955 = vunpack.c.h.b16 %v3192
    %v3956 = vunpack.c.l.b16 %v3193
    %v3957 = vunpack.c.h.b16 %v3193
    %v3958 = vunpack.c.l.b16 %v3194
    %v3959 = vunpack.c.h.b16 %v3194
    %v3960 = vunpack.c.l.b16 %v3195
    %v3961 = vunpack.c.h.b16 %v3195
    %v3962 = vunpack.c.l.b16 %v3196
    %v3963 = vunpack.c.h.b16 %v3196
    %v3964 = vunpack.c.l.b16 %v3197
    %v3965 = vunpack.c.h.b16 %v3197
    %v3966 = vpack.c.b16 %v3462, %v3454
    %v3967 = vpack.c.b16 %v3463, %v3455
    %v3968 = vpack.c.b16 %v3464, %v3456
    %v3969 = vpack.c.b16 %v3465, %v3457
    %v3970 = vpack.c.b16 %v3466, %v3458
    %v3971 = vpack.c.b16 %v3467, %v3459
    %v3972 = vpack.c.b16 %v3468, %v3460
    %v3973 = vpack.c.b16 %v3469, %v3461
    %v3974 = vpack.c.b16 %v3478, %v3470
    %v3975 = vpack.c.b16 %v3479, %v3471
    %v3976 = vpack.c.b16 %v3480, %v3472
    %v3977 = vpack.c.b16 %v3481, %v3473
    %v3978 = vpack.c.b16 %v3482, %v3474
    %v3979 = vpack.c.b16 %v3483, %v3475
    %v3980 = vpack.c.b16 %v3484, %v3476
    %v3981 = vpack.c.b16 %v3485, %v3477
    %v3982 = vpack.c.b16 %v3494, %v3486
    %v3983 = vpack.c.b16 %v3495, %v3487
    %v3984 = vpack.c.b16 %v3496, %v3488
    %v3985 = vpack.c.b16 %v3497, %v3489
    %v3986 = vpack.c.b16 %v3498, %v3490
    %v3987 = vpack.c.b16 %v3499, %v3491
    %v3988 = vpack.c.b16 %v3500, %v3492
    %v3989 = vpack.c.b16 %v3501, %v3493
    %v3990 = vpack.c.b16 %v3510, %v3502
    %v3991 = vpack.c.b16 %v3511, %v3503
    %v3992 = vpack.c.b16 %v3512, %v3504
    %v3993 = vpack.c.b16 %v3513, %v3505
    %v3994 = vpack.c.b16 %v3514, %v3506
    %v3995 = vpack.c.b16 %v3515, %v3507
    %v3996 = vpack.c.b16 %v3516, %v3508
    %v3997 = vpack.c.b16 %v3517, %v3509
    %v3998 = vpack.c.b16 %v3526, %v3518
    %v3999 = vpack.c.b16 %v3527, %v3519
    %v4000 = vpack.c.b16 %v3528, %v3520
    %v4001 = vpack.c.b16 %v3529, %v3521
    %v4002 = vpack.c.b16 %v3530, %v3522
    %v4003 = vpack.c.b16 %v3531, %v3523
    %v4004 = vpack.c.b16 %v3532, %v3524
    %v4005 = vpack.c.b16 %v3533, %v3525
    %v4006 = vpack.c.b16 %v3542, %v3534
    %v4007 = vpack.c.b16 %v3543, %v3535
    %v4008 = vpack.c.b16 %v3544, %v3536
    %v4009 = vpack.c.b16 %v3545, %v3537
    %v4010 = vpack.c.b16 %v3546, %v3538
    %v4011 = vpack.c.b16 %v3547, %v3539
    %v4012 = vpack.c.b16 %v3548, %v3540
    %v4013 = vpack.c.b16 %v3549, %v3541
    %v4014 = vpack.c.b16 %v3558, %v3550
    %v4015 = vpack.c.b16 %v3559, %v3551
    %v4016 = vpack.c.b16 %v3560, %v3552
    %v4017 = vpack.c.b16 %v3561, %v3553
    %v4018 = vpack.c.b16 %v3562, %v3554
    %v4019 = vpack.c.b16 %v3563, %v3555
    %v4020 = vpack.c.b16 %v3564, %v3556
    %v4021 = vpack.c.b16 %v3565, %v3557
    %v4022 = vpack.c.b16 %v3574, %v3566
    %v4023 = vpack.c.b16 %v3575, %v3567
    %v4024 = vpack.c.b16 %v3576, %v3568
    %v4025 = vpack.c.b16 %v3577, %v3569
    %v4026 = vpack.c.b16 %v3578, %v3570
    %v4027 = vpack.c.b16 %v3579, %v3571
    %v4028 = vpack.c.b16 %v3580, %v3572
    %v4029 = vpack.c.b16 %v3581, %v3573
    %v4030 = vpack.c.b16 %v3590, %v3582
    %v4031 = vpack.c.b16 %v3591, %v3583
    %v4032 = vpack.c.b16 %v3592, %v3584
    %v4033 = vpack.c.b16 %v3593, %v3585
    %v4034 = vpack.c.b16 %v3594, %v3586
    %v4035 = vpack.c.b16 %v3595, %v3587
    %v4036 = vpack.c.b16 %v3596, %v3588
    %v4037 = vpack.c.b16 %v3597, %v3589
    %v4038 = vpack.c.b16 %v3606, %v3598
    %v4039 = vpack.c.b16 %v3607, %v3599
    %v4040 = vpack.c.b16 %v3608, %v3600
    %v4041 = vpack.c.b16 %v3609, %v3601
    %v4042 = vpack.c.b16 %v3610, %v3602
    %v4043 = vpack.c.b16 %v3611, %v3603
    %v4044 = vpack.c.b16 %v3612, %v3604
    %v4045 = vpack.c.b16 %v3613, %v3605
    %v4046 = vpack.c.b16 %v3622, %v3614
    %v4047 = vpack.c.b16 %v3623, %v3615
    %v4048 = vpack.c.b16 %v3624, %v3616
    %v4049 = vpack.c.b16 %v3625, %v3617
    %v4050 = vpack.c.b16 %v3626, %v3618
    %v4051 = vpack.c.b16 %v3627, %v3619
    %v4052 = vpack.c.b16 %v3628, %v3620
    %v4053 = vpack.c.b16 %v3629, %v3621
    %v4054 = vpack.c.b16 %v3638, %v3630
    %v4055 = vpack.c.b16 %v3639, %v3631
    %v4056 = vpack.c.b16 %v3640, %v3632
    %v4057 = vpack.c.b16 %v3641, %v3633
    %v4058 = vpack.c.b16 %v3642, %v3634
    %v4059 = vpack.c.b16 %v3643, %v3635
    %v4060 = vpack.c.b16 %v3644, %v3636
    %v4061 = vpack.c.b16 %v3645, %v3637
    %v4062 = vpack.c.b16 %v3654, %v3646
    %v4063 = vpack.c.b16 %v3655, %v3647
    %v4064 = vpack.c.b16 %v3656, %v3648
    %v4065 = vpack.c.b16 %v3657, %v3649
    %v4066 = vpack.c.b16 %v3658, %v3650
    %v4067 = vpack.c.b16 %v3659, %v3651
    %v4068 = vpack.c.b16 %v3660, %v3652
    %v4069 = vpack.c.b16 %v3661, %v3653
    %v4070 = vpack.c.b16 %v3670, %v3662
    %v4071 = vpack.c.b16 %v3671, %v3663
    %v4072 = vpack.c.b16 %v3672, %v3664
    %v4073 = vpack.c.b16 %v3673, %v3665
    %v4074 = vpack.c.b16 %v3674, %v3666
    %v4075 = vpack.c.b16 %v3675, %v3667
    %v4076 = vpack.c.b16 %v3676, %v3668
    %v4077 = vpack.c.b16 %v3677, %v3669
    %v4078 = vpack.c.b16 %v3686, %v3678
    %v4079 = vpack.c.b16 %v3687, %v3679
    %v4080 = vpack.c.b16 %v3688, %v3680
    %v4081 = vpack.c.b16 %v3689, %v3681
    %v4082 = vpack.c.b16 %v3690, %v3682
    %v4083 = vpack.c.b16 %v3691, %v3683
    %v4084 = vpack.c.b16 %v3692, %v3684
    %v4085 = vpack.c.b16 %v3693, %v3685
    %v4086 = vpack.c.b16 %v3702, %v3694
    %v4087 = vpack.c.b16 %v3703, %v3695
    %v4088 = vpack.c.b16 %v3704, %v3696
    %v4089 = vpack.c.b16 %v3705, %v3697
    %v4090 = vpack.c.b16 %v3706, %v3698
    %v4091 = vpack.c.b16 %v3707, %v3699
    %v4092 = vpack.c.b16 %v3708, %v3700
    %v4093 = vpack.c.b16 %v3709, %v3701
    %v4094 = vpack.c.b16 %v3718, %v3710
    %v4095 = vpack.c.b16 %v3719, %v3711
    %v4096 = vpack.c.b16 %v3720, %v3712
    %v4097 = vpack.c.b16 %v3721, %v3713
    %v4098 = vpack.c.b16 %v3722, %v3714
    %v4099 = vpack.c.b16 %v3723, %v3715
    %v4100 = vpack.c.b16 %v3724, %v3716
    %v4101 = vpack.c.b16 %v3725, %v3717
    %v4102 = vpack.c.b16 %v3734, %v3726
    %v4103 = vpack.c.b16 %v3735, %v3727
    %v4104 = vpack.c.b16 %v3736, %v3728
    %v4105 = vpack.c.b16 %v3737, %v3729
    %v4106 = vpack.c.b16 %v3738, %v3730
    %v4107 = vpack.c.b16 %v3739, %v3731
    %v4108 = vpack.c.b16 %v3740, %v3732
    %v4109 = vpack.c.b16 %v3741, %v3733
    %v4110 = vpack.c.b16 %v3750, %v3742
    %v4111 = vpack.c.b16 %v3751, %v3743
    %v4112 = vpack.c.b16 %v3752, %v3744
    %v4113 = vpack.c.b16 %v3753, %v3745
    %v4114 = vpack.c.b16 %v3754, %v3746
    %v4115 = vpack.c.b16 %v3755, %v3747
    %v4116 = vpack.c.b16 %v3756, %v3748
    %v4117 = vpack.c.b16 %v3757, %v3749
    %v4118 = vpack.c.b16 %v3766, %v3758
    %v4119 = vpack.c.b16 %v3767, %v3759
    %v4120 = vpack.c.b16 %v3768, %v3760
    %v4121 = vpack.c.b16 %v3769, %v3761
    %v4122 = vpack.c.b16 %v3770, %v3762
    %v4123 = vpack.c.b16 %v3771, %v3763
    %v4124 = vpack.c.b16 %v3772, %v3764
    %v4125 = vpack.c.b16 %v3773, %v3765
    %v4126 = vpack.c.b16 %v3782, %v3774
    %v4127 = vpack.c.b16 %v3783, %v3775
    %v4128 = vpack.c.b16 %v3784, %v3776
    %v4129 = vpack.c.b16 %v3785, %v3777
    %v4130 = vpack.c.b16 %v3786, %v3778
    %v4131 = vpack.c.b16 %v3787, %v3779
    %v4132 = vpack.c.b16 %v3788, %v3780
    %v4133 = vpack.c.b16 %v3789, %v3781
    %v4134 = vpack.c.b16 %v3798, %v3790
    %v4135 = vpack.c.b16 %v3799, %v3791
    %v4136 = vpack.c.b16 %v3800, %v3792
    %v4137 = vpack.c.b16 %v3801, %v3793
    %v4138 = vpack.c.b16 %v3802, %v3794
    %v4139 = vpack.c.b16 %v3803, %v3795
    %v4140 = vpack.c.b16 %v3804, %v3796
    %v4141 = vpack.c.b16 %v3805, %v3797
    %v4142 = vpack.c.b16 %v3814, %v3806
    %v4143 = vpack.c.b16 %v3815, %v3807
    %v4144 = vpack.c.b16 %v3816, %v3808
    %v4145 = vpack.c.b16 %v3817, %v3809
    %v4146 = vpack.c.b16 %v3818, %v3810
    %v4147 = vpack.c.b16 %v3819, %v3811
    %v4148 = vpack.c.b16 %v3820, %v3812
    %v4149 = vpack.c.b16 %v3821, %v3813
    %v4150 = vpack.c.b16 %v3830, %v3822
    %v4151 = vpack.c.b16 %v3831, %v3823
    %v4152 = vpack.c.b16 %v3832, %v3824
    %v4153 = vpack.c.b16 %v3833, %v3825
    %v4154 = vpack.c.b16 %v3834, %v3826
    %v4155 = vpack.c.b16 %v3835, %v3827
    %v4156 = vpack.c.b16 %v3836, %v3828
    %v4157 = vpack.c.b16 %v3837, %v3829
    %v4158 = vpack.c.b16 %v3846, %v3838
    %v4159 = vpack.c.b16 %v3847, %v3839
    %v4160 = vpack.c.b16 %v3848, %v3840
    %v4161 = vpack.c.b16 %v3849, %v3841
    %v4162 = vpack.c.b16 %v3850, %v3842
    %v4163 = vpack.c.b16 %v3851, %v3843
    %v4164 = vpack.c.b16 %v3852, %v3844
    %v4165 = vpack.c.b16 %v3853, %v3845
    %v4166 = vpack.c.b16 %v3862, %v3854
    %v4167 = vpack.c.b16 %v3863, %v3855
    %v4168 = vpack.c.b16 %v3864, %v3856
    %v4169 = vpack.c.b16 %v3865, %v3857
    %v4170 = vpack.c.b16 %v3866, %v3858
    %v4171 = vpack.c.b16 %v3867, %v3859
    %v4172 = vpack.c.b16 %v3868, %v3860
    %v4173 = vpack.c.b16 %v3869, %v3861
    %v4174 = vpack.c.b16 %v3878, %v3870
    %v4175 = vpack.c.b16 %v3879, %v3871
    %v4176 = vpack.c.b16 %v3880, %v3872
    %v4177 = vpack.c.b16 %v3881, %v3873
    %v4178 = vpack.c.b16 %v3882, %v3874
    %v4179 = vpack.c.b16 %v3883, %v3875
    %v4180 = vpack.c.b16 %v3884, %v3876
    %v4181 = vpack.c.b16 %v3885, %v3877
    %v4182 = vpack.c.b16 %v3894, %v3886
    %v4183 = vpack.c.b16 %v3895, %v3887
    %v4184 = vpack.c.b16 %v3896, %v3888
    %v4185 = vpack.c.b16 %v3897, %v3889
    %v4186 = vpack.c.b16 %v3898, %v3890
    %v4187 = vpack.c.b16 %v3899, %v3891
    %v4188 = vpack.c.b16 %v3900, %v3892
    %v4189 = vpack.c.b16 %v3901, %v3893
    %v4190 = vpack.c.b16 %v3910, %v3902
    %v4191 = vpack.c.b16 %v3911, %v3903
    %v4192 = vpack.c.b16 %v3912, %v3904
    %v4193 = vpack.c.b16 %v3913, %v3905
    %v4194 = vpack.c.b16 %v3914, %v3906
    %v4195 = vpack.c.b16 %v3915, %v3907
    %v4196 = vpack.c.b16 %v3916, %v3908
    %v4197 = vpack.c.b16 %v3917, %v3909
    %v4198 = vpack.c.b16 %v3926, %v3918
    %v4199 = vpack.c.b16 %v3927, %v3919
    %v4200 = vpack.c.b16 %v3928, %v3920
    %v4201 = vpack.c.b16 %v3929, %v3921
    %v4202 = vpack.c.b16 %v3930, %v3922
    %v4203 = vpack.c.b16 %v3931, %v3923
    %v4204 = vpack.c.b16 %v3932, %v3924
    %v4205 = vpack.c.b16 %v3933, %v3925
    %v4206 = vpack.c.b16 %v3942, %v3934
    %v4207 = vpack.c.b16 %v3943, %v3935
    %v4208 = vpack.c.b16 %v3944, %v3936
    %v4209 = vpack.c.b16 %v3945, %v3937
    %v4210 = vpack.c.b16 %v3946, %v3938
    %v4211 = vpack.c.b16 %v3947, %v3939
    %v4212 = vpack.c.b16 %v3948, %v3940
    %v4213 = vpack.c.b16 %v3949, %v3941
    %v4214 = vpack.c.b16 %v3958, %v3950
    %v4215 = vpack.c.b16 %v3959, %v3951
    %v4216 = vpack.c.b16 %v3960, %v3952
    %v4217 = vpack.c.b16 %v3961, %v3953
    %v4218 = vpack.c.b16 %v3962, %v3954
    %v4219 = vpack.c.b16 %v3963, %v3955
    %v4220 = vpack.c.b16 %v3964, %v3956
    %v4221 = vpack.c.b16 %v3965, %v3957
    %4478 = vmatprep.subr.bf16.mxu0 %v3967
    %4479 = vmatpush1.bf16.msra.mxu0 %v3966
    %4480 = vmatprep.subr.bf16.mxu0 %v3975
    %4481 = vmatpush1.bf16.msra.mxu0 %v3974
    %4482 = vmatprep.subr.bf16.mxu0 %v3983
    %4483 = vmatpush1.bf16.msra.mxu0 %v3982
    %4484 = vmatprep.subr.bf16.mxu0 %v3991
    %4485 = vmatpush1.bf16.msra.mxu0 %v3990
    %4486 = vmatprep.subr.bf16.mxu0 %v3999
    %4487 = vmatpush1.bf16.msra.mxu0 %v3998
    %4488 = vmatprep.subr.bf16.mxu0 %v4007
    %4489 = vmatpush1.bf16.msra.mxu0 %v4006
    %4490 = vmatprep.subr.bf16.mxu0 %v4015
    %4491 = vmatpush1.bf16.msra.mxu0 %v4014
    %4492 = vmatprep.subr.bf16.mxu0 %v4023
    %4493 = vmatpush1.bf16.msra.mxu0 %v4022
    %4494 = vmatprep.subr.bf16.mxu0 %v4031
    %4495 = vmatpush1.bf16.msra.mxu0 %v4030
    %4496 = vmatprep.subr.bf16.mxu0 %v4039
    %4497 = vmatpush1.bf16.msra.mxu0 %v4038
    %4498 = vmatprep.subr.bf16.mxu0 %v4047
    %4499 = vmatpush1.bf16.msra.mxu0 %v4046
    %4500 = vmatprep.subr.bf16.mxu0 %v4055
    %4501 = vmatpush1.bf16.msra.mxu0 %v4054
    %4502 = vmatprep.subr.bf16.mxu0 %v4063
    %4503 = vmatpush1.bf16.msra.mxu0 %v4062
    %4504 = vmatprep.subr.bf16.mxu0 %v4071
    %4505 = vmatpush1.bf16.msra.mxu0 %v4070
    %4506 = vmatprep.subr.bf16.mxu0 %v4079
    %4507 = vmatpush1.bf16.msra.mxu0 %v4078
    %4508 = vmatprep.subr.bf16.mxu0 %v4087
    %4509 = vmatpush1.bf16.msra.mxu0 %v4086
    %4510 = vmatprep.mubr.bf16.mxu0 %v2939
    %4511 = vmatmul.mubr.bf16.gmra.mrb[0].mxu0 %v2938
    %v4512 = vpop.f32.mrb[0].mxu0
    %v4513 = vadd.f32 0.0, %v4512
    %v4514 = vpop.f32.mrb[0].mxu0
    %v4515 = vadd.f32 0.0, %v4514
    %v4516 = vpop.f32.mrb[0].mxu0
    %v4517 = vpop.f32.mrb[0].mxu0
    %4518 = vdwg.mxu0
    %4519 = vmatprep.subr.bf16.mxu0 %v4095
    %4520 = vmatpush1.bf16.msra.mxu0 %v4094
    %4521 = vmatprep.subr.bf16.mxu0 %v4103
    %4522 = vmatpush1.bf16.msra.mxu0 %v4102
    %4523 = vmatprep.subr.bf16.mxu0 %v4111
    %4524 = vmatpush1.bf16.msra.mxu0 %v4110
    %4525 = vmatprep.subr.bf16.mxu0 %v4119
    %4526 = vmatpush1.bf16.msra.mxu0 %v4118
    %4527 = vmatprep.subr.bf16.mxu0 %v4127
    %4528 = vmatpush1.bf16.msra.mxu0 %v4126
    %4529 = vmatprep.subr.bf16.mxu0 %v4135
    %4530 = vmatpush1.bf16.msra.mxu0 %v4134
    %4531 = vmatprep.subr.bf16.mxu0 %v4143
    %4532 = vmatpush1.bf16.msra.mxu0 %v4142
    %4533 = vmatprep.subr.bf16.mxu0 %v4151
    %4534 = vmatpush1.bf16.msra.mxu0 %v4150
    %4535 = vmatprep.subr.bf16.mxu0 %v4159
    %4536 = vmatpush1.bf16.msra.mxu0 %v4158
    %4537 = vmatprep.subr.bf16.mxu0 %v4167
    %4538 = vmatpush1.bf16.msra.mxu0 %v4166
    %4539 = vmatprep.subr.bf16.mxu0 %v4175
    %4540 = vmatpush1.bf16.msra.mxu0 %v4174
    %4541 = vmatprep.subr.bf16.mxu0 %v4183
    %4542 = vmatpush1.bf16.msra.mxu0 %v4182
    %4543 = vmatprep.subr.bf16.mxu0 %v4191
    %4544 = vmatpush1.bf16.msra.mxu0 %v4190
    %4545 = vmatprep.subr.bf16.mxu0 %v4199
    %4546 = vmatpush1.bf16.msra.mxu0 %v4198
    %4547 = vmatprep.subr.bf16.mxu0 %v4207
    %4548 = vmatpush1.bf16.msra.mxu0 %v4206
    %4549 = vmatprep.subr.bf16.mxu0 %v4215
    %4550 = vmatpush1.bf16.msra.mxu0 %v4214
    %4551 = vmatprep.mubr.bf16.mxu0 %v2941
    %4552 = vmatmul.mubr.bf16.gmra.mrb[0].mxu0 %v2940
    %v4553 = vpop.f32.mrb[0].mxu0
    %v4554 = vadd.f32 %v4513, %v4553
    %v4555 = vpop.f32.mrb[0].mxu0
    %v4556 = vadd.f32 %v4515, %v4555
    %v4557 = vpop.f32.mrb[0].mxu0
    %v4558 = vpop.f32.mrb[0].mxu0
    %4559 = vdwg.mxu0
    %4560 = vmatprep.subr.bf16.mxu0 %v3969
    %4561 = vmatpush1.bf16.msra.mxu0 %v3968
    %4562 = vmatprep.subr.bf16.mxu0 %v3977
    %4563 = vmatpush1.bf16.msra.mxu0 %v3976
    %4564 = vmatprep.subr.bf16.mxu0 %v3985
    %4565 = vmatpush1.bf16.msra.mxu0 %v3984
    %4566 = vmatprep.subr.bf16.mxu0 %v3993
    %4567 = vmatpush1.bf16.msra.mxu0 %v3992
    %4568 = vmatprep.subr.bf16.mxu0 %v4001
    %4569 = vmatpush1.bf16.msra.mxu0 %v4000
    %4570 = vmatprep.subr.bf16.mxu0 %v4009
    %4571 = vmatpush1.bf16.msra.mxu0 %v4008
    %4572 = vmatprep.subr.bf16.mxu0 %v4017
    %4573 = vmatpush1.bf16.msra.mxu0 %v4016
    %4574 = vmatprep.subr.bf16.mxu0 %v4025
    %4575 = vmatpush1.bf16.msra.mxu0 %v4024
    %4576 = vmatprep.subr.bf16.mxu0 %v4033
    %4577 = vmatpush1.bf16.msra.mxu0 %v4032
    %4578 = vmatprep.subr.bf16.mxu0 %v4041
    %4579 = vmatpush1.bf16.msra.mxu0 %v4040
    %4580 = vmatprep.subr.bf16.mxu0 %v4049
    %4581 = vmatpush1.bf16.msra.mxu0 %v4048
    %4582 = vmatprep.subr.bf16.mxu0 %v4057
    %4583 = vmatpush1.bf16.msra.mxu0 %v4056
    %4584 = vmatprep.subr.bf16.mxu0 %v4065
    %4585 = vmatpush1.bf16.msra.mxu0 %v4064
    %4586 = vmatprep.subr.bf16.mxu0 %v4073
    %4587 = vmatpush1.bf16.msra.mxu0 %v4072
    %4588 = vmatprep.subr.bf16.mxu0 %v4081
    %4589 = vmatpush1.bf16.msra.mxu0 %v4080
    %4590 = vmatprep.subr.bf16.mxu0 %v4089
    %4591 = vmatpush1.bf16.msra.mxu0 %v4088
    %4592 = vmatprep.mubr.bf16.mxu0 %v2939
    %4593 = vmatmul.mubr.bf16.gmra.mrb[0].mxu0 %v2938
    %v4594 = vpop.f32.mrb[0].mxu0
    %v4595 = vadd.f32 0.0, %v4594
    %v4596 = vpop.f32.mrb[0].mxu0
    %v4597 = vadd.f32 0.0, %v4596
    %v4598 = vpop.f32.mrb[0].mxu0
    %v4599 = vpop.f32.mrb[0].mxu0
    %4600 = vdwg.mxu0
    %4601 = vmatprep.subr.bf16.mxu0 %v4097
    %4602 = vmatpush1.bf16.msra.mxu0 %v4096
    %4603 = vmatprep.subr.bf16.mxu0 %v4105
    %4604 = vmatpush1.bf16.msra.mxu0 %v4104
    %4605 = vmatprep.subr.bf16.mxu0 %v4113
    %4606 = vmatpush1.bf16.msra.mxu0 %v4112
    %4607 = vmatprep.subr.bf16.mxu0 %v4121
    %4608 = vmatpush1.bf16.msra.mxu0 %v4120
    %4609 = vmatprep.subr.bf16.mxu0 %v4129
    %4610 = vmatpush1.bf16.msra.mxu0 %v4128
    %4611 = vmatprep.subr.bf16.mxu0 %v4137
    %4612 = vmatpush1.bf16.msra.mxu0 %v4136
    %4613 = vmatprep.subr.bf16.mxu0 %v4145
    %4614 = vmatpush1.bf16.msra.mxu0 %v4144
    %4615 = vmatprep.subr.bf16.mxu0 %v4153
    %4616 = vmatpush1.bf16.msra.mxu0 %v4152
    %4617 = vmatprep.subr.bf16.mxu0 %v4161
    %4618 = vmatpush1.bf16.msra.mxu0 %v4160
    %4619 = vmatprep.subr.bf16.mxu0 %v4169
    %4620 = vmatpush1.bf16.msra.mxu0 %v4168
    %4621 = vmatprep.subr.bf16.mxu0 %v4177
    %4622 = vmatpush1.bf16.msra.mxu0 %v4176
    %4623 = vmatprep.subr.bf16.mxu0 %v4185
    %4624 = vmatpush1.bf16.msra.mxu0 %v4184
    %4625 = vmatprep.subr.bf16.mxu0 %v4193
    %4626 = vmatpush1.bf16.msra.mxu0 %v4192
    %4627 = vmatprep.subr.bf16.mxu0 %v4201
    %4628 = vmatpush1.bf16.msra.mxu0 %v4200
    %4629 = vmatprep.subr.bf16.mxu0 %v4209
    %4630 = vmatpush1.bf16.msra.mxu0 %v4208
    %4631 = vmatprep.subr.bf16.mxu0 %v4217
    %4632 = vmatpush1.bf16.msra.mxu0 %v4216
    %4633 = vmatprep.mubr.bf16.mxu0 %v2941
    %4634 = vmatmul.mubr.bf16.gmra.mrb[0].mxu0 %v2940
    %v4635 = vpop.f32.mrb[0].mxu0
    %v4636 = vadd.f32 %v4595, %v4635
    %v4637 = vpop.f32.mrb[0].mxu0
    %v4638 = vadd.f32 %v4597, %v4637
    %v4639 = vpop.f32.mrb[0].mxu0
    %v4640 = vpop.f32.mrb[0].mxu0
    %4641 = vdwg.mxu0
    %4642 = vmatprep.subr.bf16.mxu0 %v3971
    %4643 = vmatpush1.bf16.msra.mxu0 %v3970
    %4644 = vmatprep.subr.bf16.mxu0 %v3979
    %4645 = vmatpush1.bf16.msra.mxu0 %v3978
    %4646 = vmatprep.subr.bf16.mxu0 %v3987
    %4647 = vmatpush1.bf16.msra.mxu0 %v3986
    %4648 = vmatprep.subr.bf16.mxu0 %v3995
    %4649 = vmatpush1.bf16.msra.mxu0 %v3994
    %4650 = vmatprep.subr.bf16.mxu0 %v4003
    %4651 = vmatpush1.bf16.msra.mxu0 %v4002
    %4652 = vmatprep.subr.bf16.mxu0 %v4011
    %4653 = vmatpush1.bf16.msra.mxu0 %v4010
    %4654 = vmatprep.subr.bf16.mxu0 %v4019
    %4655 = vmatpush1.bf16.msra.mxu0 %v4018
    %4656 = vmatprep.subr.bf16.mxu0 %v4027
    %4657 = vmatpush1.bf16.msra.mxu0 %v4026
    %4658 = vmatprep.subr.bf16.mxu0 %v4035
    %4659 = vmatpush1.bf16.msra.mxu0 %v4034
    %4660 = vmatprep.subr.bf16.mxu0 %v4043
    %4661 = vmatpush1.bf16.msra.mxu0 %v4042
    %4662 = vmatprep.subr.bf16.mxu0 %v4051
    %4663 = vmatpush1.bf16.msra.mxu0 %v4050
    %4664 = vmatprep.subr.bf16.mxu0 %v4059
    %4665 = vmatpush1.bf16.msra.mxu0 %v4058
    %4666 = vmatprep.subr.bf16.mxu0 %v4067
    %4667 = vmatpush1.bf16.msra.mxu0 %v4066
    %4668 = vmatprep.subr.bf16.mxu0 %v4075
    %4669 = vmatpush1.bf16.msra.mxu0 %v4074
    %4670 = vmatprep.subr.bf16.mxu0 %v4083
    %4671 = vmatpush1.bf16.msra.mxu0 %v4082
    %4672 = vmatprep.subr.bf16.mxu0 %v4091
    %4673 = vmatpush1.bf16.msra.mxu0 %v4090
    %4674 = vmatprep.mubr.bf16.mxu0 %v2939
    %4675 = vmatmul.mubr.bf16.gmra.mrb[0].mxu0 %v2938
    %v4676 = vpop.f32.mrb[0].mxu0
    %v4677 = vadd.f32 0.0, %v4676
    %v4678 = vpop.f32.mrb[0].mxu0
    %v4679 = vadd.f32 0.0, %v4678
    %v4680 = vpop.f32.mrb[0].mxu0
    %v4681 = vpop.f32.mrb[0].mxu0
    %4682 = vdwg.mxu0
    %4683 = vmatprep.subr.bf16.mxu0 %v4099
    %4684 = vmatpush1.bf16.msra.mxu0 %v4098
    %4685 = vmatprep.subr.bf16.mxu0 %v4107
    %4686 = vmatpush1.bf16.msra.mxu0 %v4106
    %4687 = vmatprep.subr.bf16.mxu0 %v4115
    %4688 = vmatpush1.bf16.msra.mxu0 %v4114
    %4689 = vmatprep.subr.bf16.mxu0 %v4123
    %4690 = vmatpush1.bf16.msra.mxu0 %v4122
    %4691 = vmatprep.subr.bf16.mxu0 %v4131
    %4692 = vmatpush1.bf16.msra.mxu0 %v4130
    %4693 = vmatprep.subr.bf16.mxu0 %v4139
    %4694 = vmatpush1.bf16.msra.mxu0 %v4138
    %4695 = vmatprep.subr.bf16.mxu0 %v4147
    %4696 = vmatpush1.bf16.msra.mxu0 %v4146
    %4697 = vmatprep.subr.bf16.mxu0 %v4155
    %4698 = vmatpush1.bf16.msra.mxu0 %v4154
    %4699 = vmatprep.subr.bf16.mxu0 %v4163
    %4700 = vmatpush1.bf16.msra.mxu0 %v4162
    %4701 = vmatprep.subr.bf16.mxu0 %v4171
    %4702 = vmatpush1.bf16.msra.mxu0 %v4170
    %4703 = vmatprep.subr.bf16.mxu0 %v4179
    %4704 = vmatpush1.bf16.msra.mxu0 %v4178
    %4705 = vmatprep.subr.bf16.mxu0 %v4187
    %4706 = vmatpush1.bf16.msra.mxu0 %v4186
    %4707 = vmatprep.subr.bf16.mxu0 %v4195
    %4708 = vmatpush1.bf16.msra.mxu0 %v4194
    %4709 = vmatprep.subr.bf16.mxu0 %v4203
    %4710 = vmatpush1.bf16.msra.mxu0 %v4202
    %4711 = vmatprep.subr.bf16.mxu0 %v4211
    %4712 = vmatpush1.bf16.msra.mxu0 %v4210
    %4713 = vmatprep.subr.bf16.mxu0 %v4219
    %4714 = vmatpush1.bf16.msra.mxu0 %v4218
    %4715 = vmatprep.mubr.bf16.mxu0 %v2941
    %4716 = vmatmul.mubr.bf16.gmra.mrb[0].mxu0 %v2940
    %v4717 = vpop.f32.mrb[0].mxu0
    %v4718 = vadd.f32 %v4677, %v4717
    %v4719 = vpop.f32.mrb[0].mxu0
    %v4720 = vadd.f32 %v4679, %v4719
    %v4721 = vpop.f32.mrb[0].mxu0
    %v4722 = vpop.f32.mrb[0].mxu0
    %4723 = vdwg.mxu0
    %4724 = vmatprep.subr.bf16.mxu0 %v3973
    %4725 = vmatpush1.bf16.msra.mxu0 %v3972
    %4726 = vmatprep.subr.bf16.mxu0 %v3981
    %4727 = vmatpush1.bf16.msra.mxu0 %v3980
    %4728 = vmatprep.subr.bf16.mxu0 %v3989
    %4729 = vmatpush1.bf16.msra.mxu0 %v3988
    %4730 = vmatprep.subr.bf16.mxu0 %v3997
    %4731 = vmatpush1.bf16.msra.mxu0 %v3996
    %4732 = vmatprep.subr.bf16.mxu0 %v4005
    %4733 = vmatpush1.bf16.msra.mxu0 %v4004
    %4734 = vmatprep.subr.bf16.mxu0 %v4013
    %4735 = vmatpush1.bf16.msra.mxu0 %v4012
    %4736 = vmatprep.subr.bf16.mxu0 %v4021
    %4737 = vmatpush1.bf16.msra.mxu0 %v4020
    %4738 = vmatprep.subr.bf16.mxu0 %v4029
    %4739 = vmatpush1.bf16.msra.mxu0 %v4028
    %4740 = vmatprep.subr.bf16.mxu0 %v4037
    %4741 = vmatpush1.bf16.msra.mxu0 %v4036
    %4742 = vmatprep.subr.bf16.mxu0 %v4045
    %4743 = vmatpush1.bf16.msra.mxu0 %v4044
    %4744 = vmatprep.subr.bf16.mxu0 %v4053
    %4745 = vmatpush1.bf16.msra.mxu0 %v4052
    %4746 = vmatprep.subr.bf16.mxu0 %v4061
    %4747 = vmatpush1.bf16.msra.mxu0 %v4060
    %4748 = vmatprep.subr.bf16.mxu0 %v4069
    %4749 = vmatpush1.bf16.msra.mxu0 %v4068
    %4750 = vmatprep.subr.bf16.mxu0 %v4077
    %4751 = vmatpush1.bf16.msra.mxu0 %v4076
    %4752 = vmatprep.subr.bf16.mxu0 %v4085
    %4753 = vmatpush1.bf16.msra.mxu0 %v4084
    %4754 = vmatprep.subr.bf16.mxu0 %v4093
    %4755 = vmatpush1.bf16.msra.mxu0 %v4092
    %4756 = vmatprep.mubr.bf16.mxu0 %v2939
    %4757 = vmatmul.mubr.bf16.gmra.mrb[0].mxu0 %v2938
    %v4758 = vpop.f32.mrb[0].mxu0
    %v4759 = vadd.f32 0.0, %v4758
    %v4760 = vpop.f32.mrb[0].mxu0
    %v4761 = vadd.f32 0.0, %v4760
    %v4762 = vpop.f32.mrb[0].mxu0
    %v4763 = vpop.f32.mrb[0].mxu0
    %4764 = vdwg.mxu0
    %4765 = vmatprep.subr.bf16.mxu0 %v4101
    %4766 = vmatpush1.bf16.msra.mxu0 %v4100
    %4767 = vmatprep.subr.bf16.mxu0 %v4109
    %4768 = vmatpush1.bf16.msra.mxu0 %v4108
    %4769 = vmatprep.subr.bf16.mxu0 %v4117
    %4770 = vmatpush1.bf16.msra.mxu0 %v4116
    %4771 = vmatprep.subr.bf16.mxu0 %v4125
    %4772 = vmatpush1.bf16.msra.mxu0 %v4124
    %4773 = vmatprep.subr.bf16.mxu0 %v4133
    %4774 = vmatpush1.bf16.msra.mxu0 %v4132
    %4775 = vmatprep.subr.bf16.mxu0 %v4141
    %4776 = vmatpush1.bf16.msra.mxu0 %v4140
    %4777 = vmatprep.subr.bf16.mxu0 %v4149
    %4778 = vmatpush1.bf16.msra.mxu0 %v4148
    %4779 = vmatprep.subr.bf16.mxu0 %v4157
    %4780 = vmatpush1.bf16.msra.mxu0 %v4156
    %4781 = vmatprep.subr.bf16.mxu0 %v4165
    %4782 = vmatpush1.bf16.msra.mxu0 %v4164
    %4783 = vmatprep.subr.bf16.mxu0 %v4173
    %4784 = vmatpush1.bf16.msra.mxu0 %v4172
    %4785 = vmatprep.subr.bf16.mxu0 %v4181
    %4786 = vmatpush1.bf16.msra.mxu0 %v4180
    %4787 = vmatprep.subr.bf16.mxu0 %v4189
    %4788 = vmatpush1.bf16.msra.mxu0 %v4188
    %4789 = vmatprep.subr.bf16.mxu0 %v4197
    %4790 = vmatpush1.bf16.msra.mxu0 %v4196
    %4791 = vmatprep.subr.bf16.mxu0 %v4205
    %4792 = vmatpush1.bf16.msra.mxu0 %v4204
    %4793 = vmatprep.subr.bf16.mxu0 %v4213
    %4794 = vmatpush1.bf16.msra.mxu0 %v4212
    %4795 = vmatprep.subr.bf16.mxu0 %v4221
    %4796 = vmatpush1.bf16.msra.mxu0 %v4220
    %4797 = vmatprep.mubr.bf16.mxu0 %v2941
    %4798 = vmatmul.mubr.bf16.gmra.mrb[0].mxu0 %v2940
    %v4799 = vpop.f32.mrb[0].mxu0
    %v4800 = vadd.f32 %v4759, %v4799
    %v4801 = vpop.f32.mrb[0].mxu0
    %v4802 = vadd.f32 %v4761, %v4801
    %v4803 = vpop.f32.mrb[0].mxu0
    %v4804 = vpop.f32.mrb[0].mxu0
    %4805 = vdwg.mxu0
    %v4806 = vpack.c.bf16 %v4554, %v4554
    %v4807 = vpack.c.bf16 %v4556, %v4556
    %v4808 = vpack.c.bf16 %v4636, %v4636
    %v4809 = vpack.c.bf16 %v4638, %v4638
    %v4810 = vpack.c.bf16 %v4718, %v4718
    %v4811 = vpack.c.bf16 %v4720, %v4720
    %v4812 = vpack.c.bf16 %v4800, %v4800
    %v4813 = vpack.c.bf16 %v4802, %v4802
    %v4822 = vcombine.low %v4806, %v4807
    %v4823 = vcombine.low %v4808, %v4809
    %v4824 = vcombine.low %v4810, %v4811
    %v4825 = vcombine.low %v4812, %v4813
    %v4827 = vunpack.c.l.s4 1966171168
    %v4828 = vunpack.c.0.s8 %v4827
    %v4829 = vlaneseq
    %v4830 = vshrl.u32 %v4829, 7
    %v4831 = vsub.s32 %v4828, %v4830
    %v4832 = vrot.slane %v4822, %v4831
    %v4834 = vunpack.c.l.s4 1966171168
    %v4835 = vunpack.c.0.s8 %v4834
    %v4836 = vlaneseq
    %v4837 = vshrl.u32 %v4836, 7
    %v4838 = vsub.s32 %v4835, %v4837
    %v4839 = vrot.slane %v4823, %v4838
    %v4841 = vunpack.c.l.s4 1966171168
    %v4842 = vunpack.c.0.s8 %v4841
    %v4843 = vlaneseq
    %v4844 = vshrl.u32 %v4843, 7
    %v4845 = vsub.s32 %v4842, %v4844
    %v4846 = vrot.slane %v4824, %v4845
    %v4848 = vunpack.c.l.s4 1966171168
    %v4849 = vunpack.c.0.s8 %v4848
    %v4850 = vlaneseq
    %v4851 = vshrl.u32 %v4850, 7
    %v4852 = vsub.s32 %v4849, %v4851
    %v4853 = vrot.slane %v4825, %v4852
    %v4854 = vcombine.low %v4832, %v4839
    %v4855 = vcombine.low %v4846, %v4853
    %v4857 = vunpack.c.l.s4 1966171168
    %v4858 = vunpack.c.0.s8 %v4857
    %v4859 = vlaneseq
    %v4860 = vshrl.u32 %v4859, 7
    %v4861 = vsub.s32 %v4858, %v4860
    %v4862 = vrot.slane %v4854, %v4861
    %v4864 = vunpack.c.l.s4 1966171168
    %v4865 = vunpack.c.0.s8 %v4864
    %v4866 = vlaneseq
    %v4867 = vshrl.u32 %v4866, 7
    %v4868 = vsub.s32 %v4865, %v4867
    %v4869 = vrot.slane %v4855, %v4868
    %v4870 = vcombine.low %v4862, %v4869
    %4872 = vst [vmem:[#allocation10] sm:$0xff] %v4870
    // Predicated region
    $region34: #{tpu_custom_call.1} parent=1 // pred_check
      _
    $region35: #{tpu_custom_call.1} parent=1 // pred_check_branch
      %4874 = sbr.rel (0) target = $region37
    $region36: #{tpu_custom_call.1} parent=1 // pred_region
      %s4876 = ssub.s32 128, 128
      %4877 = vsyncadd [#allocation4], %s4876
      %s4879 = sshll.u32 [#allocation10], 4
      %s4880 = int_to_ptr.vmem [resolvable:$true] %s4879
      %4882 = dma.vmem_to_hbm [thread:$0]  %s4880, 128, %s4, [#allocation4]
    $region37: #{tpu_custom_call.1} parent=1 // pred_fallthru
      _
    // Predicated region
    $region38: #{tpu_custom_call.1} parent=1 // pred_check
      _
    $region39: #{tpu_custom_call.1} parent=1 // pred_check_branch
      %4884 = sbr.rel (0) target = $region41
    $region40: #{tpu_custom_call.1} parent=1 // pred_region
      %4885 = dma.done [#allocation4], 128
    $region41: #{tpu_custom_call.1} parent=1 // pred_fallthru
      _
    %4886 = vsyncpa [#allocation3], 1
    %4887 = vsyncpa [#allocation6], 1
    %4888 = vsyncpa [#allocation9], 1
    %4889 = vsyncpa [#allocation4], 1

</llo_original>
